<compile_context>
chip_gen: v7x
topology: tpu7x:2x2x1
jax: 0.10.0
libtpu: 0.0.40
codegen_flags: <defaults>
</compile_context>

<pallas_src>
import functools

import jax
import jax.numpy as jnp
import numpy as np
from jax import lax
from jax.experimental import pallas as pl
from jax.experimental.pallas import tpu as pltpu

# Module hyper-parameters (matching RQVAE.__init__ defaults with num_embeddings=32)
INPUT_DIM = 384
HIDDEN_DIM = 256
LATENT_DIM = 384
LEVELS = 2
NUM_EMB = 32
NUM_EMB_PAD = 128          # codebook axis padded to full lane / MXU width
BETA = 0.25


def _round_up(x, m):
    return ((x + m - 1) // m) * m


def rqvae_kernel(x_ref, w1_ref, b1_ref, w2_ref, b2_ref,
                 cbT_ref, cb_ref, dbias_ref,
                 w3_ref, b3_ref, w4_ref, b4_ref,
                 xhat_ref, zq_ref, idx_ref, loss_ref,
                 *, batch_tile, batch_total, matmul_dtype):
    # ----------------- encoder: Linear -> ReLU -> Linear -----------------
    x = x_ref[...]                                                  # (TB, IN) f32
    h = jnp.dot(x.astype(matmul_dtype), w1_ref[...],
                preferred_element_type=jnp.float32) + b1_ref[...]
    h = jnp.maximum(h, 0.0)
    z = jnp.dot(h.astype(matmul_dtype), w2_ref[...],
                preferred_element_type=jnp.float32) + b2_ref[...]   # (TB, LAT) f32

    # Row-validity mask: the batch may be zero-padded up to a tile multiple.
    row0 = pl.program_id(0) * batch_tile
    rows = row0 + lax.broadcasted_iota(jnp.int32, (batch_tile, 1), 0)
    valid = (rows < batch_total).astype(jnp.float32)                # (TB, 1)

    residual = z
    quant_sum = jnp.zeros_like(z)
    sse = jnp.zeros((), jnp.float32)
    idx_list = []

    # ------------- residual quantizer (LEVELS static -> unrolled) --------
    for l in range(LEVELS):
        # Relative squared distance: ||r - e||^2 = ||r||^2 - 2 r.e + ||e||^2.
        # ||r||^2 is argmin-invariant (dropped); dbias = ||e||^2 (+inf on the
        # padded codebook rows so they can never win the argmin).
        d = dbias_ref[l] - 2.0 * jnp.dot(
            residual.astype(matmul_dtype), cbT_ref[l],
            preferred_element_type=jnp.float32)                     # (TB, 128)
        idx = jnp.argmin(d, axis=1).astype(jnp.int32)               # (TB,)
        idx_list.append(idx)

        # Exact codebook gather via one-hot matmul (f32, MXU friendly).
        onehot = (lax.broadcasted_iota(jnp.int32, (batch_tile, NUM_EMB_PAD), 1)
                  == idx[:, None]).astype(jnp.float32)
        zq = jnp.dot(onehot, cb_ref[l],
                     preferred_element_type=jnp.float32)            # (TB, LAT)

        # vq_loss = mse(z_q, r.detach()) + beta * mse(z_q.detach(), r)
        #         = (1 + beta) * mean((z_q - r)^2)  (value-wise).
        # Accumulate the masked SSE here; the mean / (1+beta) scaling is done
        # in the wrapper over the whole (unpadded) batch.
        d2 = (zq - residual) * valid
        sse = sse + jnp.sum(d2 * d2)

        quant_sum = quant_sum + zq          # straight-through forward value
        residual = residual - zq

    zq_ref[...] = quant_sum
    idx_ref[...] = jnp.stack(idx_list, axis=0)                      # (LEVELS, TB)
    loss_ref[0, 0] = sse                                            # per-tile partial

    # ----------------- decoder: Linear -> ReLU -> Linear -----------------
    h2 = jnp.dot(quant_sum.astype(matmul_dtype), w3_ref[...],
                 preferred_element_type=jnp.float32) + b3_ref[...]
    h2 = jnp.maximum(h2, 0.0)
    xhat_ref[...] = jnp.dot(h2.astype(matmul_dtype), w4_ref[...],
                            preferred_element_type=jnp.float32) + b4_ref[...]


def rqvae_forward(x, w1, b1, w2, b2, cb, w3, b3, w4, b4,
                  matmul_dtype=jnp.bfloat16):
    B = x.shape[0]
    TB = min(256, _round_up(B, 128))        # batch tile (128..256 rows)
    B_pad = _round_up(B, TB)
    n_tiles = B_pad // TB

    x_p = jnp.pad(x, ((0, B_pad - B), (0, 0))) if B_pad != B else x

    # Codebook prep (done once, outside the hot loop):
    #   pad entries 32 -> 128, precompute ||e||^2 (+inf on pad rows),
    #   pre-transpose for the distance matmul, pre-cast matmul weights.
    cb_pad = jnp.pad(cb, ((0, 0), (0, NUM_EMB_PAD - NUM_EMB), (0, 0)))
    sq = jnp.sum(cb_pad * cb_pad, axis=2)                           # (L, 128)
    pad_mask = jnp.arange(NUM_EMB_PAD) >= NUM_EMB
    dbias = jnp.where(pad_mask[None, :], jnp.float32(1e30), sq)
    dbias = dbias.reshape(LEVELS, 1, NUM_EMB_PAD).astype(jnp.float32)
    cbT = jnp.transpose(cb_pad, (0, 2, 1)).astype(matmul_dtype)     # (L, 384, 128)

    w1m, w2m, w3m, w4m = (w.astype(matmul_dtype) for w in (w1, w2, w3, w4))

    def const(shape):
        return pl.BlockSpec(shape, lambda i, _s=shape: (0,) * len(_s))

    kernel = functools.partial(rqvae_kernel, batch_tile=TB,
                               batch_total=B, matmul_dtype=matmul_dtype)

    flops = 2 * B_pad * (INPUT_DIM * HIDDEN_DIM + HIDDEN_DIM * LATENT_DIM
                         + LEVELS * 2 * LATENT_DIM * NUM_EMB_PAD
                         + LATENT_DIM * HIDDEN_DIM + HIDDEN_DIM * INPUT_DIM)
    bytes_accessed = (
        4 * B_pad * (2 * INPUT_DIM + 2 * LATENT_DIM) + 4 * LEVELS * B_pad
        + 2 * (INPUT_DIM * HIDDEN_DIM + HIDDEN_DIM * LATENT_DIM
               + LATENT_DIM * HIDDEN_DIM + HIDDEN_DIM * INPUT_DIM)
        + 6 * LEVELS * NUM_EMB_PAD * LATENT_DIM + 4 * LEVELS * NUM_EMB_PAD
        + 4 * (2 * HIDDEN_DIM + LATENT_DIM + INPUT_DIM))

    out_shapes = (
        jax.ShapeDtypeStruct((B_pad, INPUT_DIM), jnp.float32),      # x_hat
        jax.ShapeDtypeStruct((B_pad, LATENT_DIM), jnp.float32),     # z_q
        jax.ShapeDtypeStruct((LEVELS, B_pad), jnp.int32),           # indices
        jax.ShapeDtypeStruct((n_tiles, 1), jnp.float32),            # SSE partials
    )
    in_specs = [
        pl.BlockSpec((TB, INPUT_DIM), lambda i: (i, 0)),            # x (streamed)
        const((INPUT_DIM, HIDDEN_DIM)),                             # w1
        const((1, HIDDEN_DIM)),                                     # b1
        const((HIDDEN_DIM, LATENT_DIM)),                            # w2
        const((1, LATENT_DIM)),                                     # b2
        const((LEVELS, LATENT_DIM, NUM_EMB_PAD)),                   # cb^T (matmul dtype)
        const((LEVELS, NUM_EMB_PAD, LATENT_DIM)),                   # cb (f32, gather)
        const((LEVELS, 1, NUM_EMB_PAD)),                            # ||e||^2 + pad bias
        const((LATENT_DIM, HIDDEN_DIM)),                            # w3
        const((1, HIDDEN_DIM)),                                     # b3
        const((HIDDEN_DIM, INPUT_DIM)),                             # w4
        const((1, INPUT_DIM)),                                      # b4
    ]
    out_specs = (
        pl.BlockSpec((TB, INPUT_DIM), lambda i: (i, 0)),
        pl.BlockSpec((TB, LATENT_DIM), lambda i: (i, 0)),
        pl.BlockSpec((LEVELS, TB), lambda i: (0, i)),
        pl.BlockSpec((1, 1), lambda i: (i, 0),
                     memory_space=pltpu.MemorySpace.SMEM),
    )

    xhat_p, zq_p, idx_p, loss_parts = pl.pallas_call(
        kernel,
        out_shape=out_shapes,
        grid=(n_tiles,),
        in_specs=in_specs,
        out_specs=out_specs,
        compiler_params=pltpu.CompilerParams(
            dimension_semantics=("parallel",),
            vmem_limit_bytes=32 * 1024 * 1024),
        cost_estimate=pl.CostEstimate(flops=flops, transcendentals=0,
                                      bytes_accessed=bytes_accessed),
    )(x_p, w1m, b1, w2m, b2, cbT, cb_pad, dbias, w3m, b3, w4m, b4)

    vq_loss = (1.0 + BETA) * jnp.sum(loss_parts) / (B * LATENT_DIM)
    return xhat_p[:B], zq_p[:B], idx_p[:, :B], vq_loss


def rqvae_ref(x, w1, b1, w2, b2, cb, w3, b3, w4, b4,
              matmul_dtype=jnp.bfloat16):
    """Pure-JAX reference mirroring the kernel's mixed-precision policy
    (matmul operands in `matmul_dtype`, f32 accumulation; gather + loss in
    f32).  With matmul_dtype=jnp.float32 this is the torch-faithful forward."""
    def dot(a, b):
        return jnp.dot(a.astype(matmul_dtype), b.astype(matmul_dtype),
                       preferred_element_type=jnp.float32)

    h = jax.nn.relu(dot(x, w1) + b1)
    z = dot(h, w2) + b2
    residual, qs = z, jnp.zeros_like(z)
    loss = jnp.zeros((), jnp.float32)
    idxs = []
    for l in range(LEVELS):
        c = cb[l]
        # argmin ||r - e||^2 == argmin (||e||^2 - 2 r.e)
        d = jnp.sum(c * c, axis=1)[None, :] - 2.0 * dot(residual, c.T)
        idx = jnp.argmin(d, axis=1)
        zq = c[idx]
        loss = loss + (1.0 + BETA) * jnp.mean((zq - residual) ** 2)
        qs = qs + zq
        residual = residual - zq
        idxs.append(idx.astype(jnp.int32))
    h2 = jax.nn.relu(dot(qs, w3) + b3)
    xhat = dot(h2, w4) + b4
    return xhat, qs, jnp.stack(idxs, 0), loss


if __name__ == "__main__":
    B = 8
    key = jax.random.PRNGKey(0)
    keys = jax.random.split(key, 8)

    x = jax.random.normal(keys[0], (B, INPUT_DIM), jnp.float32)

    # deterministic synthetic parameters (encoder / codebooks / decoder)
    w1 = jax.random.normal(keys[1], (INPUT_DIM, HIDDEN_DIM), jnp.float32) * 0.05
    b1 = jnp.zeros((1, HIDDEN_DIM), jnp.float32)
    w2 = jax.random.normal(keys[2], (HIDDEN_DIM, LATENT_DIM), jnp.float32) * 0.05
    b2 = jnp.zeros((1, LATENT_DIM), jnp.float32)
    cb = jax.random.normal(keys[3], (LEVELS, NUM_EMB, LATENT_DIM), jnp.float32) * 0.02
    w3 = jax.random.normal(keys[4], (LATENT_DIM, HIDDEN_DIM), jnp.float32) * 0.05
    b3 = jnp.zeros((1, HIDDEN_DIM), jnp.float32)
    w4 = jax.random.normal(keys[5], (HIDDEN_DIM, INPUT_DIM), jnp.float32) * 0.05
    b4 = jnp.zeros((1, INPUT_DIM), jnp.float32)

    params = (w1, b1, w2, b2, cb, w3, b3, w4, b4)

    x_hat, z_q, indices, vq_loss = rqvae_forward(x, *params)
    jax.block_until_ready((x_hat, z_q, indices, vq_loss))

    # validate against the precision-matched pure-JAX reference
    xr, zr, ir, lr = rqvae_ref(x, *params)
    np.testing.assert_array_equal(np.asarray(indices), np.asarray(ir))
    np.testing.assert_allclose(np.asarray(z_q), np.asarray(zr), rtol=2e-2, atol=2e-3)
    np.testing.assert_allclose(np.asarray(x_hat), np.asarray(xr), rtol=2e-2, atol=2e-3)
    np.testing.assert_allclose(float(vq_loss), float(lr), rtol=2e-2, atol=1e-4)

    print("KERNEL_OK")
</pallas_src>

<mosaic_0001>
module attributes {stable_mosaic.version = 11 : i64} {
  func.func @rqvae_kernel(%arg0: i32, %arg1: memref<128x384xf32, #tpu.memory_space<vmem>>, %arg2: memref<384x256xbf16, #tpu.memory_space<vmem>>, %arg3: memref<1x256xf32, #tpu.memory_space<vmem>>, %arg4: memref<256x384xbf16, #tpu.memory_space<vmem>>, %arg5: memref<1x384xf32, #tpu.memory_space<vmem>>, %arg6: memref<2x384x128xbf16, #tpu.memory_space<vmem>>, %arg7: memref<2x128x384xf32, #tpu.memory_space<vmem>>, %arg8: memref<2x1x128xf32, #tpu.memory_space<vmem>>, %arg9: memref<384x256xbf16, #tpu.memory_space<vmem>>, %arg10: memref<1x256xf32, #tpu.memory_space<vmem>>, %arg11: memref<256x384xbf16, #tpu.memory_space<vmem>>, %arg12: memref<1x384xf32, #tpu.memory_space<vmem>>, %arg13: memref<128x384xf32, #tpu.memory_space<vmem>>, %arg14: memref<128x384xf32, #tpu.memory_space<vmem>>, %arg15: memref<2x128xi32, #tpu.memory_space<vmem>>, %arg16: memref<1x1xf32, #tpu.memory_space<smem>>) attributes {dimension_semantics = [#tpu.dimension_semantics<parallel>], iteration_bounds = array<i64: 1>, scalar_prefetch = 0 : i64, scratch_operands = 0 : i64, tpu.core_type = #tpu.core_type<tc>, window_params = [{transform_indices = @transform_0, window_bounds = array<i64: 128, 384>}, {pipeline_mode = #tpu.pipeline_mode<synchronous>, transform_indices = @transform_1, window_bounds = array<i64: 384, 256>}, {pipeline_mode = #tpu.pipeline_mode<synchronous>, transform_indices = @transform_2, window_bounds = array<i64: 1, 256>}, {pipeline_mode = #tpu.pipeline_mode<synchronous>, transform_indices = @transform_3, window_bounds = array<i64: 256, 384>}, {pipeline_mode = #tpu.pipeline_mode<synchronous>, transform_indices = @transform_4, window_bounds = array<i64: 1, 384>}, {pipeline_mode = #tpu.pipeline_mode<synchronous>, transform_indices = @transform_5, window_bounds = array<i64: 2, 384, 128>}, {pipeline_mode = #tpu.pipeline_mode<synchronous>, transform_indices = @transform_6, window_bounds = array<i64: 2, 128, 384>}, {pipeline_mode = #tpu.pipeline_mode<synchronous>, transform_indices = @transform_7, window_bounds = array<i64: 2, 1, 128>}, {pipeline_mode = #tpu.pipeline_mode<synchronous>, transform_indices = @transform_8, window_bounds = array<i64: 384, 256>}, {pipeline_mode = #tpu.pipeline_mode<synchronous>, transform_indices = @transform_9, window_bounds = array<i64: 1, 256>}, {pipeline_mode = #tpu.pipeline_mode<synchronous>, transform_indices = @transform_10, window_bounds = array<i64: 256, 384>}, {pipeline_mode = #tpu.pipeline_mode<synchronous>, transform_indices = @transform_11, window_bounds = array<i64: 1, 384>}, {transform_indices = @transform_12, window_bounds = array<i64: 128, 384>}, {transform_indices = @transform_13, window_bounds = array<i64: 128, 384>}, {transform_indices = @transform_14, window_bounds = array<i64: 2, 128>}, {transform_indices = @transform_15, window_bounds = array<i64: 1, 1>}]} {
    %c0 = arith.constant 0 : index
    %c0_0 = arith.constant 0 : index
    %0 = vector.load %arg1[%c0, %c0_0] : memref<128x384xf32, #tpu.memory_space<vmem>>, vector<128x384xf32>
    %1 = arith.truncf %0 : vector<128x384xf32> to vector<128x384xbf16>
    %c0_1 = arith.constant 0 : index
    %c0_2 = arith.constant 0 : index
    %2 = vector.load %arg2[%c0_1, %c0_2] : memref<384x256xbf16, #tpu.memory_space<vmem>>, vector<384x256xbf16>
    %cst = arith.constant dense<0.000000e+00> : vector<128x256xf32>
    %3 = tpu.matmul %1, %2, %cst {dimension_numbers = #tpu.dot_dimension_numbers<[1], [0], [0], [1], [0, 0, 1, 1], [], []>} : vector<128x384xbf16>, vector<384x256xbf16>, vector<128x256xf32> -> vector<128x256xf32>
    %c0_3 = arith.constant 0 : index
    %c0_4 = arith.constant 0 : index
    %4 = vector.load %arg3[%c0_3, %c0_4] : memref<1x256xf32, #tpu.memory_space<vmem>>, vector<1x256xf32>
    %5 = vector.broadcast %4 : vector<1x256xf32> to vector<128x256xf32>
    %6 = arith.addf %3, %5 : vector<128x256xf32>
    %cst_5 = arith.constant 0.000000e+00 : f32
    %7 = vector.broadcast %cst_5 : f32 to vector<128x256xf32>
    %8 = arith.maximumf %6, %7 : vector<128x256xf32>
    %9 = arith.truncf %8 : vector<128x256xf32> to vector<128x256xbf16>
    %c0_6 = arith.constant 0 : index
    %c0_7 = arith.constant 0 : index
    %10 = vector.load %arg4[%c0_6, %c0_7] : memref<256x384xbf16, #tpu.memory_space<vmem>>, vector<256x384xbf16>
    %cst_8 = arith.constant dense<0.000000e+00> : vector<128x384xf32>
    %11 = tpu.matmul %9, %10, %cst_8 {dimension_numbers = #tpu.dot_dimension_numbers<[1], [0], [0], [1], [0, 0, 1, 1], [], []>} : vector<128x256xbf16>, vector<256x384xbf16>, vector<128x384xf32> -> vector<128x384xf32>
    %c0_9 = arith.constant 0 : index
    %c0_10 = arith.constant 0 : index
    %12 = vector.load %arg5[%c0_9, %c0_10] : memref<1x384xf32, #tpu.memory_space<vmem>>, vector<1x384xf32>
    %13 = vector.broadcast %12 : vector<1x384xf32> to vector<128x384xf32>
    %14 = arith.addf %11, %13 : vector<128x384xf32>
    %c128_i32 = arith.constant 128 : i32
    %15 = arith.muli %arg0, %c128_i32 : i32
    %16 = tpu.iota {dimensions = array<i32: 0>} : vector<128x1xi32>
    %17 = vector.broadcast %15 : i32 to vector<128x1xi32>
    %18 = arith.addi %17, %16 : vector<128x1xi32>
    %c8_i32 = arith.constant 8 : i32
    %19 = vector.broadcast %c8_i32 : i32 to vector<128x1xi32>
    %20 = arith.cmpi slt, %18, %19 : vector<128x1xi32>
    %21 = arith.extui %20 : vector<128x1xi1> to vector<128x1xi32>
    %22 = arith.sitofp %21 : vector<128x1xi32> to vector<128x1xf32>
    %cst_11 = arith.constant 0.000000e+00 : f32
    %23 = vector.broadcast %cst_11 : f32 to vector<128x384xf32>
    %c0_12 = arith.constant 0 : index
    %c0_13 = arith.constant 0 : index
    %c0_14 = arith.constant 0 : index
    %24 = vector.load %arg8[%c0_12, %c0_13, %c0_14] : memref<2x1x128xf32, #tpu.memory_space<vmem>>, vector<1x1x128xf32>
    %25 = vector.shape_cast %24 : vector<1x1x128xf32> to vector<1x128xf32>
    %26 = arith.truncf %14 : vector<128x384xf32> to vector<128x384xbf16>
    %c0_15 = arith.constant 0 : index
    %c0_16 = arith.constant 0 : index
    %c0_17 = arith.constant 0 : index
    %27 = vector.load %arg6[%c0_15, %c0_16, %c0_17] : memref<2x384x128xbf16, #tpu.memory_space<vmem>>, vector<1x384x128xbf16>
    %28 = vector.shape_cast %27 : vector<1x384x128xbf16> to vector<384x128xbf16>
    %cst_18 = arith.constant dense<0.000000e+00> : vector<128x128xf32>
    %29 = tpu.matmul %26, %28, %cst_18 {dimension_numbers = #tpu.dot_dimension_numbers<[1], [0], [0], [1], [0, 0, 1, 1], [], []>} : vector<128x384xbf16>, vector<384x128xbf16>, vector<128x128xf32> -> vector<128x128xf32>
    %cst_19 = arith.constant 2.000000e+00 : f32
    %30 = vector.broadcast %cst_19 : f32 to vector<128x128xf32>
    %31 = arith.mulf %30, %29 : vector<128x128xf32>
    %32 = vector.broadcast %25 : vector<1x128xf32> to vector<128x128xf32>
    %33 = arith.subf %32, %31 : vector<128x128xf32>
    %34 = tpu.reduce_index %33 {axis = 1 : i32, kind = #tpu.reduction_kind<arg_min>} : vector<128x128xf32> -> vector<128xi32>
    %35 = tpu.iota {dimensions = array<i32: 1>} : vector<128x128xi32>
    %36 = vector.shape_cast %34 : vector<128xi32> to vector<128x1xi32>
    %37 = vector.broadcast %36 : vector<128x1xi32> to vector<128x128xi32>
    %38 = arith.cmpi eq, %35, %37 : vector<128x128xi32>
    %39 = arith.extui %38 : vector<128x128xi1> to vector<128x128xi32>
    %40 = arith.sitofp %39 : vector<128x128xi32> to vector<128x128xf32>
    %c0_20 = arith.constant 0 : index
    %c0_21 = arith.constant 0 : index
    %c0_22 = arith.constant 0 : index
    %41 = vector.load %arg7[%c0_20, %c0_21, %c0_22] : memref<2x128x384xf32, #tpu.memory_space<vmem>>, vector<1x128x384xf32>
    %42 = vector.shape_cast %41 : vector<1x128x384xf32> to vector<128x384xf32>
    %cst_23 = arith.constant dense<0.000000e+00> : vector<128x384xf32>
    %43 = tpu.matmul %40, %42, %cst_23 {dimension_numbers = #tpu.dot_dimension_numbers<[1], [0], [0], [1], [0, 0, 1, 1], [], []>} : vector<128x128xf32>, vector<128x384xf32>, vector<128x384xf32> -> vector<128x384xf32>
    %44 = arith.subf %43, %14 : vector<128x384xf32>
    %45 = vector.broadcast %22 : vector<128x1xf32> to vector<128x384xf32>
    %46 = arith.mulf %44, %45 : vector<128x384xf32>
    %47 = arith.mulf %46, %46 : vector<128x384xf32>
    %48 = vector.shape_cast %47 : vector<128x384xf32> to vector<1x128x384xf32>
    %cst_24 = arith.constant dense<0.000000e+00> : vector<1xf32>
    %49 = vector.multi_reduction <add>, %48, %cst_24 [1, 2] : vector<1x128x384xf32> to vector<1xf32>
    %50 = vector.shape_cast %49 : vector<1xf32> to vector<1x1x1xf32>
    %51 = vector.extract %50[0, 0, 0] : f32 from vector<1x1x1xf32>
    %cst_25 = arith.constant 0.000000e+00 : f32
    %52 = arith.addf %cst_25, %51 : f32
    %53 = arith.addf %23, %43 : vector<128x384xf32>
    %54 = arith.subf %14, %43 : vector<128x384xf32>
    %c1 = arith.constant 1 : index
    %c0_26 = arith.constant 0 : index
    %c0_27 = arith.constant 0 : index
    %55 = vector.load %arg8[%c1, %c0_26, %c0_27] : memref<2x1x128xf32, #tpu.memory_space<vmem>>, vector<1x1x128xf32>
    %56 = vector.shape_cast %55 : vector<1x1x128xf32> to vector<1x128xf32>
    %57 = arith.truncf %54 : vector<128x384xf32> to vector<128x384xbf16>
    %c1_28 = arith.constant 1 : index
    %c0_29 = arith.constant 0 : index
    %c0_30 = arith.constant 0 : index
    %58 = vector.load %arg6[%c1_28, %c0_29, %c0_30] : memref<2x384x128xbf16, #tpu.memory_space<vmem>>, vector<1x384x128xbf16>
    %59 = vector.shape_cast %58 : vector<1x384x128xbf16> to vector<384x128xbf16>
    %cst_31 = arith.constant dense<0.000000e+00> : vector<128x128xf32>
    %60 = tpu.matmul %57, %59, %cst_31 {dimension_numbers = #tpu.dot_dimension_numbers<[1], [0], [0], [1], [0, 0, 1, 1], [], []>} : vector<128x384xbf16>, vector<384x128xbf16>, vector<128x128xf32> -> vector<128x128xf32>
    %cst_32 = arith.constant 2.000000e+00 : f32
    %61 = vector.broadcast %cst_32 : f32 to vector<128x128xf32>
    %62 = arith.mulf %61, %60 : vector<128x128xf32>
    %63 = vector.broadcast %56 : vector<1x128xf32> to vector<128x128xf32>
    %64 = arith.subf %63, %62 : vector<128x128xf32>
    %65 = tpu.reduce_index %64 {axis = 1 : i32, kind = #tpu.reduction_kind<arg_min>} : vector<128x128xf32> -> vector<128xi32>
    %66 = tpu.iota {dimensions = array<i32: 1>} : vector<128x128xi32>
    %67 = vector.shape_cast %65 : vector<128xi32> to vector<128x1xi32>
    %68 = vector.broadcast %67 : vector<128x1xi32> to vector<128x128xi32>
    %69 = arith.cmpi eq, %66, %68 : vector<128x128xi32>
    %70 = arith.extui %69 : vector<128x128xi1> to vector<128x128xi32>
    %71 = arith.sitofp %70 : vector<128x128xi32> to vector<128x128xf32>
    %c1_33 = arith.constant 1 : index
    %c0_34 = arith.constant 0 : index
    %c0_35 = arith.constant 0 : index
    %72 = vector.load %arg7[%c1_33, %c0_34, %c0_35] : memref<2x128x384xf32, #tpu.memory_space<vmem>>, vector<1x128x384xf32>
    %73 = vector.shape_cast %72 : vector<1x128x384xf32> to vector<128x384xf32>
    %cst_36 = arith.constant dense<0.000000e+00> : vector<128x384xf32>
    %74 = tpu.matmul %71, %73, %cst_36 {dimension_numbers = #tpu.dot_dimension_numbers<[1], [0], [0], [1], [0, 0, 1, 1], [], []>} : vector<128x128xf32>, vector<128x384xf32>, vector<128x384xf32> -> vector<128x384xf32>
    %75 = arith.subf %74, %54 : vector<128x384xf32>
    %76 = vector.broadcast %22 : vector<128x1xf32> to vector<128x384xf32>
    %77 = arith.mulf %75, %76 : vector<128x384xf32>
    %78 = arith.mulf %77, %77 : vector<128x384xf32>
    %79 = vector.shape_cast %78 : vector<128x384xf32> to vector<1x128x384xf32>
    %cst_37 = arith.constant dense<0.000000e+00> : vector<1xf32>
    %80 = vector.multi_reduction <add>, %79, %cst_37 [1, 2] : vector<1x128x384xf32> to vector<1xf32>
    %81 = vector.shape_cast %80 : vector<1xf32> to vector<1x1x1xf32>
    %82 = vector.extract %81[0, 0, 0] : f32 from vector<1x1x1xf32>
    %83 = arith.addf %52, %82 : f32
    %84 = arith.addf %53, %74 : vector<128x384xf32>
    %c0_38 = arith.constant 0 : index
    %c0_39 = arith.constant 0 : index
    %85 = vector.load %arg14[%c0_38, %c0_39] : memref<128x384xf32, #tpu.memory_space<vmem>>, vector<128x384xf32>
    tpu.vector_store %arg14[%c0_38, %c0_39], %84 {strides = array<i32>} : memref<128x384xf32, #tpu.memory_space<vmem>>, vector<128x384xf32>,
    %86 = vector.shape_cast %34 : vector<128xi32> to vector<1x128xi32>
    %87 = vector.shape_cast %65 : vector<128xi32> to vector<1x128xi32>
    %88 = tpu.concatenate %86, %87 in 0 : vector<1x128xi32>, vector<1x128xi32> -> vector<2x128xi32>
    %c0_40 = arith.constant 0 : index
    %c0_41 = arith.constant 0 : index
    %89 = vector.load %arg15[%c0_40, %c0_41] : memref<2x128xi32, #tpu.memory_space<vmem>>, vector<2x128xi32>
    tpu.vector_store %arg15[%c0_40, %c0_41], %88 {strides = array<i32>} : memref<2x128xi32, #tpu.memory_space<vmem>>, vector<2x128xi32>,
    %c0_42 = arith.constant 0 : index
    %c0_43 = arith.constant 0 : index
    %90 = memref.load %arg16[%c0_42, %c0_43] : memref<1x1xf32, #tpu.memory_space<smem>>
    memref.store %83, %arg16[%c0_42, %c0_43] : memref<1x1xf32, #tpu.memory_space<smem>>
    %91 = arith.truncf %84 : vector<128x384xf32> to vector<128x384xbf16>
    %c0_44 = arith.constant 0 : index
    %c0_45 = arith.constant 0 : index
    %92 = vector.load %arg9[%c0_44, %c0_45] : memref<384x256xbf16, #tpu.memory_space<vmem>>, vector<384x256xbf16>
    %cst_46 = arith.constant dense<0.000000e+00> : vector<128x256xf32>
    %93 = tpu.matmul %91, %92, %cst_46 {dimension_numbers = #tpu.dot_dimension_numbers<[1], [0], [0], [1], [0, 0, 1, 1], [], []>} : vector<128x384xbf16>, vector<384x256xbf16>, vector<128x256xf32> -> vector<128x256xf32>
    %c0_47 = arith.constant 0 : index
    %c0_48 = arith.constant 0 : index
    %94 = vector.load %arg10[%c0_47, %c0_48] : memref<1x256xf32, #tpu.memory_space<vmem>>, vector<1x256xf32>
    %95 = vector.broadcast %94 : vector<1x256xf32> to vector<128x256xf32>
    %96 = arith.addf %93, %95 : vector<128x256xf32>
    %cst_49 = arith.constant 0.000000e+00 : f32
    %97 = vector.broadcast %cst_49 : f32 to vector<128x256xf32>
    %98 = arith.maximumf %96, %97 : vector<128x256xf32>
    %99 = arith.truncf %98 : vector<128x256xf32> to vector<128x256xbf16>
    %c0_50 = arith.constant 0 : index
    %c0_51 = arith.constant 0 : index
    %100 = vector.load %arg11[%c0_50, %c0_51] : memref<256x384xbf16, #tpu.memory_space<vmem>>, vector<256x384xbf16>
    %cst_52 = arith.constant dense<0.000000e+00> : vector<128x384xf32>
    %101 = tpu.matmul %99, %100, %cst_52 {dimension_numbers = #tpu.dot_dimension_numbers<[1], [0], [0], [1], [0, 0, 1, 1], [], []>} : vector<128x256xbf16>, vector<256x384xbf16>, vector<128x384xf32> -> vector<128x384xf32>
    %c0_53 = arith.constant 0 : index
    %c0_54 = arith.constant 0 : index
    %102 = vector.load %arg12[%c0_53, %c0_54] : memref<1x384xf32, #tpu.memory_space<vmem>>, vector<1x384xf32>
    %103 = vector.broadcast %102 : vector<1x384xf32> to vector<128x384xf32>
    %104 = arith.addf %101, %103 : vector<128x384xf32>
    %c0_55 = arith.constant 0 : index
    %c0_56 = arith.constant 0 : index
    %105 = vector.load %arg13[%c0_55, %c0_56] : memref<128x384xf32, #tpu.memory_space<vmem>>, vector<128x384xf32>
    tpu.vector_store %arg13[%c0_55, %c0_56], %104 {strides = array<i32>} : memref<128x384xf32, #tpu.memory_space<vmem>>, vector<128x384xf32>,
    return
  }
  func.func @transform_0(%arg0: i32) -> (i32, i32) {
    %c0_i32 = arith.constant 0 : i32
    %c0_i32_0 = arith.constant 0 : i32
    return %arg0, %c0_i32 : i32, i32
  }
  func.func @transform_1(%arg0: i32) -> (i32, i32) {
    %c0_i32 = arith.constant 0 : i32
    %c0_i32_0 = arith.constant 0 : i32
    %c0_i32_1 = arith.constant 0 : i32
    return %c0_i32, %c0_i32_0 : i32, i32
  }
  func.func @transform_2(%arg0: i32) -> (i32, i32) {
    %c0_i32 = arith.constant 0 : i32
    %c0_i32_0 = arith.constant 0 : i32
    %c0_i32_1 = arith.constant 0 : i32
    return %c0_i32, %c0_i32_0 : i32, i32
  }
  func.func @transform_3(%arg0: i32) -> (i32, i32) {
    %c0_i32 = arith.constant 0 : i32
    %c0_i32_0 = arith.constant 0 : i32
    %c0_i32_1 = arith.constant 0 : i32
    return %c0_i32, %c0_i32_0 : i32, i32
  }
  func.func @transform_4(%arg0: i32) -> (i32, i32) {
    %c0_i32 = arith.constant 0 : i32
    %c0_i32_0 = arith.constant 0 : i32
    %c0_i32_1 = arith.constant 0 : i32
    return %c0_i32, %c0_i32_0 : i32, i32
  }
  func.func @transform_5(%arg0: i32) -> (i32, i32, i32) {
    %c0_i32 = arith.constant 0 : i32
    %c0_i32_0 = arith.constant 0 : i32
    %c0_i32_1 = arith.constant 0 : i32
    %c0_i32_2 = arith.constant 0 : i32
    return %c0_i32, %c0_i32_0, %c0_i32_1 : i32, i32, i32
  }
  func.func @transform_6(%arg0: i32) -> (i32, i32, i32) {
    %c0_i32 = arith.constant 0 : i32
    %c0_i32_0 = arith.constant 0 : i32
    %c0_i32_1 = arith.constant 0 : i32
    %c0_i32_2 = arith.constant 0 : i32
    return %c0_i32, %c0_i32_0, %c0_i32_1 : i32, i32, i32
  }
  func.func @transform_7(%arg0: i32) -> (i32, i32, i32) {
    %c0_i32 = arith.constant 0 : i32
    %c0_i32_0 = arith.constant 0 : i32
    %c0_i32_1 = arith.constant 0 : i32
    %c0_i32_2 = arith.constant 0 : i32
    return %c0_i32, %c0_i32_0, %c0_i32_1 : i32, i32, i32
  }
  func.func @transform_8(%arg0: i32) -> (i32, i32) {
    %c0_i32 = arith.constant 0 : i32
    %c0_i32_0 = arith.constant 0 : i32
    %c0_i32_1 = arith.constant 0 : i32
    return %c0_i32, %c0_i32_0 : i32, i32
  }
  func.func @transform_9(%arg0: i32) -> (i32, i32) {
    %c0_i32 = arith.constant 0 : i32
    %c0_i32_0 = arith.constant 0 : i32
    %c0_i32_1 = arith.constant 0 : i32
    return %c0_i32, %c0_i32_0 : i32, i32
  }
  func.func @transform_10(%arg0: i32) -> (i32, i32) {
    %c0_i32 = arith.constant 0 : i32
    %c0_i32_0 = arith.constant 0 : i32
    %c0_i32_1 = arith.constant 0 : i32
    return %c0_i32, %c0_i32_0 : i32, i32
  }
  func.func @transform_11(%arg0: i32) -> (i32, i32) {
    %c0_i32 = arith.constant 0 : i32
    %c0_i32_0 = arith.constant 0 : i32
    %c0_i32_1 = arith.constant 0 : i32
    return %c0_i32, %c0_i32_0 : i32, i32
  }
  func.func @transform_12(%arg0: i32) -> (i32, i32) {
    %c0_i32 = arith.constant 0 : i32
    %c0_i32_0 = arith.constant 0 : i32
    return %arg0, %c0_i32 : i32, i32
  }
  func.func @transform_13(%arg0: i32) -> (i32, i32) {
    %c0_i32 = arith.constant 0 : i32
    %c0_i32_0 = arith.constant 0 : i32
    return %arg0, %c0_i32 : i32, i32
  }
  func.func @transform_14(%arg0: i32) -> (i32, i32) {
    %c0_i32 = arith.constant 0 : i32
    %c0_i32_0 = arith.constant 0 : i32
    return %c0_i32, %arg0 : i32, i32
  }
  func.func @transform_15(%arg0: i32) -> (i32, i32) {
    %c0_i32 = arith.constant 0 : i32
    %c0_i32_0 = arith.constant 0 : i32
    return %arg0, %c0_i32 : i32, i32
  }
}

</mosaic_0001>

<llo_original>
// kernel: tpu_custom_call.1
$region0: #{tpu_custom_call.1}
  #allocation0 [shape = 'u32[]', space=smem, size = 0x4, offset = 0x4, fixed_abs, tag = 'smem constant byte address 0x4 - core index']
  #allocation1 [shape = 'u32[144,128]{1,0:T(1,128)}', space=vmem, size = 0x12000, scoped, tag = 'internal scratch']
  %s0 = inlined_call_operand.hbm [shape: f32[128,384], index: 0, kind: input, shape index: {}]
  %s1 = inlined_call_operand.hbm [shape: bf16[384,256], index: 1, kind: input, shape index: {}]
  %s2 = inlined_call_operand.hbm [shape: f32[1,256], index: 2, kind: input, shape index: {}]
  %s3 = inlined_call_operand.hbm [shape: bf16[256,384], index: 3, kind: input, shape index: {}]
  %s4 = inlined_call_operand.vmem [shape: f32[1,384], index: 4, kind: input, shape index: {}]
  %s5 = inlined_call_operand.hbm [shape: bf16[2,384,128], index: 5, kind: input, shape index: {}]
  %s6 = inlined_call_operand.hbm [shape: f32[2,128,384], index: 6, kind: input, shape index: {}]
  %s7 = inlined_call_operand.vmem [shape: f32[2,1,128], index: 7, kind: input, shape index: {}]
  %s8 = inlined_call_operand.hbm [shape: bf16[384,256], index: 8, kind: input, shape index: {}]
  %s9 = inlined_call_operand.vmem [shape: f32[1,256], index: 9, kind: input, shape index: {}]
  %s10 = inlined_call_operand.hbm [shape: bf16[256,384], index: 10, kind: input, shape index: {}]
  %s11 = inlined_call_operand.vmem [shape: f32[1,384], index: 11, kind: input, shape index: {}]
  %s12 = inlined_call_operand.hbm [shape: f32[128,384], index: 12, kind: output, shape index: {0}]
  %s13 = inlined_call_operand.hbm [shape: f32[128,384], index: 13, kind: output, shape index: {1}]
  %s14 = inlined_call_operand.hbm [shape: s32[2,128], index: 14, kind: output, shape index: {2}]
  %s15 = inlined_call_operand.hbm [shape: f32[1,1], index: 15, kind: output, shape index: {3}]
  %16 = xla_tuple %s12, %s13, %s14, %s15
  %s17 = sld [smem:[#allocation0]]
  $region114: #{tpu_custom_call.1} parent=0
    _
  %s19 = ssub.s32 1, %s17
  %s20 = scalar_select 0, %s19, %s17
  $region1: #{tpu_custom_call.1} parent=0
    #allocation2 [shape = 'u8[196608]{0}', space=vmem, size = 0x30000, scoped, tag = 'input window, operand 0, single buffered']
    #allocation3 [shape = 's32[1]{0}', space=sflag, size = 0x4, scoped, tag = 'scoped memory for tpu_custom_call.1']
    #allocation4 [shape = 's32[1]{0}', space=sflag, size = 0x4, scoped, tag = 'scoped memory for tpu_custom_call.1']
    #allocation5 [shape = 's32[1]{0}', space=sflag, size = 0x4, scoped, tag = 'scoped memory for tpu_custom_call.1']
    #allocation6 [shape = 'u8[196608]{0}', space=vmem, size = 0x30000, scoped, tag = 'input window, operand 1, single buffered']
    #allocation7 [shape = 's32[1]{0}', space=sflag, size = 0x4, scoped, tag = 'scoped memory for tpu_custom_call.1']
    #allocation8 [shape = 'u8[1024]{0}', space=vmem, size = 0x400, scoped, tag = 'input window, operand 2, single buffered']
    #allocation9 [shape = 'u8[196608]{0}', space=vmem, size = 0x30000, scoped, tag = 'input window, operand 3, single buffered']
    #allocation10 [shape = 's32[1]{0}', space=sflag, size = 0x4, scoped, tag = 'scoped memory for tpu_custom_call.1']
    #allocation11 [shape = 'u8[196608]{0}', space=vmem, size = 0x30000, scoped, tag = 'input window, operand 5, single buffered']
    #allocation12 [shape = 'u8[393216]{0}', space=vmem, size = 0x60000, scoped, tag = 'input window, operand 6, single buffered']
    #allocation13 [shape = 's32[1]{0}', space=sflag, size = 0x4, scoped, tag = 'scoped memory for tpu_custom_call.1']
    #allocation14 [shape = 'u8[196608]{0}', space=vmem, size = 0x30000, scoped, tag = 'input window, operand 8, single buffered']
    #allocation15 [shape = 'u8[196608]{0}', space=vmem, size = 0x30000, scoped, tag = 'input window, operand 10, single buffered']
    #allocation16 [shape = 's32[1]{0}', space=sflag, size = 0x4, scoped, tag = 'scoped memory for tpu_custom_call.1']
    #allocation17 [shape = 'u8[196608]{0}', space=vmem, size = 0x30000, scoped, tag = 'output window, operand 0, single buffered']
    #allocation18 [shape = 'u8[196608]{0}', space=vmem, size = 0x30000, scoped, tag = 'output window, operand 1, single buffered']
    #allocation19 [shape = 's32[1]{0}', space=sflag, size = 0x4, scoped, tag = 'scoped memory for tpu_custom_call.1']
    #allocation20 [shape = 'u8[1024]{0}', space=vmem, size = 0x400, scoped, tag = 'output window, operand 2, single buffered']
    #allocation21 [shape = 'u8[512]{0}', space=smem, size = 0x200, scoped, tag = 'output window, operand 3, single buffered']
    %21 = vsyncpa [#allocation3], 0
    %22 = vsyncpa [#allocation7], 0
    %23 = vsyncpa [#allocation10], 0
    %24 = vsyncpa [#allocation13], 0
    %25 = vsyncpa [#allocation16], 0
    %26 = vsyncpa [#allocation4], 0
    %27 = vsyncpa [#allocation19], 0
    %28 = vsyncpa [#allocation5], 0
    // Predicated region
    $region2: #{tpu_custom_call.1} parent=1 // pred_check
      _
    $region3: #{tpu_custom_call.1} parent=1 // pred_check_branch
      %30 = sbr.rel (0) target = $region5
    $region4: #{tpu_custom_call.1} parent=1 // pred_region
      %s32 = ssub.s32 6144, 6144
      %33 = vsyncadd [#allocation3], %s32
      %s34 = sshll.u32 [#allocation2], 4
      %s35 = int_to_ptr.vmem [resolvable:$true] %s34
      %40 = dma.hbm_to_vmem [thread:$0]  %s0, 6144, %s35, [#allocation3], 384, 384, 24
    $region5: #{tpu_custom_call.1} parent=1 // pred_fallthru
      _
    // Predicated region
    $region6: #{tpu_custom_call.1} parent=1 // pred_check
      _
    $region7: #{tpu_custom_call.1} parent=1 // pred_check_branch
      %42 = sbr.rel (0) target = $region9
    $region8: #{tpu_custom_call.1} parent=1 // pred_region
      %s44 = ssub.s32 6144, 6144
      %45 = vsyncadd [#allocation7], %s44
      %s46 = sshll.u32 [#allocation6], 4
      %s47 = int_to_ptr.vmem [resolvable:$true] %s46
      %52 = dma.hbm_to_vmem [thread:$0]  %s1, 6144, %s47, [#allocation7], 128, 128, 8
    $region9: #{tpu_custom_call.1} parent=1 // pred_fallthru
      _
    // Predicated region
    $region10: #{tpu_custom_call.1} parent=1 // pred_check
      _
    $region11: #{tpu_custom_call.1} parent=1 // pred_check_branch
      %54 = sbr.rel (0) target = $region13
    $region12: #{tpu_custom_call.1} parent=1 // pred_region
      %s56 = ssub.s32 32, 32
      %57 = vsyncadd [#allocation7], %s56
      %s59 = sshll.u32 [#allocation8], 4
      %s60 = int_to_ptr.vmem [resolvable:$true] %s59
      %62 = dma.hbm_to_vmem [thread:$0]  %s2, 32, %s60, [#allocation7]
    $region13: #{tpu_custom_call.1} parent=1 // pred_fallthru
      _
    // Predicated region
    $region14: #{tpu_custom_call.1} parent=1 // pred_check
      _
    $region15: #{tpu_custom_call.1} parent=1 // pred_check_branch
      %64 = sbr.rel (0) target = $region17
    $region16: #{tpu_custom_call.1} parent=1 // pred_region
      %s66 = ssub.s32 6144, 6144
      %67 = vsyncadd [#allocation10], %s66
      %s68 = sshll.u32 [#allocation9], 4
      %s69 = int_to_ptr.vmem [resolvable:$true] %s68
      %74 = dma.hbm_to_vmem [thread:$0]  %s3, 6144, %s69, [#allocation10], 192, 192, 12
    $region17: #{tpu_custom_call.1} parent=1 // pred_fallthru
      _
    // Predicated region
    $region18: #{tpu_custom_call.1} parent=1 // pred_check
      _
    $region19: #{tpu_custom_call.1} parent=1 // pred_check_branch
      %76 = sbr.rel (0) target = $region21
    $region20: #{tpu_custom_call.1} parent=1 // pred_region
      _
    $region21: #{tpu_custom_call.1} parent=1 // pred_fallthru
      _
    // Predicated region
    $region22: #{tpu_custom_call.1} parent=1 // pred_check
      _
    $region23: #{tpu_custom_call.1} parent=1 // pred_check_branch
      %78 = sbr.rel (0) target = $region25
    $region24: #{tpu_custom_call.1} parent=1 // pred_region
      %s80 = ssub.s32 6144, 6144
      %81 = vsyncadd [#allocation10], %s80
      %s82 = sshll.u32 [#allocation11], 4
      %s83 = int_to_ptr.vmem [resolvable:$true] %s82
      %88 = dma.hbm_to_vmem [thread:$0]  %s5, 6144, %s83, [#allocation10], 64, 64, 4
    $region25: #{tpu_custom_call.1} parent=1 // pred_fallthru
      _
    // Predicated region
    $region26: #{tpu_custom_call.1} parent=1 // pred_check
      _
    $region27: #{tpu_custom_call.1} parent=1 // pred_check_branch
      %90 = sbr.rel (0) target = $region29
    $region28: #{tpu_custom_call.1} parent=1 // pred_region
      %s92 = ssub.s32 12288, 12288
      %93 = vsyncadd [#allocation13], %s92
      %s94 = sshll.u32 [#allocation12], 4
      %s95 = int_to_ptr.vmem [resolvable:$true] %s94
      %100 = dma.hbm_to_vmem [thread:$0]  %s6, 12288, %s95, [#allocation13], 384, 384, 24
    $region29: #{tpu_custom_call.1} parent=1 // pred_fallthru
      _
    // Predicated region
    $region30: #{tpu_custom_call.1} parent=1 // pred_check
      _
    $region31: #{tpu_custom_call.1} parent=1 // pred_check_branch
      %102 = sbr.rel (0) target = $region33
    $region32: #{tpu_custom_call.1} parent=1 // pred_region
      _
    $region33: #{tpu_custom_call.1} parent=1 // pred_fallthru
      _
    // Predicated region
    $region34: #{tpu_custom_call.1} parent=1 // pred_check
      _
    $region35: #{tpu_custom_call.1} parent=1 // pred_check_branch
      %104 = sbr.rel (0) target = $region37
    $region36: #{tpu_custom_call.1} parent=1 // pred_region
      %s106 = ssub.s32 6144, 6144
      %107 = vsyncadd [#allocation13], %s106
      %s108 = sshll.u32 [#allocation14], 4
      %s109 = int_to_ptr.vmem [resolvable:$true] %s108
      %114 = dma.hbm_to_vmem [thread:$0]  %s8, 6144, %s109, [#allocation13], 128, 128, 8
    $region37: #{tpu_custom_call.1} parent=1 // pred_fallthru
      _
    // Predicated region
    $region38: #{tpu_custom_call.1} parent=1 // pred_check
      _
    $region39: #{tpu_custom_call.1} parent=1 // pred_check_branch
      %116 = sbr.rel (0) target = $region41
    $region40: #{tpu_custom_call.1} parent=1 // pred_region
      _
    $region41: #{tpu_custom_call.1} parent=1 // pred_fallthru
      _
    // Predicated region
    $region42: #{tpu_custom_call.1} parent=1 // pred_check
      _
    $region43: #{tpu_custom_call.1} parent=1 // pred_check_branch
      %118 = sbr.rel (0) target = $region45
    $region44: #{tpu_custom_call.1} parent=1 // pred_region
      %s120 = ssub.s32 6144, 6144
      %121 = vsyncadd [#allocation16], %s120
      %s122 = sshll.u32 [#allocation15], 4
      %s123 = int_to_ptr.vmem [resolvable:$true] %s122
      %128 = dma.hbm_to_vmem [thread:$0]  %s10, 6144, %s123, [#allocation16], 192, 192, 12
    $region45: #{tpu_custom_call.1} parent=1 // pred_fallthru
      _
    // Predicated region
    $region46: #{tpu_custom_call.1} parent=1 // pred_check
      _
    $region47: #{tpu_custom_call.1} parent=1 // pred_check_branch
      %130 = sbr.rel (0) target = $region49
    $region48: #{tpu_custom_call.1} parent=1 // pred_region
      _
    $region49: #{tpu_custom_call.1} parent=1 // pred_fallthru
      _
    // Predicated region
    $region50: #{tpu_custom_call.1} parent=1 // pred_check
      _
    $region51: #{tpu_custom_call.1} parent=1 // pred_check_branch
      %132 = sbr.rel (0) target = $region53
    $region52: #{tpu_custom_call.1} parent=1 // pred_region
      %133 = dma.done [#allocation3], 6144
    $region53: #{tpu_custom_call.1} parent=1 // pred_fallthru
      _
    // Predicated region
    $region54: #{tpu_custom_call.1} parent=1 // pred_check
      _
    $region55: #{tpu_custom_call.1} parent=1 // pred_check_branch
      %135 = sbr.rel (0) target = $region57
    $region56: #{tpu_custom_call.1} parent=1 // pred_region
      %136 = dma.done [#allocation7], 6144
    $region57: #{tpu_custom_call.1} parent=1 // pred_fallthru
      _
    // Predicated region
    $region58: #{tpu_custom_call.1} parent=1 // pred_check
      _
    $region59: #{tpu_custom_call.1} parent=1 // pred_check_branch
      %138 = sbr.rel (0) target = $region61
    $region60: #{tpu_custom_call.1} parent=1 // pred_region
      %139 = dma.done [#allocation7], 32
    $region61: #{tpu_custom_call.1} parent=1 // pred_fallthru
      _
    // Predicated region
    $region62: #{tpu_custom_call.1} parent=1 // pred_check
      _
    $region63: #{tpu_custom_call.1} parent=1 // pred_check_branch
      %141 = sbr.rel (0) target = $region65
    $region64: #{tpu_custom_call.1} parent=1 // pred_region
      %142 = dma.done [#allocation10], 6144
    $region65: #{tpu_custom_call.1} parent=1 // pred_fallthru
      _
    // Predicated region
    $region66: #{tpu_custom_call.1} parent=1 // pred_check
      _
    $region67: #{tpu_custom_call.1} parent=1 // pred_check_branch
      %144 = sbr.rel (0) target = $region69
    $region68: #{tpu_custom_call.1} parent=1 // pred_region
      %145 = dma.done [#allocation10], 6144
    $region69: #{tpu_custom_call.1} parent=1 // pred_fallthru
      _
    // Predicated region
    $region70: #{tpu_custom_call.1} parent=1 // pred_check
      _
    $region71: #{tpu_custom_call.1} parent=1 // pred_check_branch
      %147 = sbr.rel (0) target = $region73
    $region72: #{tpu_custom_call.1} parent=1 // pred_region
      %148 = dma.done [#allocation13], 12288
    $region73: #{tpu_custom_call.1} parent=1 // pred_fallthru
      _
    // Predicated region
    $region74: #{tpu_custom_call.1} parent=1 // pred_check
      _
    $region75: #{tpu_custom_call.1} parent=1 // pred_check_branch
      %150 = sbr.rel (0) target = $region77
    $region76: #{tpu_custom_call.1} parent=1 // pred_region
      %151 = dma.done [#allocation13], 6144
    $region77: #{tpu_custom_call.1} parent=1 // pred_fallthru
      _
    // Predicated region
    $region78: #{tpu_custom_call.1} parent=1 // pred_check
      _
    $region79: #{tpu_custom_call.1} parent=1 // pred_check_branch
      %153 = sbr.rel (0) target = $region81
    $region80: #{tpu_custom_call.1} parent=1 // pred_region
      %154 = dma.done [#allocation16], 6144
    $region81: #{tpu_custom_call.1} parent=1 // pred_fallthru
      _
    %v156 = vld [vmem:[#allocation2] sm:$0xff]
    %v157 = vld [vmem:[#allocation2 + $0x8] sm:$0xff]
    %v158 = vld [vmem:[#allocation2 + $0x10] sm:$0xff]
    %v159 = vld [vmem:[#allocation2 + $0x18] sm:$0xff]
    %v160 = vld [vmem:[#allocation2 + $0x20] sm:$0xff]
    %v161 = vld [vmem:[#allocation2 + $0x28] sm:$0xff]
    %v162 = vld [vmem:[#allocation2 + $0x30] sm:$0xff]
    %v163 = vld [vmem:[#allocation2 + $0x38] sm:$0xff]
    %v164 = vld [vmem:[#allocation2 + $0x40] sm:$0xff]
    %v165 = vld [vmem:[#allocation2 + $0x48] sm:$0xff]
    %v166 = vld [vmem:[#allocation2 + $0x50] sm:$0xff]
    %v167 = vld [vmem:[#allocation2 + $0x58] sm:$0xff]
    %v168 = vld [vmem:[#allocation2 + $0x60] sm:$0xff]
    %v169 = vld [vmem:[#allocation2 + $0x68] sm:$0xff]
    %v170 = vld [vmem:[#allocation2 + $0x70] sm:$0xff]
    %v171 = vld [vmem:[#allocation2 + $0x78] sm:$0xff]
    %v172 = vld [vmem:[#allocation2 + $0x80] sm:$0xff]
    %v173 = vld [vmem:[#allocation2 + $0x88] sm:$0xff]
    %v174 = vld [vmem:[#allocation2 + $0x90] sm:$0xff]
    %v175 = vld [vmem:[#allocation2 + $0x98] sm:$0xff]
    %v176 = vld [vmem:[#allocation2 + $0xa0] sm:$0xff]
    %v177 = vld [vmem:[#allocation2 + $0xa8] sm:$0xff]
    %v178 = vld [vmem:[#allocation2 + $0xb0] sm:$0xff]
    %v179 = vld [vmem:[#allocation2 + $0xb8] sm:$0xff]
    %v180 = vld [vmem:[#allocation2 + $0xc0] sm:$0xff]
    %v181 = vld [vmem:[#allocation2 + $0xc8] sm:$0xff]
    %v182 = vld [vmem:[#allocation2 + $0xd0] sm:$0xff]
    %v183 = vld [vmem:[#allocation2 + $0xd8] sm:$0xff]
    %v184 = vld [vmem:[#allocation2 + $0xe0] sm:$0xff]
    %v185 = vld [vmem:[#allocation2 + $0xe8] sm:$0xff]
    %v186 = vld [vmem:[#allocation2 + $0xf0] sm:$0xff]
    %v187 = vld [vmem:[#allocation2 + $0xf8] sm:$0xff]
    %v188 = vld [vmem:[#allocation2 + $0x100] sm:$0xff]
    %v189 = vld [vmem:[#allocation2 + $0x108] sm:$0xff]
    %v190 = vld [vmem:[#allocation2 + $0x110] sm:$0xff]
    %v191 = vld [vmem:[#allocation2 + $0x118] sm:$0xff]
    %v192 = vld [vmem:[#allocation2 + $0x120] sm:$0xff]
    %v193 = vld [vmem:[#allocation2 + $0x128] sm:$0xff]
    %v194 = vld [vmem:[#allocation2 + $0x130] sm:$0xff]
    %v195 = vld [vmem:[#allocation2 + $0x138] sm:$0xff]
    %v196 = vld [vmem:[#allocation2 + $0x140] sm:$0xff]
    %v197 = vld [vmem:[#allocation2 + $0x148] sm:$0xff]
    %v198 = vld [vmem:[#allocation2 + $0x150] sm:$0xff]
    %v199 = vld [vmem:[#allocation2 + $0x158] sm:$0xff]
    %v200 = vld [vmem:[#allocation2 + $0x160] sm:$0xff]
    %v201 = vld [vmem:[#allocation2 + $0x168] sm:$0xff]
    %v202 = vld [vmem:[#allocation2 + $0x170] sm:$0xff]
    %v203 = vld [vmem:[#allocation2 + $0x178] sm:$0xff]
    %v204 = vpack.c.bf16 %v159, %v156
    %v205 = vpack.c.bf16 %v160, %v157
    %v206 = vpack.c.bf16 %v161, %v158
    %v207 = vpack.c.bf16 %v165, %v162
    %v208 = vpack.c.bf16 %v166, %v163
    %v209 = vpack.c.bf16 %v167, %v164
    %v210 = vpack.c.bf16 %v171, %v168
    %v211 = vpack.c.bf16 %v172, %v169
    %v212 = vpack.c.bf16 %v173, %v170
    %v213 = vpack.c.bf16 %v177, %v174
    %v214 = vpack.c.bf16 %v178, %v175
    %v215 = vpack.c.bf16 %v179, %v176
    %v216 = vpack.c.bf16 %v183, %v180
    %v217 = vpack.c.bf16 %v184, %v181
    %v218 = vpack.c.bf16 %v185, %v182
    %v219 = vpack.c.bf16 %v189, %v186
    %v220 = vpack.c.bf16 %v190, %v187
    %v221 = vpack.c.bf16 %v191, %v188
    %v222 = vpack.c.bf16 %v195, %v192
    %v223 = vpack.c.bf16 %v196, %v193
    %v224 = vpack.c.bf16 %v197, %v194
    %v225 = vpack.c.bf16 %v201, %v198
    %v226 = vpack.c.bf16 %v202, %v199
    %v227 = vpack.c.bf16 %v203, %v200
    %v228 = vld [vmem:[#allocation6] sm:$0xff]
    %v229 = vld [vmem:[#allocation6 + $0x8] sm:$0xff]
    %v230 = vld [vmem:[#allocation6 + $0x10] sm:$0xff]
    %v231 = vld [vmem:[#allocation6 + $0x18] sm:$0xff]
    %v232 = vld [vmem:[#allocation6 + $0x20] sm:$0xff]
    %v233 = vld [vmem:[#allocation6 + $0x28] sm:$0xff]
    %v234 = vld [vmem:[#allocation6 + $0x30] sm:$0xff]
    %v235 = vld [vmem:[#allocation6 + $0x38] sm:$0xff]
    %v236 = vld [vmem:[#allocation6 + $0x40] sm:$0xff]
    %v237 = vld [vmem:[#allocation6 + $0x48] sm:$0xff]
    %v238 = vld [vmem:[#allocation6 + $0x50] sm:$0xff]
    %v239 = vld [vmem:[#allocation6 + $0x58] sm:$0xff]
    %v240 = vld [vmem:[#allocation6 + $0x60] sm:$0xff]
    %v241 = vld [vmem:[#allocation6 + $0x68] sm:$0xff]
    %v242 = vld [vmem:[#allocation6 + $0x70] sm:$0xff]
    %v243 = vld [vmem:[#allocation6 + $0x78] sm:$0xff]
    %v244 = vld [vmem:[#allocation6 + $0x80] sm:$0xff]
    %v245 = vld [vmem:[#allocation6 + $0x88] sm:$0xff]
    %v246 = vld [vmem:[#allocation6 + $0x90] sm:$0xff]
    %v247 = vld [vmem:[#allocation6 + $0x98] sm:$0xff]
    %v248 = vld [vmem:[#allocation6 + $0xa0] sm:$0xff]
    %v249 = vld [vmem:[#allocation6 + $0xa8] sm:$0xff]
    %v250 = vld [vmem:[#allocation6 + $0xb0] sm:$0xff]
    %v251 = vld [vmem:[#allocation6 + $0xb8] sm:$0xff]
    %v252 = vld [vmem:[#allocation6 + $0xc0] sm:$0xff]
    %v253 = vld [vmem:[#allocation6 + $0xc8] sm:$0xff]
    %v254 = vld [vmem:[#allocation6 + $0xd0] sm:$0xff]
    %v255 = vld [vmem:[#allocation6 + $0xd8] sm:$0xff]
    %v256 = vld [vmem:[#allocation6 + $0xe0] sm:$0xff]
    %v257 = vld [vmem:[#allocation6 + $0xe8] sm:$0xff]
    %v258 = vld [vmem:[#allocation6 + $0xf0] sm:$0xff]
    %v259 = vld [vmem:[#allocation6 + $0xf8] sm:$0xff]
    %v260 = vld [vmem:[#allocation6 + $0x100] sm:$0xff]
    %v261 = vld [vmem:[#allocation6 + $0x108] sm:$0xff]
    %v262 = vld [vmem:[#allocation6 + $0x110] sm:$0xff]
    %v263 = vld [vmem:[#allocation6 + $0x118] sm:$0xff]
    %v264 = vld [vmem:[#allocation6 + $0x120] sm:$0xff]
    %v265 = vld [vmem:[#allocation6 + $0x128] sm:$0xff]
    %v266 = vld [vmem:[#allocation6 + $0x130] sm:$0xff]
    %v267 = vld [vmem:[#allocation6 + $0x138] sm:$0xff]
    %v268 = vld [vmem:[#allocation6 + $0x140] sm:$0xff]
    %v269 = vld [vmem:[#allocation6 + $0x148] sm:$0xff]
    %v270 = vld [vmem:[#allocation6 + $0x150] sm:$0xff]
    %v271 = vld [vmem:[#allocation6 + $0x158] sm:$0xff]
    %v272 = vld [vmem:[#allocation6 + $0x160] sm:$0xff]
    %v273 = vld [vmem:[#allocation6 + $0x168] sm:$0xff]
    %v274 = vld [vmem:[#allocation6 + $0x170] sm:$0xff]
    %v275 = vld [vmem:[#allocation6 + $0x178] sm:$0xff]
    %v276 = vld [vmem:[#allocation8] sm:$0x3]
    %v278 = vlaneseq
    %v279 = vshrl.u32 %v278, 7
    %v280 = vsub.s32 0, %v279
    %v281 = vrot.slane %v276, %v280
    %v282 = vlaneseq
    %v283 = vshrl.u32 %v282, 7
    %v284 = vsub.s32 1, %v283
    %v285 = vrot.slane %v276, %v284
    %v336 = vunpack.c.l.b16 %v228
    %v337 = vunpack.c.h.b16 %v228
    %v338 = vunpack.c.l.b16 %v229
    %v339 = vunpack.c.h.b16 %v229
    %v340 = vunpack.c.l.b16 %v230
    %v341 = vunpack.c.h.b16 %v230
    %v342 = vunpack.c.l.b16 %v231
    %v343 = vunpack.c.h.b16 %v231
    %v344 = vunpack.c.l.b16 %v232
    %v345 = vunpack.c.h.b16 %v232
    %v346 = vunpack.c.l.b16 %v233
    %v347 = vunpack.c.h.b16 %v233
    %v348 = vunpack.c.l.b16 %v234
    %v349 = vunpack.c.h.b16 %v234
    %v350 = vunpack.c.l.b16 %v235
    %v351 = vunpack.c.h.b16 %v235
    %v352 = vunpack.c.l.b16 %v236
    %v353 = vunpack.c.h.b16 %v236
    %v354 = vunpack.c.l.b16 %v237
    %v355 = vunpack.c.h.b16 %v237
    %v356 = vunpack.c.l.b16 %v238
    %v357 = vunpack.c.h.b16 %v238
    %v358 = vunpack.c.l.b16 %v239
    %v359 = vunpack.c.h.b16 %v239
    %v360 = vunpack.c.l.b16 %v240
    %v361 = vunpack.c.h.b16 %v240
    %v362 = vunpack.c.l.b16 %v241
    %v363 = vunpack.c.h.b16 %v241
    %v364 = vunpack.c.l.b16 %v242
    %v365 = vunpack.c.h.b16 %v242
    %v366 = vunpack.c.l.b16 %v243
    %v367 = vunpack.c.h.b16 %v243
    %v368 = vunpack.c.l.b16 %v244
    %v369 = vunpack.c.h.b16 %v244
    %v370 = vunpack.c.l.b16 %v245
    %v371 = vunpack.c.h.b16 %v245
    %v372 = vunpack.c.l.b16 %v246
    %v373 = vunpack.c.h.b16 %v246
    %v374 = vunpack.c.l.b16 %v247
    %v375 = vunpack.c.h.b16 %v247
    %v376 = vunpack.c.l.b16 %v248
    %v377 = vunpack.c.h.b16 %v248
    %v378 = vunpack.c.l.b16 %v249
    %v379 = vunpack.c.h.b16 %v249
    %v380 = vunpack.c.l.b16 %v250
    %v381 = vunpack.c.h.b16 %v250
    %v382 = vunpack.c.l.b16 %v251
    %v383 = vunpack.c.h.b16 %v251
    %v384 = vunpack.c.l.b16 %v252
    %v385 = vunpack.c.h.b16 %v252
    %v386 = vunpack.c.l.b16 %v253
    %v387 = vunpack.c.h.b16 %v253
    %v388 = vunpack.c.l.b16 %v254
    %v389 = vunpack.c.h.b16 %v254
    %v390 = vunpack.c.l.b16 %v255
    %v391 = vunpack.c.h.b16 %v255
    %v392 = vunpack.c.l.b16 %v256
    %v393 = vunpack.c.h.b16 %v256
    %v394 = vunpack.c.l.b16 %v257
    %v395 = vunpack.c.h.b16 %v257
    %v396 = vunpack.c.l.b16 %v258
    %v397 = vunpack.c.h.b16 %v258
    %v398 = vunpack.c.l.b16 %v259
    %v399 = vunpack.c.h.b16 %v259
    %v400 = vunpack.c.l.b16 %v260
    %v401 = vunpack.c.h.b16 %v260
    %v402 = vunpack.c.l.b16 %v261
    %v403 = vunpack.c.h.b16 %v261
    %v404 = vunpack.c.l.b16 %v262
    %v405 = vunpack.c.h.b16 %v262
    %v406 = vunpack.c.l.b16 %v263
    %v407 = vunpack.c.h.b16 %v263
    %v408 = vunpack.c.l.b16 %v264
    %v409 = vunpack.c.h.b16 %v264
    %v410 = vunpack.c.l.b16 %v265
    %v411 = vunpack.c.h.b16 %v265
    %v412 = vunpack.c.l.b16 %v266
    %v413 = vunpack.c.h.b16 %v266
    %v414 = vunpack.c.l.b16 %v267
    %v415 = vunpack.c.h.b16 %v267
    %v416 = vunpack.c.l.b16 %v268
    %v417 = vunpack.c.h.b16 %v268
    %v418 = vunpack.c.l.b16 %v269
    %v419 = vunpack.c.h.b16 %v269
    %v420 = vunpack.c.l.b16 %v270
    %v421 = vunpack.c.h.b16 %v270
    %v422 = vunpack.c.l.b16 %v271
    %v423 = vunpack.c.h.b16 %v271
    %v424 = vunpack.c.l.b16 %v272
    %v425 = vunpack.c.h.b16 %v272
    %v426 = vunpack.c.l.b16 %v273
    %v427 = vunpack.c.h.b16 %v273
    %v428 = vunpack.c.l.b16 %v274
    %v429 = vunpack.c.h.b16 %v274
    %v430 = vunpack.c.l.b16 %v275
    %v431 = vunpack.c.h.b16 %v275
    %v432 = vpack.c.b16 %v338, %v336
    %v433 = vpack.c.b16 %v339, %v337
    %v434 = vpack.c.b16 %v342, %v340
    %v435 = vpack.c.b16 %v343, %v341
    %v436 = vpack.c.b16 %v346, %v344
    %v437 = vpack.c.b16 %v347, %v345
    %v438 = vpack.c.b16 %v350, %v348
    %v439 = vpack.c.b16 %v351, %v349
    %v440 = vpack.c.b16 %v354, %v352
    %v441 = vpack.c.b16 %v355, %v353
    %v442 = vpack.c.b16 %v358, %v356
    %v443 = vpack.c.b16 %v359, %v357
    %v444 = vpack.c.b16 %v362, %v360
    %v445 = vpack.c.b16 %v363, %v361
    %v446 = vpack.c.b16 %v366, %v364
    %v447 = vpack.c.b16 %v367, %v365
    %v448 = vpack.c.b16 %v370, %v368
    %v449 = vpack.c.b16 %v371, %v369
    %v450 = vpack.c.b16 %v374, %v372
    %v451 = vpack.c.b16 %v375, %v373
    %v452 = vpack.c.b16 %v378, %v376
    %v453 = vpack.c.b16 %v379, %v377
    %v454 = vpack.c.b16 %v382, %v380
    %v455 = vpack.c.b16 %v383, %v381
    %v456 = vpack.c.b16 %v386, %v384
    %v457 = vpack.c.b16 %v387, %v385
    %v458 = vpack.c.b16 %v390, %v388
    %v459 = vpack.c.b16 %v391, %v389
    %v460 = vpack.c.b16 %v394, %v392
    %v461 = vpack.c.b16 %v395, %v393
    %v462 = vpack.c.b16 %v398, %v396
    %v463 = vpack.c.b16 %v399, %v397
    %v464 = vpack.c.b16 %v402, %v400
    %v465 = vpack.c.b16 %v403, %v401
    %v466 = vpack.c.b16 %v406, %v404
    %v467 = vpack.c.b16 %v407, %v405
    %v468 = vpack.c.b16 %v410, %v408
    %v469 = vpack.c.b16 %v411, %v409
    %v470 = vpack.c.b16 %v414, %v412
    %v471 = vpack.c.b16 %v415, %v413
    %v472 = vpack.c.b16 %v418, %v416
    %v473 = vpack.c.b16 %v419, %v417
    %v474 = vpack.c.b16 %v422, %v420
    %v475 = vpack.c.b16 %v423, %v421
    %v476 = vpack.c.b16 %v426, %v424
    %v477 = vpack.c.b16 %v427, %v425
    %v478 = vpack.c.b16 %v430, %v428
    %v479 = vpack.c.b16 %v431, %v429
    %528 = vmatprep.subr.bf16.mxu0 %v433
    %529 = vmatpush1.bf16.msra.mxu0 %v432
    %530 = vmatprep.subr.bf16.mxu0 %v435
    %531 = vmatpush1.bf16.msra.mxu0 %v434
    %532 = vmatprep.subr.bf16.mxu0 %v437
    %533 = vmatpush1.bf16.msra.mxu0 %v436
    %534 = vmatprep.subr.bf16.mxu0 %v439
    %535 = vmatpush1.bf16.msra.mxu0 %v438
    %536 = vmatprep.subr.bf16.mxu0 %v441
    %537 = vmatpush1.bf16.msra.mxu0 %v440
    %538 = vmatprep.subr.bf16.mxu0 %v443
    %539 = vmatpush1.bf16.msra.mxu0 %v442
    %540 = vmatprep.subr.bf16.mxu0 %v445
    %541 = vmatpush1.bf16.msra.mxu0 %v444
    %542 = vmatprep.subr.bf16.mxu0 %v447
    %543 = vmatpush1.bf16.msra.mxu0 %v446
    %544 = vmatprep.subr.bf16.mxu0 %v449
    %545 = vmatpush1.bf16.msra.mxu0 %v448
    %546 = vmatprep.subr.bf16.mxu0 %v451
    %547 = vmatpush1.bf16.msra.mxu0 %v450
    %548 = vmatprep.subr.bf16.mxu0 %v453
    %549 = vmatpush1.bf16.msra.mxu0 %v452
    %550 = vmatprep.subr.bf16.mxu0 %v455
    %551 = vmatpush1.bf16.msra.mxu0 %v454
    %552 = vmatprep.subr.bf16.mxu0 %v457
    %553 = vmatpush1.bf16.msra.mxu0 %v456
    %554 = vmatprep.subr.bf16.mxu0 %v459
    %555 = vmatpush1.bf16.msra.mxu0 %v458
    %556 = vmatprep.subr.bf16.mxu0 %v461
    %557 = vmatpush1.bf16.msra.mxu0 %v460
    %558 = vmatprep.subr.bf16.mxu0 %v463
    %559 = vmatpush1.bf16.msra.mxu0 %v462
    %560 = vmatprep.mubr.bf16.mxu0 %v205
    %561 = vmatmul.mubr.bf16.gmra.mrb[0].mxu0 %v204
    %v562 = vpop.f32.mrb[0].mxu0
    %v563 = vadd.f32 %v281, %v562
    %v564 = vpop.f32.mrb[0].mxu0
    %v565 = vadd.f32 %v285, %v564
    %v566 = vpop.f32.mrb[0].mxu0
    %v567 = vadd.f32 %v281, %v566
    %v568 = vpop.f32.mrb[0].mxu0
    %v569 = vadd.f32 %v285, %v568
    %570 = vmatprep.mubr.bf16.mxu0 %v208
    %571 = vmatmul.mubr.bf16.gmra.mrb[0].mxu0 %v207
    %v572 = vpop.f32.mrb[0].mxu0
    %v573 = vadd.f32 %v281, %v572
    %v574 = vpop.f32.mrb[0].mxu0
    %v575 = vadd.f32 %v285, %v574
    %v576 = vpop.f32.mrb[0].mxu0
    %v577 = vadd.f32 %v281, %v576
    %v578 = vpop.f32.mrb[0].mxu0
    %v579 = vadd.f32 %v285, %v578
    %580 = vmatprep.mubr.bf16.mxu0 %v211
    %581 = vmatmul.mubr.bf16.gmra.mrb[0].mxu0 %v210
    %v582 = vpop.f32.mrb[0].mxu0
    %v583 = vadd.f32 %v281, %v582
    %v584 = vpop.f32.mrb[0].mxu0
    %v585 = vadd.f32 %v285, %v584
    %v586 = vpop.f32.mrb[0].mxu0
    %v587 = vadd.f32 %v281, %v586
    %v588 = vpop.f32.mrb[0].mxu0
    %v589 = vadd.f32 %v285, %v588
    %590 = vmatprep.mubr.bf16.mxu0 %v214
    %591 = vmatmul.mubr.bf16.gmra.mrb[0].mxu0 %v213
    %v592 = vpop.f32.mrb[0].mxu0
    %v593 = vadd.f32 %v281, %v592
    %v594 = vpop.f32.mrb[0].mxu0
    %v595 = vadd.f32 %v285, %v594
    %v596 = vpop.f32.mrb[0].mxu0
    %v597 = vadd.f32 %v281, %v596
    %v598 = vpop.f32.mrb[0].mxu0
    %v599 = vadd.f32 %v285, %v598
    %600 = vmatprep.mubr.bf16.mxu0 %v217
    %601 = vmatmul.mubr.bf16.gmra.mrb[0].mxu0 %v216
    %v602 = vpop.f32.mrb[0].mxu0
    %v603 = vadd.f32 %v281, %v602
    %v604 = vpop.f32.mrb[0].mxu0
    %v605 = vadd.f32 %v285, %v604
    %v606 = vpop.f32.mrb[0].mxu0
    %v607 = vadd.f32 %v281, %v606
    %v608 = vpop.f32.mrb[0].mxu0
    %v609 = vadd.f32 %v285, %v608
    %610 = vmatprep.mubr.bf16.mxu0 %v220
    %611 = vmatmul.mubr.bf16.gmra.mrb[0].mxu0 %v219
    %v612 = vpop.f32.mrb[0].mxu0
    %v613 = vadd.f32 %v281, %v612
    %v614 = vpop.f32.mrb[0].mxu0
    %v615 = vadd.f32 %v285, %v614
    %v616 = vpop.f32.mrb[0].mxu0
    %v617 = vadd.f32 %v281, %v616
    %v618 = vpop.f32.mrb[0].mxu0
    %v619 = vadd.f32 %v285, %v618
    %620 = vmatprep.mubr.bf16.mxu0 %v223
    %621 = vmatmul.mubr.bf16.gmra.mrb[0].mxu0 %v222
    %v622 = vpop.f32.mrb[0].mxu0
    %v623 = vadd.f32 %v281, %v622
    %v624 = vpop.f32.mrb[0].mxu0
    %v625 = vadd.f32 %v285, %v624
    %v626 = vpop.f32.mrb[0].mxu0
    %v627 = vadd.f32 %v281, %v626
    %v628 = vpop.f32.mrb[0].mxu0
    %v629 = vadd.f32 %v285, %v628
    %630 = vmatprep.mubr.bf16.mxu0 %v226
    %631 = vmatmul.mubr.bf16.gmra.mrb[0].mxu0 %v225
    %v632 = vpop.f32.mrb[0].mxu0
    %v633 = vadd.f32 %v281, %v632
    %v634 = vpop.f32.mrb[0].mxu0
    %v635 = vadd.f32 %v285, %v634
    %v636 = vpop.f32.mrb[0].mxu0
    %v637 = vadd.f32 %v281, %v636
    %v638 = vpop.f32.mrb[0].mxu0
    %v639 = vadd.f32 %v285, %v638
    %640 = vdwg.mxu0
    %641 = vmatprep.subr.bf16.mxu0 %v465
    %642 = vmatpush1.bf16.msra.mxu0 %v464
    %643 = vmatprep.subr.bf16.mxu0 %v467
    %644 = vmatpush1.bf16.msra.mxu0 %v466
    %645 = vmatprep.subr.bf16.mxu0 %v469
    %646 = vmatpush1.bf16.msra.mxu0 %v468
    %647 = vmatprep.subr.bf16.mxu0 %v471
    %648 = vmatpush1.bf16.msra.mxu0 %v470
    %649 = vmatprep.subr.bf16.mxu0 %v473
    %650 = vmatpush1.bf16.msra.mxu0 %v472
    %651 = vmatprep.subr.bf16.mxu0 %v475
    %652 = vmatpush1.bf16.msra.mxu0 %v474
    %653 = vmatprep.subr.bf16.mxu0 %v477
    %654 = vmatpush1.bf16.msra.mxu0 %v476
    %655 = vmatprep.subr.bf16.mxu0 %v479
    %656 = vmatpush1.bf16.msra.mxu0 %v478
    %657 = vmatprep.subr.bf16.mxu0 0
    %658 = vmatpush1.bf16.msra.mxu0 0
    %659 = vmatprep.subr.bf16.mxu0 0
    %660 = vmatpush1.bf16.msra.mxu0 0
    %661 = vmatprep.subr.bf16.mxu0 0
    %662 = vmatpush1.bf16.msra.mxu0 0
    %663 = vmatprep.subr.bf16.mxu0 0
    %664 = vmatpush1.bf16.msra.mxu0 0
    %665 = vmatprep.subr.bf16.mxu0 0
    %666 = vmatpush1.bf16.msra.mxu0 0
    %667 = vmatprep.subr.bf16.mxu0 0
    %668 = vmatpush1.bf16.msra.mxu0 0
    %669 = vmatprep.subr.bf16.mxu0 0
    %670 = vmatpush1.bf16.msra.mxu0 0
    %671 = vmatprep.subr.bf16.mxu0 0
    %672 = vmatpush1.bf16.msra.mxu0 0
    %673 = vmatprep.mubr.bf16.mxu0 0
    %674 = vmatmul.mubr.bf16.gmra.mrb[0].mxu0 %v206
    %v675 = vpop.f32.mrb[0].mxu0
    %v676 = vadd.f32 %v563, %v675
    %v677 = vpop.f32.mrb[0].mxu0
    %v678 = vadd.f32 %v565, %v677
    %v679 = vpop.f32.mrb[0].mxu0
    %v680 = vadd.f32 %v567, %v679
    %v681 = vpop.f32.mrb[0].mxu0
    %v682 = vadd.f32 %v569, %v681
    %683 = vmatprep.mubr.bf16.mxu0 0
    %684 = vmatmul.mubr.bf16.gmra.mrb[0].mxu0 %v209
    %v685 = vpop.f32.mrb[0].mxu0
    %v686 = vadd.f32 %v573, %v685
    %v687 = vpop.f32.mrb[0].mxu0
    %v688 = vadd.f32 %v575, %v687
    %v689 = vpop.f32.mrb[0].mxu0
    %v690 = vadd.f32 %v577, %v689
    %v691 = vpop.f32.mrb[0].mxu0
    %v692 = vadd.f32 %v579, %v691
    %693 = vmatprep.mubr.bf16.mxu0 0
    %694 = vmatmul.mubr.bf16.gmra.mrb[0].mxu0 %v212
    %v695 = vpop.f32.mrb[0].mxu0
    %v696 = vadd.f32 %v583, %v695
    %v697 = vpop.f32.mrb[0].mxu0
    %v698 = vadd.f32 %v585, %v697
    %v699 = vpop.f32.mrb[0].mxu0
    %v700 = vadd.f32 %v587, %v699
    %v701 = vpop.f32.mrb[0].mxu0
    %v702 = vadd.f32 %v589, %v701
    %703 = vmatprep.mubr.bf16.mxu0 0
    %704 = vmatmul.mubr.bf16.gmra.mrb[0].mxu0 %v215
    %v705 = vpop.f32.mrb[0].mxu0
    %v706 = vadd.f32 %v593, %v705
    %v707 = vpop.f32.mrb[0].mxu0
    %v708 = vadd.f32 %v595, %v707
    %v709 = vpop.f32.mrb[0].mxu0
    %v710 = vadd.f32 %v597, %v709
    %v711 = vpop.f32.mrb[0].mxu0
    %v712 = vadd.f32 %v599, %v711
    %713 = vmatprep.mubr.bf16.mxu0 0
    %714 = vmatmul.mubr.bf16.gmra.mrb[0].mxu0 %v218
    %v715 = vpop.f32.mrb[0].mxu0
    %v716 = vadd.f32 %v603, %v715
    %v717 = vpop.f32.mrb[0].mxu0
    %v718 = vadd.f32 %v605, %v717
    %v719 = vpop.f32.mrb[0].mxu0
    %v720 = vadd.f32 %v607, %v719
    %v721 = vpop.f32.mrb[0].mxu0
    %v722 = vadd.f32 %v609, %v721
    %723 = vmatprep.mubr.bf16.mxu0 0
    %724 = vmatmul.mubr.bf16.gmra.mrb[0].mxu0 %v221
    %v725 = vpop.f32.mrb[0].mxu0
    %v726 = vadd.f32 %v613, %v725
    %v727 = vpop.f32.mrb[0].mxu0
    %v728 = vadd.f32 %v615, %v727
    %v729 = vpop.f32.mrb[0].mxu0
    %v730 = vadd.f32 %v617, %v729
    %v731 = vpop.f32.mrb[0].mxu0
    %v732 = vadd.f32 %v619, %v731
    %733 = vmatprep.mubr.bf16.mxu0 0
    %734 = vmatmul.mubr.bf16.gmra.mrb[0].mxu0 %v224
    %v735 = vpop.f32.mrb[0].mxu0
    %v736 = vadd.f32 %v623, %v735
    %v737 = vpop.f32.mrb[0].mxu0
    %v738 = vadd.f32 %v625, %v737
    %v739 = vpop.f32.mrb[0].mxu0
    %v740 = vadd.f32 %v627, %v739
    %v741 = vpop.f32.mrb[0].mxu0
    %v742 = vadd.f32 %v629, %v741
    %743 = vmatprep.mubr.bf16.mxu0 0
    %744 = vmatmul.mubr.bf16.gmra.mrb[0].mxu0 %v227
    %v745 = vpop.f32.mrb[0].mxu0
    %v746 = vadd.f32 %v633, %v745
    %v747 = vpop.f32.mrb[0].mxu0
    %v748 = vadd.f32 %v635, %v747
    %v749 = vpop.f32.mrb[0].mxu0
    %v750 = vadd.f32 %v637, %v749
    %v751 = vpop.f32.mrb[0].mxu0
    %v752 = vadd.f32 %v639, %v751
    %753 = vdwg.mxu0
    %v754 = vmax.f32 %v676, 0.0
    %v755 = vmax.f32 %v678, 0.0
    %v756 = vmax.f32 %v680, 0.0
    %v757 = vmax.f32 %v682, 0.0
    %v758 = vmax.f32 %v686, 0.0
    %v759 = vmax.f32 %v688, 0.0
    %v760 = vmax.f32 %v690, 0.0
    %v761 = vmax.f32 %v692, 0.0
    %v762 = vmax.f32 %v696, 0.0
    %v763 = vmax.f32 %v698, 0.0
    %v764 = vmax.f32 %v700, 0.0
    %v765 = vmax.f32 %v702, 0.0
    %v766 = vmax.f32 %v706, 0.0
    %v767 = vmax.f32 %v708, 0.0
    %v768 = vmax.f32 %v710, 0.0
    %v769 = vmax.f32 %v712, 0.0
    %v770 = vmax.f32 %v716, 0.0
    %v771 = vmax.f32 %v718, 0.0
    %v772 = vmax.f32 %v720, 0.0
    %v773 = vmax.f32 %v722, 0.0
    %v774 = vmax.f32 %v726, 0.0
    %v775 = vmax.f32 %v728, 0.0
    %v776 = vmax.f32 %v730, 0.0
    %v777 = vmax.f32 %v732, 0.0
    %v778 = vmax.f32 %v736, 0.0
    %v779 = vmax.f32 %v738, 0.0
    %v780 = vmax.f32 %v740, 0.0
    %v781 = vmax.f32 %v742, 0.0
    %v782 = vmax.f32 %v746, 0.0
    %v783 = vmax.f32 %v748, 0.0
    %v784 = vmax.f32 %v750, 0.0
    %v785 = vmax.f32 %v752, 0.0
    %v786 = vpack.c.bf16 %v756, %v754
    %v787 = vpack.c.bf16 %v757, %v755
    %v788 = vpack.c.bf16 %v760, %v758
    %v789 = vpack.c.bf16 %v761, %v759
    %v790 = vpack.c.bf16 %v764, %v762
    %v791 = vpack.c.bf16 %v765, %v763
    %v792 = vpack.c.bf16 %v768, %v766
    %v793 = vpack.c.bf16 %v769, %v767
    %v794 = vpack.c.bf16 %v772, %v770
    %v795 = vpack.c.bf16 %v773, %v771
    %v796 = vpack.c.bf16 %v776, %v774
    %v797 = vpack.c.bf16 %v777, %v775
    %v798 = vpack.c.bf16 %v780, %v778
    %v799 = vpack.c.bf16 %v781, %v779
    %v800 = vpack.c.bf16 %v784, %v782
    %v801 = vpack.c.bf16 %v785, %v783
    %v802 = vld [vmem:[#allocation9] sm:$0xff]
    %v803 = vld [vmem:[#allocation9 + $0x8] sm:$0xf]
    %v804 = vld [vmem:[#allocation9 + $0xc] sm:$0xff]
    %v805 = vld [vmem:[#allocation9 + $0x14] sm:$0xf]
    %v806 = vld [vmem:[#allocation9 + $0x18] sm:$0xff]
    %v807 = vld [vmem:[#allocation9 + $0x20] sm:$0xf]
    %v808 = vld [vmem:[#allocation9 + $0x24] sm:$0xff]
    %v809 = vld [vmem:[#allocation9 + $0x2c] sm:$0xf]
    %v810 = vld [vmem:[#allocation9 + $0x30] sm:$0xff]
    %v811 = vld [vmem:[#allocation9 + $0x38] sm:$0xf]
    %v812 = vld [vmem:[#allocation9 + $0x3c] sm:$0xff]
    %v813 = vld [vmem:[#allocation9 + $0x44] sm:$0xf]
    %v814 = vld [vmem:[#allocation9 + $0x48] sm:$0xff]
    %v815 = vld [vmem:[#allocation9 + $0x50] sm:$0xf]
    %v816 = vld [vmem:[#allocation9 + $0x54] sm:$0xff]
    %v817 = vld [vmem:[#allocation9 + $0x5c] sm:$0xf]
    %v818 = vld [vmem:[#allocation9 + $0x60] sm:$0xff]
    %v819 = vld [vmem:[#allocation9 + $0x68] sm:$0xf]
    %v820 = vld [vmem:[#allocation9 + $0x6c] sm:$0xff]
    %v821 = vld [vmem:[#allocation9 + $0x74] sm:$0xf]
    %v822 = vld [vmem:[#allocation9 + $0x78] sm:$0xff]
    %v823 = vld [vmem:[#allocation9 + $0x80] sm:$0xf]
    %v824 = vld [vmem:[#allocation9 + $0x84] sm:$0xff]
    %v825 = vld [vmem:[#allocation9 + $0x8c] sm:$0xf]
    %v826 = vld [vmem:[#allocation9 + $0x90] sm:$0xff]
    %v827 = vld [vmem:[#allocation9 + $0x98] sm:$0xf]
    %v828 = vld [vmem:[#allocation9 + $0x9c] sm:$0xff]
    %v829 = vld [vmem:[#allocation9 + $0xa4] sm:$0xf]
    %v830 = vld [vmem:[#allocation9 + $0xa8] sm:$0xff]
    %v831 = vld [vmem:[#allocation9 + $0xb0] sm:$0xf]
    %v832 = vld [vmem:[#allocation9 + $0xb4] sm:$0xff]
    %v833 = vld [vmem:[#allocation9 + $0xbc] sm:$0xf]
    %v834 = vld [vmem:[#allocation9 + $0xc0] sm:$0xff]
    %v835 = vld [vmem:[#allocation9 + $0xc8] sm:$0xf]
    %v836 = vld [vmem:[#allocation9 + $0xcc] sm:$0xff]
    %v837 = vld [vmem:[#allocation9 + $0xd4] sm:$0xf]
    %v838 = vld [vmem:[#allocation9 + $0xd8] sm:$0xff]
    %v839 = vld [vmem:[#allocation9 + $0xe0] sm:$0xf]
    %v840 = vld [vmem:[#allocation9 + $0xe4] sm:$0xff]
    %v841 = vld [vmem:[#allocation9 + $0xec] sm:$0xf]
    %v842 = vld [vmem:[#allocation9 + $0xf0] sm:$0xff]
    %v843 = vld [vmem:[#allocation9 + $0xf8] sm:$0xf]
    %v844 = vld [vmem:[#allocation9 + $0xfc] sm:$0xff]
    %v845 = vld [vmem:[#allocation9 + $0x104] sm:$0xf]
    %v846 = vld [vmem:[#allocation9 + $0x108] sm:$0xff]
    %v847 = vld [vmem:[#allocation9 + $0x110] sm:$0xf]
    %v848 = vld [vmem:[#allocation9 + $0x114] sm:$0xff]
    %v849 = vld [vmem:[#allocation9 + $0x11c] sm:$0xf]
    %v850 = vld [vmem:[#allocation9 + $0x120] sm:$0xff]
    %v851 = vld [vmem:[#allocation9 + $0x128] sm:$0xf]
    %v852 = vld [vmem:[#allocation9 + $0x12c] sm:$0xff]
    %v853 = vld [vmem:[#allocation9 + $0x134] sm:$0xf]
    %v854 = vld [vmem:[#allocation9 + $0x138] sm:$0xff]
    %v855 = vld [vmem:[#allocation9 + $0x140] sm:$0xf]
    %v856 = vld [vmem:[#allocation9 + $0x144] sm:$0xff]
    %v857 = vld [vmem:[#allocation9 + $0x14c] sm:$0xf]
    %v858 = vld [vmem:[#allocation9 + $0x150] sm:$0xff]
    %v859 = vld [vmem:[#allocation9 + $0x158] sm:$0xf]
    %v860 = vld [vmem:[#allocation9 + $0x15c] sm:$0xff]
    %v861 = vld [vmem:[#allocation9 + $0x164] sm:$0xf]
    %v862 = vld [vmem:[#allocation9 + $0x168] sm:$0xff]
    %v863 = vld [vmem:[#allocation9 + $0x170] sm:$0xf]
    %v864 = vld [vmem:[#allocation9 + $0x174] sm:$0xff]
    %v865 = vld [vmem:[#allocation9 + $0x17c] sm:$0xf]
    %v866 = vld [vmem:[%s4] sm:$0x7]
    %v868 = vlaneseq
    %v869 = vshrl.u32 %v868, 7
    %v870 = vsub.s32 0, %v869
    %v871 = vrot.slane %v866, %v870
    %v872 = vlaneseq
    %v873 = vshrl.u32 %v872, 7
    %v874 = vsub.s32 1, %v873
    %v875 = vrot.slane %v866, %v874
    %v876 = vlaneseq
    %v877 = vshrl.u32 %v876, 7
    %v878 = vsub.s32 2, %v877
    %v879 = vrot.slane %v866, %v878
    %v947 = vunpack.c.l.b16 %v802
    %v948 = vunpack.c.h.b16 %v802
    %v949 = vunpack.c.l.b16 %v803
    %v950 = vunpack.c.l.b16 %v804
    %v951 = vunpack.c.h.b16 %v804
    %v952 = vunpack.c.l.b16 %v805
    %v953 = vunpack.c.l.b16 %v806
    %v954 = vunpack.c.h.b16 %v806
    %v955 = vunpack.c.l.b16 %v807
    %v956 = vunpack.c.l.b16 %v808
    %v957 = vunpack.c.h.b16 %v808
    %v958 = vunpack.c.l.b16 %v809
    %v959 = vunpack.c.l.b16 %v810
    %v960 = vunpack.c.h.b16 %v810
    %v961 = vunpack.c.l.b16 %v811
    %v962 = vunpack.c.l.b16 %v812
    %v963 = vunpack.c.h.b16 %v812
    %v964 = vunpack.c.l.b16 %v813
    %v965 = vunpack.c.l.b16 %v814
    %v966 = vunpack.c.h.b16 %v814
    %v967 = vunpack.c.l.b16 %v815
    %v968 = vunpack.c.l.b16 %v816
    %v969 = vunpack.c.h.b16 %v816
    %v970 = vunpack.c.l.b16 %v817
    %v971 = vunpack.c.l.b16 %v818
    %v972 = vunpack.c.h.b16 %v818
    %v973 = vunpack.c.l.b16 %v819
    %v974 = vunpack.c.l.b16 %v820
    %v975 = vunpack.c.h.b16 %v820
    %v976 = vunpack.c.l.b16 %v821
    %v977 = vunpack.c.l.b16 %v822
    %v978 = vunpack.c.h.b16 %v822
    %v979 = vunpack.c.l.b16 %v823
    %v980 = vunpack.c.l.b16 %v824
    %v981 = vunpack.c.h.b16 %v824
    %v982 = vunpack.c.l.b16 %v825
    %v983 = vunpack.c.l.b16 %v826
    %v984 = vunpack.c.h.b16 %v826
    %v985 = vunpack.c.l.b16 %v827
    %v986 = vunpack.c.l.b16 %v828
    %v987 = vunpack.c.h.b16 %v828
    %v988 = vunpack.c.l.b16 %v829
    %v989 = vunpack.c.l.b16 %v830
    %v990 = vunpack.c.h.b16 %v830
    %v991 = vunpack.c.l.b16 %v831
    %v992 = vunpack.c.l.b16 %v832
    %v993 = vunpack.c.h.b16 %v832
    %v994 = vunpack.c.l.b16 %v833
    %v995 = vunpack.c.l.b16 %v834
    %v996 = vunpack.c.h.b16 %v834
    %v997 = vunpack.c.l.b16 %v835
    %v998 = vunpack.c.l.b16 %v836
    %v999 = vunpack.c.h.b16 %v836
    %v1000 = vunpack.c.l.b16 %v837
    %v1001 = vunpack.c.l.b16 %v838
    %v1002 = vunpack.c.h.b16 %v838
    %v1003 = vunpack.c.l.b16 %v839
    %v1004 = vunpack.c.l.b16 %v840
    %v1005 = vunpack.c.h.b16 %v840
    %v1006 = vunpack.c.l.b16 %v841
    %v1007 = vunpack.c.l.b16 %v842
    %v1008 = vunpack.c.h.b16 %v842
    %v1009 = vunpack.c.l.b16 %v843
    %v1010 = vunpack.c.l.b16 %v844
    %v1011 = vunpack.c.h.b16 %v844
    %v1012 = vunpack.c.l.b16 %v845
    %v1013 = vunpack.c.l.b16 %v846
    %v1014 = vunpack.c.h.b16 %v846
    %v1015 = vunpack.c.l.b16 %v847
    %v1016 = vunpack.c.l.b16 %v848
    %v1017 = vunpack.c.h.b16 %v848
    %v1018 = vunpack.c.l.b16 %v849
    %v1019 = vunpack.c.l.b16 %v850
    %v1020 = vunpack.c.h.b16 %v850
    %v1021 = vunpack.c.l.b16 %v851
    %v1022 = vunpack.c.l.b16 %v852
    %v1023 = vunpack.c.h.b16 %v852
    %v1024 = vunpack.c.l.b16 %v853
    %v1025 = vunpack.c.l.b16 %v854
    %v1026 = vunpack.c.h.b16 %v854
    %v1027 = vunpack.c.l.b16 %v855
    %v1028 = vunpack.c.l.b16 %v856
    %v1029 = vunpack.c.h.b16 %v856
    %v1030 = vunpack.c.l.b16 %v857
    %v1031 = vunpack.c.l.b16 %v858
    %v1032 = vunpack.c.h.b16 %v858
    %v1033 = vunpack.c.l.b16 %v859
    %v1034 = vunpack.c.l.b16 %v860
    %v1035 = vunpack.c.h.b16 %v860
    %v1036 = vunpack.c.l.b16 %v861
    %v1037 = vunpack.c.l.b16 %v862
    %v1038 = vunpack.c.h.b16 %v862
    %v1039 = vunpack.c.l.b16 %v863
    %v1040 = vunpack.c.l.b16 %v864
    %v1041 = vunpack.c.h.b16 %v864
    %v1042 = vunpack.c.l.b16 %v865
    %v1043 = vpack.c.b16 %v950, %v947
    %v1044 = vpack.c.b16 %v951, %v948
    %v1045 = vpack.c.b16 %v952, %v949
    %v1046 = vpack.c.b16 %v956, %v953
    %v1047 = vpack.c.b16 %v957, %v954
    %v1048 = vpack.c.b16 %v958, %v955
    %v1049 = vpack.c.b16 %v962, %v959
    %v1050 = vpack.c.b16 %v963, %v960
    %v1051 = vpack.c.b16 %v964, %v961
    %v1052 = vpack.c.b16 %v968, %v965
    %v1053 = vpack.c.b16 %v969, %v966
    %v1054 = vpack.c.b16 %v970, %v967
    %v1055 = vpack.c.b16 %v974, %v971
    %v1056 = vpack.c.b16 %v975, %v972
    %v1057 = vpack.c.b16 %v976, %v973
    %v1058 = vpack.c.b16 %v980, %v977
    %v1059 = vpack.c.b16 %v981, %v978
    %v1060 = vpack.c.b16 %v982, %v979
    %v1061 = vpack.c.b16 %v986, %v983
    %v1062 = vpack.c.b16 %v987, %v984
    %v1063 = vpack.c.b16 %v988, %v985
    %v1064 = vpack.c.b16 %v992, %v989
    %v1065 = vpack.c.b16 %v993, %v990
    %v1066 = vpack.c.b16 %v994, %v991
    %v1067 = vpack.c.b16 %v998, %v995
    %v1068 = vpack.c.b16 %v999, %v996
    %v1069 = vpack.c.b16 %v1000, %v997
    %v1070 = vpack.c.b16 %v1004, %v1001
    %v1071 = vpack.c.b16 %v1005, %v1002
    %v1072 = vpack.c.b16 %v1006, %v1003
    %v1073 = vpack.c.b16 %v1010, %v1007
    %v1074 = vpack.c.b16 %v1011, %v1008
    %v1075 = vpack.c.b16 %v1012, %v1009
    %v1076 = vpack.c.b16 %v1016, %v1013
    %v1077 = vpack.c.b16 %v1017, %v1014
    %v1078 = vpack.c.b16 %v1018, %v1015
    %v1079 = vpack.c.b16 %v1022, %v1019
    %v1080 = vpack.c.b16 %v1023, %v1020
    %v1081 = vpack.c.b16 %v1024, %v1021
    %v1082 = vpack.c.b16 %v1028, %v1025
    %v1083 = vpack.c.b16 %v1029, %v1026
    %v1084 = vpack.c.b16 %v1030, %v1027
    %v1085 = vpack.c.b16 %v1034, %v1031
    %v1086 = vpack.c.b16 %v1035, %v1032
    %v1087 = vpack.c.b16 %v1036, %v1033
    %v1088 = vpack.c.b16 %v1040, %v1037
    %v1089 = vpack.c.b16 %v1041, %v1038
    %v1090 = vpack.c.b16 %v1042, %v1039
    %1139 = vmatprep.subr.bf16.mxu0 %v1044
    %1140 = vmatpush1.bf16.msra.mxu0 %v1043
    %1141 = vmatprep.subr.bf16.mxu0 %v1047
    %1142 = vmatpush1.bf16.msra.mxu0 %v1046
    %1143 = vmatprep.subr.bf16.mxu0 %v1050
    %1144 = vmatpush1.bf16.msra.mxu0 %v1049
    %1145 = vmatprep.subr.bf16.mxu0 %v1053
    %1146 = vmatpush1.bf16.msra.mxu0 %v1052
    %1147 = vmatprep.subr.bf16.mxu0 %v1056
    %1148 = vmatpush1.bf16.msra.mxu0 %v1055
    %1149 = vmatprep.subr.bf16.mxu0 %v1059
    %1150 = vmatpush1.bf16.msra.mxu0 %v1058
    %1151 = vmatprep.subr.bf16.mxu0 %v1062
    %1152 = vmatpush1.bf16.msra.mxu0 %v1061
    %1153 = vmatprep.subr.bf16.mxu0 %v1065
    %1154 = vmatpush1.bf16.msra.mxu0 %v1064
    %1155 = vmatprep.subr.bf16.mxu0 %v1068
    %1156 = vmatpush1.bf16.msra.mxu0 %v1067
    %1157 = vmatprep.subr.bf16.mxu0 %v1071
    %1158 = vmatpush1.bf16.msra.mxu0 %v1070
    %1159 = vmatprep.subr.bf16.mxu0 %v1074
    %1160 = vmatpush1.bf16.msra.mxu0 %v1073
    %1161 = vmatprep.subr.bf16.mxu0 %v1077
    %1162 = vmatpush1.bf16.msra.mxu0 %v1076
    %1163 = vmatprep.subr.bf16.mxu0 %v1080
    %1164 = vmatpush1.bf16.msra.mxu0 %v1079
    %1165 = vmatprep.subr.bf16.mxu0 %v1083
    %1166 = vmatpush1.bf16.msra.mxu0 %v1082
    %1167 = vmatprep.subr.bf16.mxu0 %v1086
    %1168 = vmatpush1.bf16.msra.mxu0 %v1085
    %1169 = vmatprep.subr.bf16.mxu0 %v1089
    %1170 = vmatpush1.bf16.msra.mxu0 %v1088
    %1171 = vmatprep.mubr.bf16.mxu0 %v787
    %1172 = vmatmul.mubr.bf16.gmra.mrb[0].mxu0 %v786
    %v1173 = vpop.f32.mrb[0].mxu0
    %v1174 = vadd.f32 %v871, %v1173
    %v1175 = vpop.f32.mrb[0].mxu0
    %v1176 = vadd.f32 %v875, %v1175
    %v1177 = vpop.f32.mrb[0].mxu0
    %v1178 = vadd.f32 %v871, %v1177
    %v1179 = vpop.f32.mrb[0].mxu0
    %v1180 = vadd.f32 %v875, %v1179
    %1181 = vmatprep.mubr.bf16.mxu0 %v789
    %1182 = vmatmul.mubr.bf16.gmra.mrb[0].mxu0 %v788
    %v1183 = vpop.f32.mrb[0].mxu0
    %v1184 = vadd.f32 %v871, %v1183
    %v1185 = vpop.f32.mrb[0].mxu0
    %v1186 = vadd.f32 %v875, %v1185
    %v1187 = vpop.f32.mrb[0].mxu0
    %v1188 = vadd.f32 %v871, %v1187
    %v1189 = vpop.f32.mrb[0].mxu0
    %v1190 = vadd.f32 %v875, %v1189
    %1191 = vmatprep.mubr.bf16.mxu0 %v791
    %1192 = vmatmul.mubr.bf16.gmra.mrb[0].mxu0 %v790
    %v1193 = vpop.f32.mrb[0].mxu0
    %v1194 = vadd.f32 %v871, %v1193
    %v1195 = vpop.f32.mrb[0].mxu0
    %v1196 = vadd.f32 %v875, %v1195
    %v1197 = vpop.f32.mrb[0].mxu0
    %v1198 = vadd.f32 %v871, %v1197
    %v1199 = vpop.f32.mrb[0].mxu0
    %v1200 = vadd.f32 %v875, %v1199
    %1201 = vmatprep.mubr.bf16.mxu0 %v793
    %1202 = vmatmul.mubr.bf16.gmra.mrb[0].mxu0 %v792
    %v1203 = vpop.f32.mrb[0].mxu0
    %v1204 = vadd.f32 %v871, %v1203
    %v1205 = vpop.f32.mrb[0].mxu0
    %v1206 = vadd.f32 %v875, %v1205
    %v1207 = vpop.f32.mrb[0].mxu0
    %v1208 = vadd.f32 %v871, %v1207
    %v1209 = vpop.f32.mrb[0].mxu0
    %v1210 = vadd.f32 %v875, %v1209
    %1211 = vmatprep.mubr.bf16.mxu0 %v795
    %1212 = vmatmul.mubr.bf16.gmra.mrb[0].mxu0 %v794
    %v1213 = vpop.f32.mrb[0].mxu0
    %v1214 = vadd.f32 %v871, %v1213
    %v1215 = vpop.f32.mrb[0].mxu0
    %v1216 = vadd.f32 %v875, %v1215
    %v1217 = vpop.f32.mrb[0].mxu0
    %v1218 = vadd.f32 %v871, %v1217
    %v1219 = vpop.f32.mrb[0].mxu0
    %v1220 = vadd.f32 %v875, %v1219
    %1221 = vmatprep.mubr.bf16.mxu0 %v797
    %1222 = vmatmul.mubr.bf16.gmra.mrb[0].mxu0 %v796
    %v1223 = vpop.f32.mrb[0].mxu0
    %v1224 = vadd.f32 %v871, %v1223
    %v1225 = vpop.f32.mrb[0].mxu0
    %v1226 = vadd.f32 %v875, %v1225
    %v1227 = vpop.f32.mrb[0].mxu0
    %v1228 = vadd.f32 %v871, %v1227
    %v1229 = vpop.f32.mrb[0].mxu0
    %v1230 = vadd.f32 %v875, %v1229
    %1231 = vmatprep.mubr.bf16.mxu0 %v799
    %1232 = vmatmul.mubr.bf16.gmra.mrb[0].mxu0 %v798
    %v1233 = vpop.f32.mrb[0].mxu0
    %v1234 = vadd.f32 %v871, %v1233
    %v1235 = vpop.f32.mrb[0].mxu0
    %v1236 = vadd.f32 %v875, %v1235
    %v1237 = vpop.f32.mrb[0].mxu0
    %v1238 = vadd.f32 %v871, %v1237
    %v1239 = vpop.f32.mrb[0].mxu0
    %v1240 = vadd.f32 %v875, %v1239
    %1241 = vmatprep.mubr.bf16.mxu0 %v801
    %1242 = vmatmul.mubr.bf16.gmra.mrb[0].mxu0 %v800
    %v1243 = vpop.f32.mrb[0].mxu0
    %v1244 = vadd.f32 %v871, %v1243
    %v1245 = vpop.f32.mrb[0].mxu0
    %v1246 = vadd.f32 %v875, %v1245
    %v1247 = vpop.f32.mrb[0].mxu0
    %v1248 = vadd.f32 %v871, %v1247
    %v1249 = vpop.f32.mrb[0].mxu0
    %v1250 = vadd.f32 %v875, %v1249
    %1251 = vdwg.mxu0
    %1252 = vmatprep.subr.bf16.mxu0 0
    %1253 = vmatpush1.bf16.msra.mxu0 %v1045
    %1254 = vmatprep.subr.bf16.mxu0 0
    %1255 = vmatpush1.bf16.msra.mxu0 %v1048
    %1256 = vmatprep.subr.bf16.mxu0 0
    %1257 = vmatpush1.bf16.msra.mxu0 %v1051
    %1258 = vmatprep.subr.bf16.mxu0 0
    %1259 = vmatpush1.bf16.msra.mxu0 %v1054
    %1260 = vmatprep.subr.bf16.mxu0 0
    %1261 = vmatpush1.bf16.msra.mxu0 %v1057
    %1262 = vmatprep.subr.bf16.mxu0 0
    %1263 = vmatpush1.bf16.msra.mxu0 %v1060
    %1264 = vmatprep.subr.bf16.mxu0 0
    %1265 = vmatpush1.bf16.msra.mxu0 %v1063
    %1266 = vmatprep.subr.bf16.mxu0 0
    %1267 = vmatpush1.bf16.msra.mxu0 %v1066
    %1268 = vmatprep.subr.bf16.mxu0 0
    %1269 = vmatpush1.bf16.msra.mxu0 %v1069
    %1270 = vmatprep.subr.bf16.mxu0 0
    %1271 = vmatpush1.bf16.msra.mxu0 %v1072
    %1272 = vmatprep.subr.bf16.mxu0 0
    %1273 = vmatpush1.bf16.msra.mxu0 %v1075
    %1274 = vmatprep.subr.bf16.mxu0 0
    %1275 = vmatpush1.bf16.msra.mxu0 %v1078
    %1276 = vmatprep.subr.bf16.mxu0 0
    %1277 = vmatpush1.bf16.msra.mxu0 %v1081
    %1278 = vmatprep.subr.bf16.mxu0 0
    %1279 = vmatpush1.bf16.msra.mxu0 %v1084
    %1280 = vmatprep.subr.bf16.mxu0 0
    %1281 = vmatpush1.bf16.msra.mxu0 %v1087
    %1282 = vmatprep.subr.bf16.mxu0 0
    %1283 = vmatpush1.bf16.msra.mxu0 %v1090
    %1284 = vmatprep.mubr.bf16.mxu0 %v787
    %1285 = vmatmul.mubr.bf16.gmra.mrb[0].mxu0 %v786
    %v1286 = vpop.f32.mrb[0].mxu0
    %v1287 = vadd.f32 %v879, %v1286
    %v1288 = vpop.f32.mrb[0].mxu0
    %v1289 = vpop.f32.mrb[0].mxu0
    %v1290 = vadd.f32 %v879, %v1289
    %v1291 = vpop.f32.mrb[0].mxu0
    %1292 = vmatprep.mubr.bf16.mxu0 %v789
    %1293 = vmatmul.mubr.bf16.gmra.mrb[0].mxu0 %v788
    %v1294 = vpop.f32.mrb[0].mxu0
    %v1295 = vadd.f32 %v879, %v1294
    %v1296 = vpop.f32.mrb[0].mxu0
    %v1297 = vpop.f32.mrb[0].mxu0
    %v1298 = vadd.f32 %v879, %v1297
    %v1299 = vpop.f32.mrb[0].mxu0
    %1300 = vmatprep.mubr.bf16.mxu0 %v791
    %1301 = vmatmul.mubr.bf16.gmra.mrb[0].mxu0 %v790
    %v1302 = vpop.f32.mrb[0].mxu0
    %v1303 = vadd.f32 %v879, %v1302
    %v1304 = vpop.f32.mrb[0].mxu0
    %v1305 = vpop.f32.mrb[0].mxu0
    %v1306 = vadd.f32 %v879, %v1305
    %v1307 = vpop.f32.mrb[0].mxu0
    %1308 = vmatprep.mubr.bf16.mxu0 %v793
    %1309 = vmatmul.mubr.bf16.gmra.mrb[0].mxu0 %v792
    %v1310 = vpop.f32.mrb[0].mxu0
    %v1311 = vadd.f32 %v879, %v1310
    %v1312 = vpop.f32.mrb[0].mxu0
    %v1313 = vpop.f32.mrb[0].mxu0
    %v1314 = vadd.f32 %v879, %v1313
    %v1315 = vpop.f32.mrb[0].mxu0
    %1316 = vmatprep.mubr.bf16.mxu0 %v795
    %1317 = vmatmul.mubr.bf16.gmra.mrb[0].mxu0 %v794
    %v1318 = vpop.f32.mrb[0].mxu0
    %v1319 = vadd.f32 %v879, %v1318
    %v1320 = vpop.f32.mrb[0].mxu0
    %v1321 = vpop.f32.mrb[0].mxu0
    %v1322 = vadd.f32 %v879, %v1321
    %v1323 = vpop.f32.mrb[0].mxu0
    %1324 = vmatprep.mubr.bf16.mxu0 %v797
    %1325 = vmatmul.mubr.bf16.gmra.mrb[0].mxu0 %v796
    %v1326 = vpop.f32.mrb[0].mxu0
    %v1327 = vadd.f32 %v879, %v1326
    %v1328 = vpop.f32.mrb[0].mxu0
    %v1329 = vpop.f32.mrb[0].mxu0
    %v1330 = vadd.f32 %v879, %v1329
    %v1331 = vpop.f32.mrb[0].mxu0
    %1332 = vmatprep.mubr.bf16.mxu0 %v799
    %1333 = vmatmul.mubr.bf16.gmra.mrb[0].mxu0 %v798
    %v1334 = vpop.f32.mrb[0].mxu0
    %v1335 = vadd.f32 %v879, %v1334
    %v1336 = vpop.f32.mrb[0].mxu0
    %v1337 = vpop.f32.mrb[0].mxu0
    %v1338 = vadd.f32 %v879, %v1337
    %v1339 = vpop.f32.mrb[0].mxu0
    %1340 = vmatprep.mubr.bf16.mxu0 %v801
    %1341 = vmatmul.mubr.bf16.gmra.mrb[0].mxu0 %v800
    %v1342 = vpop.f32.mrb[0].mxu0
    %v1343 = vadd.f32 %v879, %v1342
    %v1344 = vpop.f32.mrb[0].mxu0
    %v1345 = vpop.f32.mrb[0].mxu0
    %v1346 = vadd.f32 %v879, %v1345
    %v1347 = vpop.f32.mrb[0].mxu0
    %1348 = vdwg.mxu0
    %s1349 = smul.u32 0, 128
    %v1350 = vlaneseq
    %v1351 = vshrl.u32 %v1350, 7
    %v1352 = vadd.s32 %v1351, 8
    %v1353 = vadd.s32 %v1351, 16
    %v1354 = vadd.s32 %v1351, 24
    %v1355 = vadd.s32 %v1351, 32
    %v1356 = vadd.s32 %v1351, 40
    %v1357 = vadd.s32 %v1351, 48
    %v1358 = vadd.s32 %v1351, 56
    %v1359 = vadd.s32 %v1351, 64
    %v1360 = vadd.s32 %v1351, 72
    %v1361 = vadd.s32 %v1351, 80
    %v1362 = vadd.s32 %v1351, 88
    %v1363 = vadd.s32 %v1351, 96
    %v1364 = vadd.s32 %v1351, 104
    %v1365 = vadd.s32 %v1351, 112
    %v1366 = vadd.s32 %v1351, 120
    %v1367 = vstv %s1349
    %v1368 = vadd.s32 %v1367, %v1351
    %v1369 = vadd.s32 %v1367, %v1352
    %v1370 = vadd.s32 %v1367, %v1353
    %v1371 = vadd.s32 %v1367, %v1354
    %v1372 = vadd.s32 %v1367, %v1355
    %v1373 = vadd.s32 %v1367, %v1356
    %v1374 = vadd.s32 %v1367, %v1357
    %v1375 = vadd.s32 %v1367, %v1358
    %v1376 = vadd.s32 %v1367, %v1359
    %v1377 = vadd.s32 %v1367, %v1360
    %v1378 = vadd.s32 %v1367, %v1361
    %v1379 = vadd.s32 %v1367, %v1362
    %v1380 = vadd.s32 %v1367, %v1363
    %v1381 = vadd.s32 %v1367, %v1364
    %v1382 = vadd.s32 %v1367, %v1365
    %v1383 = vadd.s32 %v1367, %v1366
    %vm1384 = vcmp.lt.s32.totalorder %v1368, 8
    %vm1385 = vcmp.lt.s32.totalorder %v1369, 8
    %vm1386 = vcmp.lt.s32.totalorder %v1370, 8
    %vm1387 = vcmp.lt.s32.totalorder %v1371, 8
    %vm1388 = vcmp.lt.s32.totalorder %v1372, 8
    %vm1389 = vcmp.lt.s32.totalorder %v1373, 8
    %vm1390 = vcmp.lt.s32.totalorder %v1374, 8
    %vm1391 = vcmp.lt.s32.totalorder %v1375, 8
    %vm1392 = vcmp.lt.s32.totalorder %v1376, 8
    %vm1393 = vcmp.lt.s32.totalorder %v1377, 8
    %vm1394 = vcmp.lt.s32.totalorder %v1378, 8
    %vm1395 = vcmp.lt.s32.totalorder %v1379, 8
    %vm1396 = vcmp.lt.s32.totalorder %v1380, 8
    %vm1397 = vcmp.lt.s32.totalorder %v1381, 8
    %vm1398 = vcmp.lt.s32.totalorder %v1382, 8
    %vm1399 = vcmp.lt.s32.totalorder %v1383, 8
    %v1400 = vsel %vm1384, 1, 0
    %v1401 = vsel %vm1385, 1, 0
    %v1402 = vsel %vm1386, 1, 0
    %v1403 = vsel %vm1387, 1, 0
    %v1404 = vsel %vm1388, 1, 0
    %v1405 = vsel %vm1389, 1, 0
    %v1406 = vsel %vm1390, 1, 0
    %v1407 = vsel %vm1391, 1, 0
    %v1408 = vsel %vm1392, 1, 0
    %v1409 = vsel %vm1393, 1, 0
    %v1410 = vsel %vm1394, 1, 0
    %v1411 = vsel %vm1395, 1, 0
    %v1412 = vsel %vm1396, 1, 0
    %v1413 = vsel %vm1397, 1, 0
    %v1414 = vsel %vm1398, 1, 0
    %v1415 = vsel %vm1399, 1, 0
    %v1416 = vcvt.s32.f32 %v1400
    %v1417 = vcvt.s32.f32 %v1401
    %v1418 = vcvt.s32.f32 %v1402
    %v1419 = vcvt.s32.f32 %v1403
    %v1420 = vcvt.s32.f32 %v1404
    %v1421 = vcvt.s32.f32 %v1405
    %v1422 = vcvt.s32.f32 %v1406
    %v1423 = vcvt.s32.f32 %v1407
    %v1424 = vcvt.s32.f32 %v1408
    %v1425 = vcvt.s32.f32 %v1409
    %v1426 = vcvt.s32.f32 %v1410
    %v1427 = vcvt.s32.f32 %v1411
    %v1428 = vcvt.s32.f32 %v1412
    %v1429 = vcvt.s32.f32 %v1413
    %v1430 = vcvt.s32.f32 %v1414
    %v1431 = vcvt.s32.f32 %v1415
    %v1432 = vld [vmem:[%s7] sm:$0x1]
    %v1433 = vpack.c.bf16 %v1178, %v1174
    %v1434 = vpack.c.bf16 %v1180, %v1176
    %v1435 = vpack.c.bf16 %v1290, %v1287
    %v1436 = vpack.c.bf16 %v1188, %v1184
    %v1437 = vpack.c.bf16 %v1190, %v1186
    %v1438 = vpack.c.bf16 %v1298, %v1295
    %v1439 = vpack.c.bf16 %v1198, %v1194
    %v1440 = vpack.c.bf16 %v1200, %v1196
    %v1441 = vpack.c.bf16 %v1306, %v1303
    %v1442 = vpack.c.bf16 %v1208, %v1204
    %v1443 = vpack.c.bf16 %v1210, %v1206
    %v1444 = vpack.c.bf16 %v1314, %v1311
    %v1445 = vpack.c.bf16 %v1218, %v1214
    %v1446 = vpack.c.bf16 %v1220, %v1216
    %v1447 = vpack.c.bf16 %v1322, %v1319
    %v1448 = vpack.c.bf16 %v1228, %v1224
    %v1449 = vpack.c.bf16 %v1230, %v1226
    %v1450 = vpack.c.bf16 %v1330, %v1327
    %v1451 = vpack.c.bf16 %v1238, %v1234
    %v1452 = vpack.c.bf16 %v1240, %v1236
    %v1453 = vpack.c.bf16 %v1338, %v1335
    %v1454 = vpack.c.bf16 %v1248, %v1244
    %v1455 = vpack.c.bf16 %v1250, %v1246
    %v1456 = vpack.c.bf16 %v1346, %v1343
    %v1457 = vld [vmem:[#allocation11] sm:$0xf]
    %v1458 = vld [vmem:[#allocation11 + $0x4] sm:$0xf]
    %v1459 = vld [vmem:[#allocation11 + $0x8] sm:$0xf]
    %v1460 = vld [vmem:[#allocation11 + $0xc] sm:$0xf]
    %v1461 = vld [vmem:[#allocation11 + $0x10] sm:$0xf]
    %v1462 = vld [vmem:[#allocation11 + $0x14] sm:$0xf]
    %v1463 = vld [vmem:[#allocation11 + $0x18] sm:$0xf]
    %v1464 = vld [vmem:[#allocation11 + $0x1c] sm:$0xf]
    %v1465 = vld [vmem:[#allocation11 + $0x20] sm:$0xf]
    %v1466 = vld [vmem:[#allocation11 + $0x24] sm:$0xf]
    %v1467 = vld [vmem:[#allocation11 + $0x28] sm:$0xf]
    %v1468 = vld [vmem:[#allocation11 + $0x2c] sm:$0xf]
    %v1469 = vld [vmem:[#allocation11 + $0x30] sm:$0xf]
    %v1470 = vld [vmem:[#allocation11 + $0x34] sm:$0xf]
    %v1471 = vld [vmem:[#allocation11 + $0x38] sm:$0xf]
    %v1472 = vld [vmem:[#allocation11 + $0x3c] sm:$0xf]
    %v1473 = vld [vmem:[#allocation11 + $0x40] sm:$0xf]
    %v1474 = vld [vmem:[#allocation11 + $0x44] sm:$0xf]
    %v1475 = vld [vmem:[#allocation11 + $0x48] sm:$0xf]
    %v1476 = vld [vmem:[#allocation11 + $0x4c] sm:$0xf]
    %v1477 = vld [vmem:[#allocation11 + $0x50] sm:$0xf]
    %v1478 = vld [vmem:[#allocation11 + $0x54] sm:$0xf]
    %v1479 = vld [vmem:[#allocation11 + $0x58] sm:$0xf]
    %v1480 = vld [vmem:[#allocation11 + $0x5c] sm:$0xf]
    %v1481 = vld [vmem:[#allocation11 + $0x60] sm:$0xf]
    %v1482 = vld [vmem:[#allocation11 + $0x64] sm:$0xf]
    %v1483 = vld [vmem:[#allocation11 + $0x68] sm:$0xf]
    %v1484 = vld [vmem:[#allocation11 + $0x6c] sm:$0xf]
    %v1485 = vld [vmem:[#allocation11 + $0x70] sm:$0xf]
    %v1486 = vld [vmem:[#allocation11 + $0x74] sm:$0xf]
    %v1487 = vld [vmem:[#allocation11 + $0x78] sm:$0xf]
    %v1488 = vld [vmem:[#allocation11 + $0x7c] sm:$0xf]
    %v1489 = vld [vmem:[#allocation11 + $0x80] sm:$0xf]
    %v1490 = vld [vmem:[#allocation11 + $0x84] sm:$0xf]
    %v1491 = vld [vmem:[#allocation11 + $0x88] sm:$0xf]
    %v1492 = vld [vmem:[#allocation11 + $0x8c] sm:$0xf]
    %v1493 = vld [vmem:[#allocation11 + $0x90] sm:$0xf]
    %v1494 = vld [vmem:[#allocation11 + $0x94] sm:$0xf]
    %v1495 = vld [vmem:[#allocation11 + $0x98] sm:$0xf]
    %v1496 = vld [vmem:[#allocation11 + $0x9c] sm:$0xf]
    %v1497 = vld [vmem:[#allocation11 + $0xa0] sm:$0xf]
    %v1498 = vld [vmem:[#allocation11 + $0xa4] sm:$0xf]
    %v1499 = vld [vmem:[#allocation11 + $0xa8] sm:$0xf]
    %v1500 = vld [vmem:[#allocation11 + $0xac] sm:$0xf]
    %v1501 = vld [vmem:[#allocation11 + $0xb0] sm:$0xf]
    %v1502 = vld [vmem:[#allocation11 + $0xb4] sm:$0xf]
    %v1503 = vld [vmem:[#allocation11 + $0xb8] sm:$0xf]
    %v1504 = vld [vmem:[#allocation11 + $0xbc] sm:$0xf]
    %v1553 = vunpack.c.l.b16 %v1457
    %v1554 = vunpack.c.l.b16 %v1458
    %v1555 = vunpack.c.l.b16 %v1459
    %v1556 = vunpack.c.l.b16 %v1460
    %v1557 = vunpack.c.l.b16 %v1461
    %v1558 = vunpack.c.l.b16 %v1462
    %v1559 = vunpack.c.l.b16 %v1463
    %v1560 = vunpack.c.l.b16 %v1464
    %v1561 = vunpack.c.l.b16 %v1465
    %v1562 = vunpack.c.l.b16 %v1466
    %v1563 = vunpack.c.l.b16 %v1467
    %v1564 = vunpack.c.l.b16 %v1468
    %v1565 = vunpack.c.l.b16 %v1469
    %v1566 = vunpack.c.l.b16 %v1470
    %v1567 = vunpack.c.l.b16 %v1471
    %v1568 = vunpack.c.l.b16 %v1472
    %v1569 = vunpack.c.l.b16 %v1473
    %v1570 = vunpack.c.l.b16 %v1474
    %v1571 = vunpack.c.l.b16 %v1475
    %v1572 = vunpack.c.l.b16 %v1476
    %v1573 = vunpack.c.l.b16 %v1477
    %v1574 = vunpack.c.l.b16 %v1478
    %v1575 = vunpack.c.l.b16 %v1479
    %v1576 = vunpack.c.l.b16 %v1480
    %v1577 = vunpack.c.l.b16 %v1481
    %v1578 = vunpack.c.l.b16 %v1482
    %v1579 = vunpack.c.l.b16 %v1483
    %v1580 = vunpack.c.l.b16 %v1484
    %v1581 = vunpack.c.l.b16 %v1485
    %v1582 = vunpack.c.l.b16 %v1486
    %v1583 = vunpack.c.l.b16 %v1487
    %v1584 = vunpack.c.l.b16 %v1488
    %v1585 = vunpack.c.l.b16 %v1489
    %v1586 = vunpack.c.l.b16 %v1490
    %v1587 = vunpack.c.l.b16 %v1491
    %v1588 = vunpack.c.l.b16 %v1492
    %v1589 = vunpack.c.l.b16 %v1493
    %v1590 = vunpack.c.l.b16 %v1494
    %v1591 = vunpack.c.l.b16 %v1495
    %v1592 = vunpack.c.l.b16 %v1496
    %v1593 = vunpack.c.l.b16 %v1497
    %v1594 = vunpack.c.l.b16 %v1498
    %v1595 = vunpack.c.l.b16 %v1499
    %v1596 = vunpack.c.l.b16 %v1500
    %v1597 = vunpack.c.l.b16 %v1501
    %v1598 = vunpack.c.l.b16 %v1502
    %v1599 = vunpack.c.l.b16 %v1503
    %v1600 = vunpack.c.l.b16 %v1504
    %v1601 = vpack.c.b16 %v1554, %v1553
    %v1602 = vpack.c.b16 %v1556, %v1555
    %v1603 = vpack.c.b16 %v1558, %v1557
    %v1604 = vpack.c.b16 %v1560, %v1559
    %v1605 = vpack.c.b16 %v1562, %v1561
    %v1606 = vpack.c.b16 %v1564, %v1563
    %v1607 = vpack.c.b16 %v1566, %v1565
    %v1608 = vpack.c.b16 %v1568, %v1567
    %v1609 = vpack.c.b16 %v1570, %v1569
    %v1610 = vpack.c.b16 %v1572, %v1571
    %v1611 = vpack.c.b16 %v1574, %v1573
    %v1612 = vpack.c.b16 %v1576, %v1575
    %v1613 = vpack.c.b16 %v1578, %v1577
    %v1614 = vpack.c.b16 %v1580, %v1579
    %v1615 = vpack.c.b16 %v1582, %v1581
    %v1616 = vpack.c.b16 %v1584, %v1583
    %v1617 = vpack.c.b16 %v1586, %v1585
    %v1618 = vpack.c.b16 %v1588, %v1587
    %v1619 = vpack.c.b16 %v1590, %v1589
    %v1620 = vpack.c.b16 %v1592, %v1591
    %v1621 = vpack.c.b16 %v1594, %v1593
    %v1622 = vpack.c.b16 %v1596, %v1595
    %v1623 = vpack.c.b16 %v1598, %v1597
    %v1624 = vpack.c.b16 %v1600, %v1599
    %1649 = vmatprep.subr.bf16.mxu0 0
    %1650 = vmatpush1.bf16.msra.mxu0 %v1601
    %1651 = vmatprep.subr.bf16.mxu0 0
    %1652 = vmatpush1.bf16.msra.mxu0 %v1602
    %1653 = vmatprep.subr.bf16.mxu0 0
    %1654 = vmatpush1.bf16.msra.mxu0 %v1603
    %1655 = vmatprep.subr.bf16.mxu0 0
    %1656 = vmatpush1.bf16.msra.mxu0 %v1604
    %1657 = vmatprep.subr.bf16.mxu0 0
    %1658 = vmatpush1.bf16.msra.mxu0 %v1605
    %1659 = vmatprep.subr.bf16.mxu0 0
    %1660 = vmatpush1.bf16.msra.mxu0 %v1606
    %1661 = vmatprep.subr.bf16.mxu0 0
    %1662 = vmatpush1.bf16.msra.mxu0 %v1607
    %1663 = vmatprep.subr.bf16.mxu0 0
    %1664 = vmatpush1.bf16.msra.mxu0 %v1608
    %1665 = vmatprep.subr.bf16.mxu0 0
    %1666 = vmatpush1.bf16.msra.mxu0 %v1609
    %1667 = vmatprep.subr.bf16.mxu0 0
    %1668 = vmatpush1.bf16.msra.mxu0 %v1610
    %1669 = vmatprep.subr.bf16.mxu0 0
    %1670 = vmatpush1.bf16.msra.mxu0 %v1611
    %1671 = vmatprep.subr.bf16.mxu0 0
    %1672 = vmatpush1.bf16.msra.mxu0 %v1612
    %1673 = vmatprep.subr.bf16.mxu0 0
    %1674 = vmatpush1.bf16.msra.mxu0 %v1613
    %1675 = vmatprep.subr.bf16.mxu0 0
    %1676 = vmatpush1.bf16.msra.mxu0 %v1614
    %1677 = vmatprep.subr.bf16.mxu0 0
    %1678 = vmatpush1.bf16.msra.mxu0 %v1615
    %1679 = vmatprep.subr.bf16.mxu0 0
    %1680 = vmatpush1.bf16.msra.mxu0 %v1616
    %1681 = vmatprep.mubr.bf16.mxu0 %v1434
    %1682 = vmatmul.mubr.bf16.gmra.mrb[0].mxu0 %v1433
    %v1683 = vpop.f32.mrb[0].mxu0
    %v1684 = vadd.f32 0.0, %v1683
    %v1685 = vpop.f32.mrb[0].mxu0
    %v1686 = vpop.f32.mrb[0].mxu0
    %v1687 = vadd.f32 0.0, %v1686
    %v1688 = vpop.f32.mrb[0].mxu0
    %1689 = vmatprep.mubr.bf16.mxu0 %v1437
    %1690 = vmatmul.mubr.bf16.gmra.mrb[0].mxu0 %v1436
    %v1691 = vpop.f32.mrb[0].mxu0
    %v1692 = vadd.f32 0.0, %v1691
    %v1693 = vpop.f32.mrb[0].mxu0
    %v1694 = vpop.f32.mrb[0].mxu0
    %v1695 = vadd.f32 0.0, %v1694
    %v1696 = vpop.f32.mrb[0].mxu0
    %1697 = vmatprep.mubr.bf16.mxu0 %v1440
    %1698 = vmatmul.mubr.bf16.gmra.mrb[0].mxu0 %v1439
    %v1699 = vpop.f32.mrb[0].mxu0
    %v1700 = vadd.f32 0.0, %v1699
    %v1701 = vpop.f32.mrb[0].mxu0
    %v1702 = vpop.f32.mrb[0].mxu0
    %v1703 = vadd.f32 0.0, %v1702
    %v1704 = vpop.f32.mrb[0].mxu0
    %1705 = vmatprep.mubr.bf16.mxu0 %v1443
    %1706 = vmatmul.mubr.bf16.gmra.mrb[0].mxu0 %v1442
    %v1707 = vpop.f32.mrb[0].mxu0
    %v1708 = vadd.f32 0.0, %v1707
    %v1709 = vpop.f32.mrb[0].mxu0
    %v1710 = vpop.f32.mrb[0].mxu0
    %v1711 = vadd.f32 0.0, %v1710
    %v1712 = vpop.f32.mrb[0].mxu0
    %1713 = vmatprep.mubr.bf16.mxu0 %v1446
    %1714 = vmatmul.mubr.bf16.gmra.mrb[0].mxu0 %v1445
    %v1715 = vpop.f32.mrb[0].mxu0
    %v1716 = vadd.f32 0.0, %v1715
    %v1717 = vpop.f32.mrb[0].mxu0
    %v1718 = vpop.f32.mrb[0].mxu0
    %v1719 = vadd.f32 0.0, %v1718
    %v1720 = vpop.f32.mrb[0].mxu0
    %1721 = vmatprep.mubr.bf16.mxu0 %v1449
    %1722 = vmatmul.mubr.bf16.gmra.mrb[0].mxu0 %v1448
    %v1723 = vpop.f32.mrb[0].mxu0
    %v1724 = vadd.f32 0.0, %v1723
    %v1725 = vpop.f32.mrb[0].mxu0
    %v1726 = vpop.f32.mrb[0].mxu0
    %v1727 = vadd.f32 0.0, %v1726
    %v1728 = vpop.f32.mrb[0].mxu0
    %1729 = vmatprep.mubr.bf16.mxu0 %v1452
    %1730 = vmatmul.mubr.bf16.gmra.mrb[0].mxu0 %v1451
    %v1731 = vpop.f32.mrb[0].mxu0
    %v1732 = vadd.f32 0.0, %v1731
    %v1733 = vpop.f32.mrb[0].mxu0
    %v1734 = vpop.f32.mrb[0].mxu0
    %v1735 = vadd.f32 0.0, %v1734
    %v1736 = vpop.f32.mrb[0].mxu0
    %1737 = vmatprep.mubr.bf16.mxu0 %v1455
    %1738 = vmatmul.mubr.bf16.gmra.mrb[0].mxu0 %v1454
    %v1739 = vpop.f32.mrb[0].mxu0
    %v1740 = vadd.f32 0.0, %v1739
    %v1741 = vpop.f32.mrb[0].mxu0
    %v1742 = vpop.f32.mrb[0].mxu0
    %v1743 = vadd.f32 0.0, %v1742
    %v1744 = vpop.f32.mrb[0].mxu0
    %1745 = vdwg.mxu0
    %1746 = vmatprep.subr.bf16.mxu0 0
    %1747 = vmatpush1.bf16.msra.mxu0 %v1617
    %1748 = vmatprep.subr.bf16.mxu0 0
    %1749 = vmatpush1.bf16.msra.mxu0 %v1618
    %1750 = vmatprep.subr.bf16.mxu0 0
    %1751 = vmatpush1.bf16.msra.mxu0 %v1619
    %1752 = vmatprep.subr.bf16.mxu0 0
    %1753 = vmatpush1.bf16.msra.mxu0 %v1620
    %1754 = vmatprep.subr.bf16.mxu0 0
    %1755 = vmatpush1.bf16.msra.mxu0 %v1621
    %1756 = vmatprep.subr.bf16.mxu0 0
    %1757 = vmatpush1.bf16.msra.mxu0 %v1622
    %1758 = vmatprep.subr.bf16.mxu0 0
    %1759 = vmatpush1.bf16.msra.mxu0 %v1623
    %1760 = vmatprep.subr.bf16.mxu0 0
    %1761 = vmatpush1.bf16.msra.mxu0 %v1624
    %1762 = vmatprep.subr.bf16.mxu0 0
    %1763 = vmatpush1.bf16.msra.mxu0 0
    %1764 = vmatprep.subr.bf16.mxu0 0
    %1765 = vmatpush1.bf16.msra.mxu0 0
    %1766 = vmatprep.subr.bf16.mxu0 0
    %1767 = vmatpush1.bf16.msra.mxu0 0
    %1768 = vmatprep.subr.bf16.mxu0 0
    %1769 = vmatpush1.bf16.msra.mxu0 0
    %1770 = vmatprep.subr.bf16.mxu0 0
    %1771 = vmatpush1.bf16.msra.mxu0 0
    %1772 = vmatprep.subr.bf16.mxu0 0
    %1773 = vmatpush1.bf16.msra.mxu0 0
    %1774 = vmatprep.subr.bf16.mxu0 0
    %1775 = vmatpush1.bf16.msra.mxu0 0
    %1776 = vmatprep.subr.bf16.mxu0 0
    %1777 = vmatpush1.bf16.msra.mxu0 0
    %1778 = vmatprep.mubr.bf16.mxu0 0
    %1779 = vmatmul.mubr.bf16.gmra.mrb[0].mxu0 %v1435
    %v1780 = vpop.f32.mrb[0].mxu0
    %v1781 = vadd.f32 %v1684, %v1780
    %v1782 = vpop.f32.mrb[0].mxu0
    %v1783 = vpop.f32.mrb[0].mxu0
    %v1784 = vadd.f32 %v1687, %v1783
    %v1785 = vpop.f32.mrb[0].mxu0
    %1786 = vmatprep.mubr.bf16.mxu0 0
    %1787 = vmatmul.mubr.bf16.gmra.mrb[0].mxu0 %v1438
    %v1788 = vpop.f32.mrb[0].mxu0
    %v1789 = vadd.f32 %v1692, %v1788
    %v1790 = vpop.f32.mrb[0].mxu0
    %v1791 = vpop.f32.mrb[0].mxu0
    %v1792 = vadd.f32 %v1695, %v1791
    %v1793 = vpop.f32.mrb[0].mxu0
    %1794 = vmatprep.mubr.bf16.mxu0 0
    %1795 = vmatmul.mubr.bf16.gmra.mrb[0].mxu0 %v1441
    %v1796 = vpop.f32.mrb[0].mxu0
    %v1797 = vadd.f32 %v1700, %v1796
    %v1798 = vpop.f32.mrb[0].mxu0
    %v1799 = vpop.f32.mrb[0].mxu0
    %v1800 = vadd.f32 %v1703, %v1799
    %v1801 = vpop.f32.mrb[0].mxu0
    %1802 = vmatprep.mubr.bf16.mxu0 0
    %1803 = vmatmul.mubr.bf16.gmra.mrb[0].mxu0 %v1444
    %v1804 = vpop.f32.mrb[0].mxu0
    %v1805 = vadd.f32 %v1708, %v1804
    %v1806 = vpop.f32.mrb[0].mxu0
    %v1807 = vpop.f32.mrb[0].mxu0
    %v1808 = vadd.f32 %v1711, %v1807
    %v1809 = vpop.f32.mrb[0].mxu0
    %1810 = vmatprep.mubr.bf16.mxu0 0
    %1811 = vmatmul.mubr.bf16.gmra.mrb[0].mxu0 %v1447
    %v1812 = vpop.f32.mrb[0].mxu0
    %v1813 = vadd.f32 %v1716, %v1812
    %v1814 = vpop.f32.mrb[0].mxu0
    %v1815 = vpop.f32.mrb[0].mxu0
    %v1816 = vadd.f32 %v1719, %v1815
    %v1817 = vpop.f32.mrb[0].mxu0
    %1818 = vmatprep.mubr.bf16.mxu0 0
    %1819 = vmatmul.mubr.bf16.gmra.mrb[0].mxu0 %v1450
    %v1820 = vpop.f32.mrb[0].mxu0
    %v1821 = vadd.f32 %v1724, %v1820
    %v1822 = vpop.f32.mrb[0].mxu0
    %v1823 = vpop.f32.mrb[0].mxu0
    %v1824 = vadd.f32 %v1727, %v1823
    %v1825 = vpop.f32.mrb[0].mxu0
    %1826 = vmatprep.mubr.bf16.mxu0 0
    %1827 = vmatmul.mubr.bf16.gmra.mrb[0].mxu0 %v1453
    %v1828 = vpop.f32.mrb[0].mxu0
    %v1829 = vadd.f32 %v1732, %v1828
    %v1830 = vpop.f32.mrb[0].mxu0
    %v1831 = vpop.f32.mrb[0].mxu0
    %v1832 = vadd.f32 %v1735, %v1831
    %v1833 = vpop.f32.mrb[0].mxu0
    %1834 = vmatprep.mubr.bf16.mxu0 0
    %1835 = vmatmul.mubr.bf16.gmra.mrb[0].mxu0 %v1456
    %v1836 = vpop.f32.mrb[0].mxu0
    %v1837 = vadd.f32 %v1740, %v1836
    %v1838 = vpop.f32.mrb[0].mxu0
    %v1839 = vpop.f32.mrb[0].mxu0
    %v1840 = vadd.f32 %v1743, %v1839
    %v1841 = vpop.f32.mrb[0].mxu0
    %1842 = vdwg.mxu0
    %v1843 = vmul.f32 %v1781, 2.0
    %v1844 = vmul.f32 %v1784, 2.0
    %v1845 = vmul.f32 %v1789, 2.0
    %v1846 = vmul.f32 %v1792, 2.0
    %v1847 = vmul.f32 %v1797, 2.0
    %v1848 = vmul.f32 %v1800, 2.0
    %v1849 = vmul.f32 %v1805, 2.0
    %v1850 = vmul.f32 %v1808, 2.0
    %v1851 = vmul.f32 %v1813, 2.0
    %v1852 = vmul.f32 %v1816, 2.0
    %v1853 = vmul.f32 %v1821, 2.0
    %v1854 = vmul.f32 %v1824, 2.0
    %v1855 = vmul.f32 %v1829, 2.0
    %v1856 = vmul.f32 %v1832, 2.0
    %v1857 = vmul.f32 %v1837, 2.0
    %v1858 = vmul.f32 %v1840, 2.0
    %v1860 = vlaneseq
    %v1861 = vshrl.u32 %v1860, 7
    %v1862 = vsub.s32 0, %v1861
    %v1863 = vrot.slane %v1432, %v1862
    %v1865 = vsub.f32 %v1863, %v1843
    %v1866 = vsub.f32 %v1863, %v1844
    %v1867 = vsub.f32 %v1863, %v1845
    %v1868 = vsub.f32 %v1863, %v1846
    %v1869 = vsub.f32 %v1863, %v1847
    %v1870 = vsub.f32 %v1863, %v1848
    %v1871 = vsub.f32 %v1863, %v1849
    %v1872 = vsub.f32 %v1863, %v1850
    %v1873 = vsub.f32 %v1863, %v1851
    %v1874 = vsub.f32 %v1863, %v1852
    %v1875 = vsub.f32 %v1863, %v1853
    %v1876 = vsub.f32 %v1863, %v1854
    %v1877 = vsub.f32 %v1863, %v1855
    %v1878 = vsub.f32 %v1863, %v1856
    %v1879 = vsub.f32 %v1863, %v1857
    %v1880 = vsub.f32 %v1863, %v1858
    %1881 = vmin.index.xlane.f32.xlu0 %v1865
    %v1882 = vpop.xlane.xlu0 %1881
    %1883 = vmin.index.xlane.f32.xlu0 %v1866
    %v1884 = vpop.xlane.xlu0 %1883
    %1885 = vmin.index.xlane.f32.xlu0 %v1867
    %v1886 = vpop.xlane.xlu0 %1885
    %1887 = vmin.index.xlane.f32.xlu0 %v1868
    %v1888 = vpop.xlane.xlu0 %1887
    %1889 = vmin.index.xlane.f32.xlu0 %v1869
    %v1890 = vpop.xlane.xlu0 %1889
    %1891 = vmin.index.xlane.f32.xlu0 %v1870
    %v1892 = vpop.xlane.xlu0 %1891
    %1893 = vmin.index.xlane.f32.xlu0 %v1871
    %v1894 = vpop.xlane.xlu0 %1893
    %1895 = vmin.index.xlane.f32.xlu0 %v1872
    %v1896 = vpop.xlane.xlu0 %1895
    %1897 = vmin.index.xlane.f32.xlu0 %v1873
    %v1898 = vpop.xlane.xlu0 %1897
    %1899 = vmin.index.xlane.f32.xlu0 %v1874
    %v1900 = vpop.xlane.xlu0 %1899
    %1901 = vmin.index.xlane.f32.xlu0 %v1875
    %v1902 = vpop.xlane.xlu0 %1901
    %1903 = vmin.index.xlane.f32.xlu0 %v1876
    %v1904 = vpop.xlane.xlu0 %1903
    %1905 = vmin.index.xlane.f32.xlu0 %v1877
    %v1906 = vpop.xlane.xlu0 %1905
    %1907 = vmin.index.xlane.f32.xlu0 %v1878
    %v1908 = vpop.xlane.xlu0 %1907
    %1909 = vmin.index.xlane.f32.xlu0 %v1879
    %v1910 = vpop.xlane.xlu0 %1909
    %1911 = vmin.index.xlane.f32.xlu0 %v1880
    %v1912 = vpop.xlane.xlu0 %1911
    %v1913 = vlaneseq
    %v1914 = vand.u32 %v1913, 127
    %vm1915 = vcmp.eq.s32.totalorder %v1914, %v1882
    %vm1916 = vcmp.eq.s32.totalorder %v1914, %v1884
    %vm1917 = vcmp.eq.s32.totalorder %v1914, %v1886
    %vm1918 = vcmp.eq.s32.totalorder %v1914, %v1888
    %vm1919 = vcmp.eq.s32.totalorder %v1914, %v1890
    %vm1920 = vcmp.eq.s32.totalorder %v1914, %v1892
    %vm1921 = vcmp.eq.s32.totalorder %v1914, %v1894
    %vm1922 = vcmp.eq.s32.totalorder %v1914, %v1896
    %vm1923 = vcmp.eq.s32.totalorder %v1914, %v1898
    %vm1924 = vcmp.eq.s32.totalorder %v1914, %v1900
    %vm1925 = vcmp.eq.s32.totalorder %v1914, %v1902
    %vm1926 = vcmp.eq.s32.totalorder %v1914, %v1904
    %vm1927 = vcmp.eq.s32.totalorder %v1914, %v1906
    %vm1928 = vcmp.eq.s32.totalorder %v1914, %v1908
    %vm1929 = vcmp.eq.s32.totalorder %v1914, %v1910
    %vm1930 = vcmp.eq.s32.totalorder %v1914, %v1912
    %v1931 = vsel %vm1915, 1, 0
    %v1932 = vsel %vm1916, 1, 0
    %v1933 = vsel %vm1917, 1, 0
    %v1934 = vsel %vm1918, 1, 0
    %v1935 = vsel %vm1919, 1, 0
    %v1936 = vsel %vm1920, 1, 0
    %v1937 = vsel %vm1921, 1, 0
    %v1938 = vsel %vm1922, 1, 0
    %v1939 = vsel %vm1923, 1, 0
    %v1940 = vsel %vm1924, 1, 0
    %v1941 = vsel %vm1925, 1, 0
    %v1942 = vsel %vm1926, 1, 0
    %v1943 = vsel %vm1927, 1, 0
    %v1944 = vsel %vm1928, 1, 0
    %v1945 = vsel %vm1929, 1, 0
    %v1946 = vsel %vm1930, 1, 0
    %v1947 = vcvt.s32.f32 %v1931
    %v1948 = vcvt.s32.f32 %v1932
    %v1949 = vcvt.s32.f32 %v1933
    %v1950 = vcvt.s32.f32 %v1934
    %v1951 = vcvt.s32.f32 %v1935
    %v1952 = vcvt.s32.f32 %v1936
    %v1953 = vcvt.s32.f32 %v1937
    %v1954 = vcvt.s32.f32 %v1938
    %v1955 = vcvt.s32.f32 %v1939
    %v1956 = vcvt.s32.f32 %v1940
    %v1957 = vcvt.s32.f32 %v1941
    %v1958 = vcvt.s32.f32 %v1942
    %v1959 = vcvt.s32.f32 %v1943
    %v1960 = vcvt.s32.f32 %v1944
    %v1961 = vcvt.s32.f32 %v1945
    %v1962 = vcvt.s32.f32 %v1946
    %v1963 = vld [vmem:[#allocation12] sm:$0xff]
    %v1964 = vld [vmem:[#allocation12 + $0x8] sm:$0xff]
    %v1965 = vld [vmem:[#allocation12 + $0x10] sm:$0xff]
    %v1966 = vld [vmem:[#allocation12 + $0x18] sm:$0xff]
    %v1967 = vld [vmem:[#allocation12 + $0x20] sm:$0xff]
    %v1968 = vld [vmem:[#allocation12 + $0x28] sm:$0xff]
    %v1969 = vld [vmem:[#allocation12 + $0x30] sm:$0xff]
    %v1970 = vld [vmem:[#allocation12 + $0x38] sm:$0xff]
    %v1971 = vld [vmem:[#allocation12 + $0x40] sm:$0xff]
    %v1972 = vld [vmem:[#allocation12 + $0x48] sm:$0xff]
    %v1973 = vld [vmem:[#allocation12 + $0x50] sm:$0xff]
    %v1974 = vld [vmem:[#allocation12 + $0x58] sm:$0xff]
    %v1975 = vld [vmem:[#allocation12 + $0x60] sm:$0xff]
    %v1976 = vld [vmem:[#allocation12 + $0x68] sm:$0xff]
    %v1977 = vld [vmem:[#allocation12 + $0x70] sm:$0xff]
    %v1978 = vld [vmem:[#allocation12 + $0x78] sm:$0xff]
    %v1979 = vld [vmem:[#allocation12 + $0x80] sm:$0xff]
    %v1980 = vld [vmem:[#allocation12 + $0x88] sm:$0xff]
    %v1981 = vld [vmem:[#allocation12 + $0x90] sm:$0xff]
    %v1982 = vld [vmem:[#allocation12 + $0x98] sm:$0xff]
    %v1983 = vld [vmem:[#allocation12 + $0xa0] sm:$0xff]
    %v1984 = vld [vmem:[#allocation12 + $0xa8] sm:$0xff]
    %v1985 = vld [vmem:[#allocation12 + $0xb0] sm:$0xff]
    %v1986 = vld [vmem:[#allocation12 + $0xb8] sm:$0xff]
    %v1987 = vld [vmem:[#allocation12 + $0xc0] sm:$0xff]
    %v1988 = vld [vmem:[#allocation12 + $0xc8] sm:$0xff]
    %v1989 = vld [vmem:[#allocation12 + $0xd0] sm:$0xff]
    %v1990 = vld [vmem:[#allocation12 + $0xd8] sm:$0xff]
    %v1991 = vld [vmem:[#allocation12 + $0xe0] sm:$0xff]
    %v1992 = vld [vmem:[#allocation12 + $0xe8] sm:$0xff]
    %v1993 = vld [vmem:[#allocation12 + $0xf0] sm:$0xff]
    %v1994 = vld [vmem:[#allocation12 + $0xf8] sm:$0xff]
    %v1995 = vld [vmem:[#allocation12 + $0x100] sm:$0xff]
    %v1996 = vld [vmem:[#allocation12 + $0x108] sm:$0xff]
    %v1997 = vld [vmem:[#allocation12 + $0x110] sm:$0xff]
    %v1998 = vld [vmem:[#allocation12 + $0x118] sm:$0xff]
    %v1999 = vld [vmem:[#allocation12 + $0x120] sm:$0xff]
    %v2000 = vld [vmem:[#allocation12 + $0x128] sm:$0xff]
    %v2001 = vld [vmem:[#allocation12 + $0x130] sm:$0xff]
    %v2002 = vld [vmem:[#allocation12 + $0x138] sm:$0xff]
    %v2003 = vld [vmem:[#allocation12 + $0x140] sm:$0xff]
    %v2004 = vld [vmem:[#allocation12 + $0x148] sm:$0xff]
    %v2005 = vld [vmem:[#allocation12 + $0x150] sm:$0xff]
    %v2006 = vld [vmem:[#allocation12 + $0x158] sm:$0xff]
    %v2007 = vld [vmem:[#allocation12 + $0x160] sm:$0xff]
    %v2008 = vld [vmem:[#allocation12 + $0x168] sm:$0xff]
    %v2009 = vld [vmem:[#allocation12 + $0x170] sm:$0xff]
    %v2010 = vld [vmem:[#allocation12 + $0x178] sm:$0xff]
    %2011 = vmatprep.subr.mxu0 %v1964
    %2012 = vmatpush1.msra.mxu0 %v1963
    %2013 = vmatprep.subr.mxu0 %v1967
    %2014 = vmatpush1.msra.mxu0 %v1966
    %2015 = vmatprep.subr.mxu0 %v1970
    %2016 = vmatpush1.msra.mxu0 %v1969
    %2017 = vmatprep.subr.mxu0 %v1973
    %2018 = vmatpush1.msra.mxu0 %v1972
    %2019 = vmatprep.subr.mxu0 %v1976
    %2020 = vmatpush1.msra.mxu0 %v1975
    %2021 = vmatprep.subr.mxu0 %v1979
    %2022 = vmatpush1.msra.mxu0 %v1978
    %2023 = vmatprep.subr.mxu0 %v1982
    %2024 = vmatpush1.msra.mxu0 %v1981
    %2025 = vmatprep.subr.mxu0 %v1985
    %2026 = vmatpush1.msra.mxu0 %v1984
    %2027 = vmatprep.subr.mxu0 %v1988
    %2028 = vmatpush1.msra.mxu0 %v1987
    %2029 = vmatprep.subr.mxu0 %v1991
    %2030 = vmatpush1.msra.mxu0 %v1990
    %2031 = vmatprep.subr.mxu0 %v1994
    %2032 = vmatpush1.msra.mxu0 %v1993
    %2033 = vmatprep.subr.mxu0 %v1997
    %2034 = vmatpush1.msra.mxu0 %v1996
    %2035 = vmatprep.subr.mxu0 %v2000
    %2036 = vmatpush1.msra.mxu0 %v1999
    %2037 = vmatprep.subr.mxu0 %v2003
    %2038 = vmatpush1.msra.mxu0 %v2002
    %2039 = vmatprep.subr.mxu0 %v2006
    %2040 = vmatpush1.msra.mxu0 %v2005
    %2041 = vmatprep.subr.mxu0 %v2009
    %2042 = vmatpush1.msra.mxu0 %v2008
    %2043 = vmatprep.subr.mxu0 0.0
    %2044 = vmatpush1.msra.mxu0 0.0
    %2045 = vmatprep.subr.mxu0 0.0
    %2046 = vmatpush1.msra.mxu0 0.0
    %2047 = vmatprep.subr.mxu0 0.0
    %2048 = vmatpush1.msra.mxu0 0.0
    %2049 = vmatprep.subr.mxu0 0.0
    %2050 = vmatpush1.msra.mxu0 0.0
    %2051 = vmatprep.subr.mxu0 0.0
    %2052 = vmatpush1.msra.mxu0 0.0
    %2053 = vmatprep.subr.mxu0 0.0
    %2054 = vmatpush1.msra.mxu0 0.0
    %2055 = vmatprep.subr.mxu0 0.0
    %2056 = vmatpush1.msra.mxu0 0.0
    %2057 = vmatprep.subr.mxu0 0.0
    %2058 = vmatpush1.msra.mxu0 0.0
    %2059 = vmatprep.subr.mxu0 0.0
    %2060 = vmatpush1.msra.mxu0 0.0
    %2061 = vmatprep.subr.mxu0 0.0
    %2062 = vmatpush1.msra.mxu0 0.0
    %2063 = vmatprep.subr.mxu0 0.0
    %2064 = vmatpush1.msra.mxu0 0.0
    %2065 = vmatprep.subr.mxu0 0.0
    %2066 = vmatpush1.msra.mxu0 0.0
    %2067 = vmatprep.subr.mxu0 0.0
    %2068 = vmatpush1.msra.mxu0 0.0
    %2069 = vmatprep.subr.mxu0 0.0
    %2070 = vmatpush1.msra.mxu0 0.0
    %2071 = vmatprep.subr.mxu0 0.0
    %2072 = vmatpush1.msra.mxu0 0.0
    %2073 = vmatprep.subr.mxu0 0.0
    %2074 = vmatpush1.msra.mxu0 0.0
    %2075 = vmatprep.mubr.f32.mxu0 0.0
    %2076 = vmatmul.mubr.f32.gmra.mrb[0].mxu0 %v1947
    %v2077 = vpop.f32.mrb[0].mxu0
    %v2078 = vadd.f32 0.0, %v2077
    %v2079 = vpop.f32.mrb[0].mxu0
    %v2080 = vadd.f32 0.0, %v2079
    %2081 = vmatprep.mubr.f32.mxu0 0.0
    %2082 = vmatmul.mubr.f32.gmra.mrb[0].mxu0 %v1948
    %v2083 = vpop.f32.mrb[0].mxu0
    %v2084 = vadd.f32 0.0, %v2083
    %v2085 = vpop.f32.mrb[0].mxu0
    %v2086 = vadd.f32 0.0, %v2085
    %2087 = vmatprep.mubr.f32.mxu0 0.0
    %2088 = vmatmul.mubr.f32.gmra.mrb[0].mxu0 %v1949
    %v2089 = vpop.f32.mrb[0].mxu0
    %v2090 = vadd.f32 0.0, %v2089
    %v2091 = vpop.f32.mrb[0].mxu0
    %v2092 = vadd.f32 0.0, %v2091
    %2093 = vmatprep.mubr.f32.mxu0 0.0
    %2094 = vmatmul.mubr.f32.gmra.mrb[0].mxu0 %v1950
    %v2095 = vpop.f32.mrb[0].mxu0
    %v2096 = vadd.f32 0.0, %v2095
    %v2097 = vpop.f32.mrb[0].mxu0
    %v2098 = vadd.f32 0.0, %v2097
    %2099 = vmatprep.mubr.f32.mxu0 0.0
    %2100 = vmatmul.mubr.f32.gmra.mrb[0].mxu0 %v1951
    %v2101 = vpop.f32.mrb[0].mxu0
    %v2102 = vadd.f32 0.0, %v2101
    %v2103 = vpop.f32.mrb[0].mxu0
    %v2104 = vadd.f32 0.0, %v2103
    %2105 = vmatprep.mubr.f32.mxu0 0.0
    %2106 = vmatmul.mubr.f32.gmra.mrb[0].mxu0 %v1952
    %v2107 = vpop.f32.mrb[0].mxu0
    %v2108 = vadd.f32 0.0, %v2107
    %v2109 = vpop.f32.mrb[0].mxu0
    %v2110 = vadd.f32 0.0, %v2109
    %2111 = vmatprep.mubr.f32.mxu0 0.0
    %2112 = vmatmul.mubr.f32.gmra.mrb[0].mxu0 %v1953
    %v2113 = vpop.f32.mrb[0].mxu0
    %v2114 = vadd.f32 0.0, %v2113
    %v2115 = vpop.f32.mrb[0].mxu0
    %v2116 = vadd.f32 0.0, %v2115
    %2117 = vmatprep.mubr.f32.mxu0 0.0
    %2118 = vmatmul.mubr.f32.gmra.mrb[0].mxu0 %v1954
    %v2119 = vpop.f32.mrb[0].mxu0
    %v2120 = vadd.f32 0.0, %v2119
    %v2121 = vpop.f32.mrb[0].mxu0
    %v2122 = vadd.f32 0.0, %v2121
    %2123 = vmatprep.mubr.f32.mxu0 0.0
    %2124 = vmatmul.mubr.f32.gmra.mrb[0].mxu0 %v1955
    %v2125 = vpop.f32.mrb[0].mxu0
    %v2126 = vadd.f32 0.0, %v2125
    %v2127 = vpop.f32.mrb[0].mxu0
    %v2128 = vadd.f32 0.0, %v2127
    %2129 = vmatprep.mubr.f32.mxu0 0.0
    %2130 = vmatmul.mubr.f32.gmra.mrb[0].mxu0 %v1956
    %v2131 = vpop.f32.mrb[0].mxu0
    %v2132 = vadd.f32 0.0, %v2131
    %v2133 = vpop.f32.mrb[0].mxu0
    %v2134 = vadd.f32 0.0, %v2133
    %2135 = vmatprep.mubr.f32.mxu0 0.0
    %2136 = vmatmul.mubr.f32.gmra.mrb[0].mxu0 %v1957
    %v2137 = vpop.f32.mrb[0].mxu0
    %v2138 = vadd.f32 0.0, %v2137
    %v2139 = vpop.f32.mrb[0].mxu0
    %v2140 = vadd.f32 0.0, %v2139
    %2141 = vmatprep.mubr.f32.mxu0 0.0
    %2142 = vmatmul.mubr.f32.gmra.mrb[0].mxu0 %v1958
    %v2143 = vpop.f32.mrb[0].mxu0
    %v2144 = vadd.f32 0.0, %v2143
    %v2145 = vpop.f32.mrb[0].mxu0
    %v2146 = vadd.f32 0.0, %v2145
    %2147 = vmatprep.mubr.f32.mxu0 0.0
    %2148 = vmatmul.mubr.f32.gmra.mrb[0].mxu0 %v1959
    %v2149 = vpop.f32.mrb[0].mxu0
    %v2150 = vadd.f32 0.0, %v2149
    %v2151 = vpop.f32.mrb[0].mxu0
    %v2152 = vadd.f32 0.0, %v2151
    %2153 = vmatprep.mubr.f32.mxu0 0.0
    %2154 = vmatmul.mubr.f32.gmra.mrb[0].mxu0 %v1960
    %v2155 = vpop.f32.mrb[0].mxu0
    %v2156 = vadd.f32 0.0, %v2155
    %v2157 = vpop.f32.mrb[0].mxu0
    %v2158 = vadd.f32 0.0, %v2157
    %2159 = vmatprep.mubr.f32.mxu0 0.0
    %2160 = vmatmul.mubr.f32.gmra.mrb[0].mxu0 %v1961
    %v2161 = vpop.f32.mrb[0].mxu0
    %v2162 = vadd.f32 0.0, %v2161
    %v2163 = vpop.f32.mrb[0].mxu0
    %v2164 = vadd.f32 0.0, %v2163
    %2165 = vmatprep.mubr.f32.mxu0 0.0
    %2166 = vmatmul.mubr.f32.gmra.mrb[0].mxu0 %v1962
    %v2167 = vpop.f32.mrb[0].mxu0
    %v2168 = vadd.f32 0.0, %v2167
    %v2169 = vpop.f32.mrb[0].mxu0
    %v2170 = vadd.f32 0.0, %v2169
    %2171 = vdwg.mxu0
    %2172 = vmatprep.subr.mxu0 0.0
    %2173 = vmatpush1.msra.mxu0 %v1965
    %2174 = vmatprep.subr.mxu0 0.0
    %2175 = vmatpush1.msra.mxu0 %v1968
    %2176 = vmatprep.subr.mxu0 0.0
    %2177 = vmatpush1.msra.mxu0 %v1971
    %2178 = vmatprep.subr.mxu0 0.0
    %2179 = vmatpush1.msra.mxu0 %v1974
    %2180 = vmatprep.subr.mxu0 0.0
    %2181 = vmatpush1.msra.mxu0 %v1977
    %2182 = vmatprep.subr.mxu0 0.0
    %2183 = vmatpush1.msra.mxu0 %v1980
    %2184 = vmatprep.subr.mxu0 0.0
    %2185 = vmatpush1.msra.mxu0 %v1983
    %2186 = vmatprep.subr.mxu0 0.0
    %2187 = vmatpush1.msra.mxu0 %v1986
    %2188 = vmatprep.subr.mxu0 0.0
    %2189 = vmatpush1.msra.mxu0 %v1989
    %2190 = vmatprep.subr.mxu0 0.0
    %2191 = vmatpush1.msra.mxu0 %v1992
    %2192 = vmatprep.subr.mxu0 0.0
    %2193 = vmatpush1.msra.mxu0 %v1995
    %2194 = vmatprep.subr.mxu0 0.0
    %2195 = vmatpush1.msra.mxu0 %v1998
    %2196 = vmatprep.subr.mxu0 0.0
    %2197 = vmatpush1.msra.mxu0 %v2001
    %2198 = vmatprep.subr.mxu0 0.0
    %2199 = vmatpush1.msra.mxu0 %v2004
    %2200 = vmatprep.subr.mxu0 0.0
    %2201 = vmatpush1.msra.mxu0 %v2007
    %2202 = vmatprep.subr.mxu0 0.0
    %2203 = vmatpush1.msra.mxu0 %v2010
    %2204 = vmatprep.subr.mxu0 0.0
    %2205 = vmatpush1.msra.mxu0 0.0
    %2206 = vmatprep.subr.mxu0 0.0
    %2207 = vmatpush1.msra.mxu0 0.0
    %2208 = vmatprep.subr.mxu0 0.0
    %2209 = vmatpush1.msra.mxu0 0.0
    %2210 = vmatprep.subr.mxu0 0.0
    %2211 = vmatpush1.msra.mxu0 0.0
    %2212 = vmatprep.subr.mxu0 0.0
    %2213 = vmatpush1.msra.mxu0 0.0
    %2214 = vmatprep.subr.mxu0 0.0
    %2215 = vmatpush1.msra.mxu0 0.0
    %2216 = vmatprep.subr.mxu0 0.0
    %2217 = vmatpush1.msra.mxu0 0.0
    %2218 = vmatprep.subr.mxu0 0.0
    %2219 = vmatpush1.msra.mxu0 0.0
    %2220 = vmatprep.subr.mxu0 0.0
    %2221 = vmatpush1.msra.mxu0 0.0
    %2222 = vmatprep.subr.mxu0 0.0
    %2223 = vmatpush1.msra.mxu0 0.0
    %2224 = vmatprep.subr.mxu0 0.0
    %2225 = vmatpush1.msra.mxu0 0.0
    %2226 = vmatprep.subr.mxu0 0.0
    %2227 = vmatpush1.msra.mxu0 0.0
    %2228 = vmatprep.subr.mxu0 0.0
    %2229 = vmatpush1.msra.mxu0 0.0
    %2230 = vmatprep.subr.mxu0 0.0
    %2231 = vmatpush1.msra.mxu0 0.0
    %2232 = vmatprep.subr.mxu0 0.0
    %2233 = vmatpush1.msra.mxu0 0.0
    %2234 = vmatprep.subr.mxu0 0.0
    %2235 = vmatpush1.msra.mxu0 0.0
    %2236 = vmatprep.mubr.f32.mxu0 0.0
    %2237 = vmatmul.mubr.f32.gmra.mrb[0].mxu0 %v1947
    %v2238 = vpop.f32.mrb[0].mxu0
    %v2239 = vadd.f32 0.0, %v2238
    %v2240 = vpop.f32.mrb[0].mxu0
    %2241 = vmatprep.mubr.f32.mxu0 0.0
    %2242 = vmatmul.mubr.f32.gmra.mrb[0].mxu0 %v1948
    %v2243 = vpop.f32.mrb[0].mxu0
    %v2244 = vadd.f32 0.0, %v2243
    %v2245 = vpop.f32.mrb[0].mxu0
    %2246 = vmatprep.mubr.f32.mxu0 0.0
    %2247 = vmatmul.mubr.f32.gmra.mrb[0].mxu0 %v1949
    %v2248 = vpop.f32.mrb[0].mxu0
    %v2249 = vadd.f32 0.0, %v2248
    %v2250 = vpop.f32.mrb[0].mxu0
    %2251 = vmatprep.mubr.f32.mxu0 0.0
    %2252 = vmatmul.mubr.f32.gmra.mrb[0].mxu0 %v1950
    %v2253 = vpop.f32.mrb[0].mxu0
    %v2254 = vadd.f32 0.0, %v2253
    %v2255 = vpop.f32.mrb[0].mxu0
    %2256 = vmatprep.mubr.f32.mxu0 0.0
    %2257 = vmatmul.mubr.f32.gmra.mrb[0].mxu0 %v1951
    %v2258 = vpop.f32.mrb[0].mxu0
    %v2259 = vadd.f32 0.0, %v2258
    %v2260 = vpop.f32.mrb[0].mxu0
    %2261 = vmatprep.mubr.f32.mxu0 0.0
    %2262 = vmatmul.mubr.f32.gmra.mrb[0].mxu0 %v1952
    %v2263 = vpop.f32.mrb[0].mxu0
    %v2264 = vadd.f32 0.0, %v2263
    %v2265 = vpop.f32.mrb[0].mxu0
    %2266 = vmatprep.mubr.f32.mxu0 0.0
    %2267 = vmatmul.mubr.f32.gmra.mrb[0].mxu0 %v1953
    %v2268 = vpop.f32.mrb[0].mxu0
    %v2269 = vadd.f32 0.0, %v2268
    %v2270 = vpop.f32.mrb[0].mxu0
    %2271 = vmatprep.mubr.f32.mxu0 0.0
    %2272 = vmatmul.mubr.f32.gmra.mrb[0].mxu0 %v1954
    %v2273 = vpop.f32.mrb[0].mxu0
    %v2274 = vadd.f32 0.0, %v2273
    %v2275 = vpop.f32.mrb[0].mxu0
    %2276 = vmatprep.mubr.f32.mxu0 0.0
    %2277 = vmatmul.mubr.f32.gmra.mrb[0].mxu0 %v1955
    %v2278 = vpop.f32.mrb[0].mxu0
    %v2279 = vadd.f32 0.0, %v2278
    %v2280 = vpop.f32.mrb[0].mxu0
    %2281 = vmatprep.mubr.f32.mxu0 0.0
    %2282 = vmatmul.mubr.f32.gmra.mrb[0].mxu0 %v1956
    %v2283 = vpop.f32.mrb[0].mxu0
    %v2284 = vadd.f32 0.0, %v2283
    %v2285 = vpop.f32.mrb[0].mxu0
    %2286 = vmatprep.mubr.f32.mxu0 0.0
    %2287 = vmatmul.mubr.f32.gmra.mrb[0].mxu0 %v1957
    %v2288 = vpop.f32.mrb[0].mxu0
    %v2289 = vadd.f32 0.0, %v2288
    %v2290 = vpop.f32.mrb[0].mxu0
    %2291 = vmatprep.mubr.f32.mxu0 0.0
    %2292 = vmatmul.mubr.f32.gmra.mrb[0].mxu0 %v1958
    %v2293 = vpop.f32.mrb[0].mxu0
    %v2294 = vadd.f32 0.0, %v2293
    %v2295 = vpop.f32.mrb[0].mxu0
    %2296 = vmatprep.mubr.f32.mxu0 0.0
    %2297 = vmatmul.mubr.f32.gmra.mrb[0].mxu0 %v1959
    %v2298 = vpop.f32.mrb[0].mxu0
    %v2299 = vadd.f32 0.0, %v2298
    %v2300 = vpop.f32.mrb[0].mxu0
    %2301 = vmatprep.mubr.f32.mxu0 0.0
    %2302 = vmatmul.mubr.f32.gmra.mrb[0].mxu0 %v1960
    %v2303 = vpop.f32.mrb[0].mxu0
    %v2304 = vadd.f32 0.0, %v2303
    %v2305 = vpop.f32.mrb[0].mxu0
    %2306 = vmatprep.mubr.f32.mxu0 0.0
    %2307 = vmatmul.mubr.f32.gmra.mrb[0].mxu0 %v1961
    %v2308 = vpop.f32.mrb[0].mxu0
    %v2309 = vadd.f32 0.0, %v2308
    %v2310 = vpop.f32.mrb[0].mxu0
    %2311 = vmatprep.mubr.f32.mxu0 0.0
    %2312 = vmatmul.mubr.f32.gmra.mrb[0].mxu0 %v1962
    %v2313 = vpop.f32.mrb[0].mxu0
    %v2314 = vadd.f32 0.0, %v2313
    %v2315 = vpop.f32.mrb[0].mxu0
    %2316 = vdwg.mxu0
    %v2317 = vsub.f32 %v2078, %v1174
    %v2318 = vsub.f32 %v2080, %v1176
    %v2319 = vsub.f32 %v2239, %v1287
    %v2320 = vsub.f32 %v2084, %v1178
    %v2321 = vsub.f32 %v2086, %v1180
    %v2322 = vsub.f32 %v2244, %v1290
    %v2323 = vsub.f32 %v2090, %v1184
    %v2324 = vsub.f32 %v2092, %v1186
    %v2325 = vsub.f32 %v2249, %v1295
    %v2326 = vsub.f32 %v2096, %v1188
    %v2327 = vsub.f32 %v2098, %v1190
    %v2328 = vsub.f32 %v2254, %v1298
    %v2329 = vsub.f32 %v2102, %v1194
    %v2330 = vsub.f32 %v2104, %v1196
    %v2331 = vsub.f32 %v2259, %v1303
    %v2332 = vsub.f32 %v2108, %v1198
    %v2333 = vsub.f32 %v2110, %v1200
    %v2334 = vsub.f32 %v2264, %v1306
    %v2335 = vsub.f32 %v2114, %v1204
    %v2336 = vsub.f32 %v2116, %v1206
    %v2337 = vsub.f32 %v2269, %v1311
    %v2338 = vsub.f32 %v2120, %v1208
    %v2339 = vsub.f32 %v2122, %v1210
    %v2340 = vsub.f32 %v2274, %v1314
    %v2341 = vsub.f32 %v2126, %v1214
    %v2342 = vsub.f32 %v2128, %v1216
    %v2343 = vsub.f32 %v2279, %v1319
    %v2344 = vsub.f32 %v2132, %v1218
    %v2345 = vsub.f32 %v2134, %v1220
    %v2346 = vsub.f32 %v2284, %v1322
    %v2347 = vsub.f32 %v2138, %v1224
    %v2348 = vsub.f32 %v2140, %v1226
    %v2349 = vsub.f32 %v2289, %v1327
    %v2350 = vsub.f32 %v2144, %v1228
    %v2351 = vsub.f32 %v2146, %v1230
    %v2352 = vsub.f32 %v2294, %v1330
    %v2353 = vsub.f32 %v2150, %v1234
    %v2354 = vsub.f32 %v2152, %v1236
    %v2355 = vsub.f32 %v2299, %v1335
    %v2356 = vsub.f32 %v2156, %v1238
    %v2357 = vsub.f32 %v2158, %v1240
    %v2358 = vsub.f32 %v2304, %v1338
    %v2359 = vsub.f32 %v2162, %v1244
    %v2360 = vsub.f32 %v2164, %v1246
    %v2361 = vsub.f32 %v2309, %v1343
    %v2362 = vsub.f32 %v2168, %v1248
    %v2363 = vsub.f32 %v2170, %v1250
    %v2364 = vsub.f32 %v2314, %v1346
    %v2365 = vmul.f32 %v2317, %v1416
    %v2366 = vmul.f32 %v2318, %v1416
    %v2367 = vmul.f32 %v2319, %v1416
    %v2368 = vmul.f32 %v2320, %v1417
    %v2369 = vmul.f32 %v2321, %v1417
    %v2370 = vmul.f32 %v2322, %v1417
    %v2371 = vmul.f32 %v2323, %v1418
    %v2372 = vmul.f32 %v2324, %v1418
    %v2373 = vmul.f32 %v2325, %v1418
    %v2374 = vmul.f32 %v2326, %v1419
    %v2375 = vmul.f32 %v2327, %v1419
    %v2376 = vmul.f32 %v2328, %v1419
    %v2377 = vmul.f32 %v2329, %v1420
    %v2378 = vmul.f32 %v2330, %v1420
    %v2379 = vmul.f32 %v2331, %v1420
    %v2380 = vmul.f32 %v2332, %v1421
    %v2381 = vmul.f32 %v2333, %v1421
    %v2382 = vmul.f32 %v2334, %v1421
    %v2383 = vmul.f32 %v2335, %v1422
    %v2384 = vmul.f32 %v2336, %v1422
    %v2385 = vmul.f32 %v2337, %v1422
    %v2386 = vmul.f32 %v2338, %v1423
    %v2387 = vmul.f32 %v2339, %v1423
    %v2388 = vmul.f32 %v2340, %v1423
    %v2389 = vmul.f32 %v2341, %v1424
    %v2390 = vmul.f32 %v2342, %v1424
    %v2391 = vmul.f32 %v2343, %v1424
    %v2392 = vmul.f32 %v2344, %v1425
    %v2393 = vmul.f32 %v2345, %v1425
    %v2394 = vmul.f32 %v2346, %v1425
    %v2395 = vmul.f32 %v2347, %v1426
    %v2396 = vmul.f32 %v2348, %v1426
    %v2397 = vmul.f32 %v2349, %v1426
    %v2398 = vmul.f32 %v2350, %v1427
    %v2399 = vmul.f32 %v2351, %v1427
    %v2400 = vmul.f32 %v2352, %v1427
    %v2401 = vmul.f32 %v2353, %v1428
    %v2402 = vmul.f32 %v2354, %v1428
    %v2403 = vmul.f32 %v2355, %v1428
    %v2404 = vmul.f32 %v2356, %v1429
    %v2405 = vmul.f32 %v2357, %v1429
    %v2406 = vmul.f32 %v2358, %v1429
    %v2407 = vmul.f32 %v2359, %v1430
    %v2408 = vmul.f32 %v2360, %v1430
    %v2409 = vmul.f32 %v2361, %v1430
    %v2410 = vmul.f32 %v2362, %v1431
    %v2411 = vmul.f32 %v2363, %v1431
    %v2412 = vmul.f32 %v2364, %v1431
    %v2413 = vmul.f32 %v2365, %v2365
    %v2414 = vmul.f32 %v2366, %v2366
    %v2415 = vmul.f32 %v2367, %v2367
    %v2416 = vmul.f32 %v2368, %v2368
    %v2417 = vmul.f32 %v2369, %v2369
    %v2418 = vmul.f32 %v2370, %v2370
    %v2419 = vmul.f32 %v2371, %v2371
    %v2420 = vmul.f32 %v2372, %v2372
    %v2421 = vmul.f32 %v2373, %v2373
    %v2422 = vmul.f32 %v2374, %v2374
    %v2423 = vmul.f32 %v2375, %v2375
    %v2424 = vmul.f32 %v2376, %v2376
    %v2425 = vmul.f32 %v2377, %v2377
    %v2426 = vmul.f32 %v2378, %v2378
    %v2427 = vmul.f32 %v2379, %v2379
    %v2428 = vmul.f32 %v2380, %v2380
    %v2429 = vmul.f32 %v2381, %v2381
    %v2430 = vmul.f32 %v2382, %v2382
    %v2431 = vmul.f32 %v2383, %v2383
    %v2432 = vmul.f32 %v2384, %v2384
    %v2433 = vmul.f32 %v2385, %v2385
    %v2434 = vmul.f32 %v2386, %v2386
    %v2435 = vmul.f32 %v2387, %v2387
    %v2436 = vmul.f32 %v2388, %v2388
    %v2437 = vmul.f32 %v2389, %v2389
    %v2438 = vmul.f32 %v2390, %v2390
    %v2439 = vmul.f32 %v2391, %v2391
    %v2440 = vmul.f32 %v2392, %v2392
    %v2441 = vmul.f32 %v2393, %v2393
    %v2442 = vmul.f32 %v2394, %v2394
    %v2443 = vmul.f32 %v2395, %v2395
    %v2444 = vmul.f32 %v2396, %v2396
    %v2445 = vmul.f32 %v2397, %v2397
    %v2446 = vmul.f32 %v2398, %v2398
    %v2447 = vmul.f32 %v2399, %v2399
    %v2448 = vmul.f32 %v2400, %v2400
    %v2449 = vmul.f32 %v2401, %v2401
    %v2450 = vmul.f32 %v2402, %v2402
    %v2451 = vmul.f32 %v2403, %v2403
    %v2452 = vmul.f32 %v2404, %v2404
    %v2453 = vmul.f32 %v2405, %v2405
    %v2454 = vmul.f32 %v2406, %v2406
    %v2455 = vmul.f32 %v2407, %v2407
    %v2456 = vmul.f32 %v2408, %v2408
    %v2457 = vmul.f32 %v2409, %v2409
    %v2458 = vmul.f32 %v2410, %v2410
    %v2459 = vmul.f32 %v2411, %v2411
    %v2460 = vmul.f32 %v2412, %v2412
    %v2461 = vadd.f32 %v2413, %v2414
    %v2462 = vadd.f32 %v2461, %v2415
    %v2463 = vadd.f32 %v2462, %v2416
    %v2464 = vadd.f32 %v2463, %v2417
    %v2465 = vadd.f32 %v2464, %v2418
    %v2466 = vadd.f32 %v2465, %v2419
    %v2467 = vadd.f32 %v2466, %v2420
    %v2468 = vadd.f32 %v2467, %v2421
    %v2469 = vadd.f32 %v2468, %v2422
    %v2470 = vadd.f32 %v2469, %v2423
    %v2471 = vadd.f32 %v2470, %v2424
    %v2472 = vadd.f32 %v2471, %v2425
    %v2473 = vadd.f32 %v2472, %v2426
    %v2474 = vadd.f32 %v2473, %v2427
    %v2475 = vadd.f32 %v2474, %v2428
    %v2476 = vadd.f32 %v2475, %v2429
    %v2477 = vadd.f32 %v2476, %v2430
    %v2478 = vadd.f32 %v2477, %v2431
    %v2479 = vadd.f32 %v2478, %v2432
    %v2480 = vadd.f32 %v2479, %v2433
    %v2481 = vadd.f32 %v2480, %v2434
    %v2482 = vadd.f32 %v2481, %v2435
    %v2483 = vadd.f32 %v2482, %v2436
    %v2484 = vadd.f32 %v2483, %v2437
    %v2485 = vadd.f32 %v2484, %v2438
    %v2486 = vadd.f32 %v2485, %v2439
    %v2487 = vadd.f32 %v2486, %v2440
    %v2488 = vadd.f32 %v2487, %v2441
    %v2489 = vadd.f32 %v2488, %v2442
    %v2490 = vadd.f32 %v2489, %v2443
    %v2491 = vadd.f32 %v2490, %v2444
    %v2492 = vadd.f32 %v2491, %v2445
    %v2493 = vadd.f32 %v2492, %v2446
    %v2494 = vadd.f32 %v2493, %v2447
    %v2495 = vadd.f32 %v2494, %v2448
    %v2496 = vadd.f32 %v2495, %v2449
    %v2497 = vadd.f32 %v2496, %v2450
    %v2498 = vadd.f32 %v2497, %v2451
    %v2499 = vadd.f32 %v2498, %v2452
    %v2500 = vadd.f32 %v2499, %v2453
    %v2501 = vadd.f32 %v2500, %v2454
    %v2502 = vadd.f32 %v2501, %v2455
    %v2503 = vadd.f32 %v2502, %v2456
    %v2504 = vadd.f32 %v2503, %v2457
    %v2505 = vadd.f32 %v2504, %v2458
    %v2506 = vadd.f32 %v2505, %v2459
    %v2507 = vadd.f32 %v2506, %v2460
    %2508 = vadd.xlane.f32.xlu0 %v2507
    %v2509 = vpop.xlane.xlu0 %2508
    %v2510 = vrot.slane %v2509, 4
    %v2511 = vadd.f32 %v2509, %v2510
    %v2512 = vrot.slane %v2511, 2
    %v2513 = vadd.f32 %v2511, %v2512
    %v2514 = vrot.slane %v2513, 1
    %v2515 = vadd.f32 %v2513, %v2514
    %s2516 = vtos %v2515
    %s2517 = sadd.f32 %s2516, 0.0
    %v2518 = vadd.f32 %v2078, 0.0
    %v2519 = vadd.f32 %v2080, 0.0
    %v2520 = vadd.f32 %v2239, 0.0
    %v2521 = vadd.f32 %v2084, 0.0
    %v2522 = vadd.f32 %v2086, 0.0
    %v2523 = vadd.f32 %v2244, 0.0
    %v2524 = vadd.f32 %v2090, 0.0
    %v2525 = vadd.f32 %v2092, 0.0
    %v2526 = vadd.f32 %v2249, 0.0
    %v2527 = vadd.f32 %v2096, 0.0
    %v2528 = vadd.f32 %v2098, 0.0
    %v2529 = vadd.f32 %v2254, 0.0
    %v2530 = vadd.f32 %v2102, 0.0
    %v2531 = vadd.f32 %v2104, 0.0
    %v2532 = vadd.f32 %v2259, 0.0
    %v2533 = vadd.f32 %v2108, 0.0
    %v2534 = vadd.f32 %v2110, 0.0
    %v2535 = vadd.f32 %v2264, 0.0
    %v2536 = vadd.f32 %v2114, 0.0
    %v2537 = vadd.f32 %v2116, 0.0
    %v2538 = vadd.f32 %v2269, 0.0
    %v2539 = vadd.f32 %v2120, 0.0
    %v2540 = vadd.f32 %v2122, 0.0
    %v2541 = vadd.f32 %v2274, 0.0
    %v2542 = vadd.f32 %v2126, 0.0
    %v2543 = vadd.f32 %v2128, 0.0
    %v2544 = vadd.f32 %v2279, 0.0
    %v2545 = vadd.f32 %v2132, 0.0
    %v2546 = vadd.f32 %v2134, 0.0
    %v2547 = vadd.f32 %v2284, 0.0
    %v2548 = vadd.f32 %v2138, 0.0
    %v2549 = vadd.f32 %v2140, 0.0
    %v2550 = vadd.f32 %v2289, 0.0
    %v2551 = vadd.f32 %v2144, 0.0
    %v2552 = vadd.f32 %v2146, 0.0
    %v2553 = vadd.f32 %v2294, 0.0
    %v2554 = vadd.f32 %v2150, 0.0
    %v2555 = vadd.f32 %v2152, 0.0
    %v2556 = vadd.f32 %v2299, 0.0
    %v2557 = vadd.f32 %v2156, 0.0
    %v2558 = vadd.f32 %v2158, 0.0
    %v2559 = vadd.f32 %v2304, 0.0
    %v2560 = vadd.f32 %v2162, 0.0
    %v2561 = vadd.f32 %v2164, 0.0
    %v2562 = vadd.f32 %v2309, 0.0
    %v2563 = vadd.f32 %v2168, 0.0
    %v2564 = vadd.f32 %v2170, 0.0
    %v2565 = vadd.f32 %v2314, 0.0
    %v2566 = vsub.f32 %v1174, %v2078
    %v2567 = vsub.f32 %v1176, %v2080
    %v2568 = vsub.f32 %v1287, %v2239
    %v2569 = vsub.f32 %v1178, %v2084
    %v2570 = vsub.f32 %v1180, %v2086
    %v2571 = vsub.f32 %v1290, %v2244
    %v2572 = vsub.f32 %v1184, %v2090
    %v2573 = vsub.f32 %v1186, %v2092
    %v2574 = vsub.f32 %v1295, %v2249
    %v2575 = vsub.f32 %v1188, %v2096
    %v2576 = vsub.f32 %v1190, %v2098
    %v2577 = vsub.f32 %v1298, %v2254
    %v2578 = vsub.f32 %v1194, %v2102
    %v2579 = vsub.f32 %v1196, %v2104
    %v2580 = vsub.f32 %v1303, %v2259
    %v2581 = vsub.f32 %v1198, %v2108
    %v2582 = vsub.f32 %v1200, %v2110
    %v2583 = vsub.f32 %v1306, %v2264
    %v2584 = vsub.f32 %v1204, %v2114
    %v2585 = vsub.f32 %v1206, %v2116
    %v2586 = vsub.f32 %v1311, %v2269
    %v2587 = vsub.f32 %v1208, %v2120
    %v2588 = vsub.f32 %v1210, %v2122
    %v2589 = vsub.f32 %v1314, %v2274
    %v2590 = vsub.f32 %v1214, %v2126
    %v2591 = vsub.f32 %v1216, %v2128
    %v2592 = vsub.f32 %v1319, %v2279
    %v2593 = vsub.f32 %v1218, %v2132
    %v2594 = vsub.f32 %v1220, %v2134
    %v2595 = vsub.f32 %v1322, %v2284
    %v2596 = vsub.f32 %v1224, %v2138
    %v2597 = vsub.f32 %v1226, %v2140
    %v2598 = vsub.f32 %v1327, %v2289
    %v2599 = vsub.f32 %v1228, %v2144
    %v2600 = vsub.f32 %v1230, %v2146
    %v2601 = vsub.f32 %v1330, %v2294
    %v2602 = vsub.f32 %v1234, %v2150
    %v2603 = vsub.f32 %v1236, %v2152
    %v2604 = vsub.f32 %v1335, %v2299
    %v2605 = vsub.f32 %v1238, %v2156
    %v2606 = vsub.f32 %v1240, %v2158
    %v2607 = vsub.f32 %v1338, %v2304
    %v2608 = vsub.f32 %v1244, %v2162
    %v2609 = vsub.f32 %v1246, %v2164
    %v2610 = vsub.f32 %v1343, %v2309
    %v2611 = vsub.f32 %v1248, %v2168
    %v2612 = vsub.f32 %v1250, %v2170
    %v2613 = vsub.f32 %v1346, %v2314
    %s2614 = scalar_lea.vmem %s7, 1
    %v2615 = vld [vmem:[%s2614] sm:$0x1]
    %v2616 = vpack.c.bf16 %v2569, %v2566
    %v2617 = vpack.c.bf16 %v2570, %v2567
    %v2618 = vpack.c.bf16 %v2571, %v2568
    %v2619 = vpack.c.bf16 %v2575, %v2572
    %v2620 = vpack.c.bf16 %v2576, %v2573
    %v2621 = vpack.c.bf16 %v2577, %v2574
    %v2622 = vpack.c.bf16 %v2581, %v2578
    %v2623 = vpack.c.bf16 %v2582, %v2579
    %v2624 = vpack.c.bf16 %v2583, %v2580
    %v2625 = vpack.c.bf16 %v2587, %v2584
    %v2626 = vpack.c.bf16 %v2588, %v2585
    %v2627 = vpack.c.bf16 %v2589, %v2586
    %v2628 = vpack.c.bf16 %v2593, %v2590
    %v2629 = vpack.c.bf16 %v2594, %v2591
    %v2630 = vpack.c.bf16 %v2595, %v2592
    %v2631 = vpack.c.bf16 %v2599, %v2596
    %v2632 = vpack.c.bf16 %v2600, %v2597
    %v2633 = vpack.c.bf16 %v2601, %v2598
    %v2634 = vpack.c.bf16 %v2605, %v2602
    %v2635 = vpack.c.bf16 %v2606, %v2603
    %v2636 = vpack.c.bf16 %v2607, %v2604
    %v2637 = vpack.c.bf16 %v2611, %v2608
    %v2638 = vpack.c.bf16 %v2612, %v2609
    %v2639 = vpack.c.bf16 %v2613, %v2610
    %s2640 = scalar_lea.vmem [#allocation11], 192
    %v2641 = vld [vmem:[%s2640] sm:$0xf]
    %v2642 = vld [vmem:[%s2640 + $0x4] sm:$0xf]
    %v2643 = vld [vmem:[%s2640 + $0x8] sm:$0xf]
    %v2644 = vld [vmem:[%s2640 + $0xc] sm:$0xf]
    %v2645 = vld [vmem:[%s2640 + $0x10] sm:$0xf]
    %v2646 = vld [vmem:[%s2640 + $0x14] sm:$0xf]
    %v2647 = vld [vmem:[%s2640 + $0x18] sm:$0xf]
    %v2648 = vld [vmem:[%s2640 + $0x1c] sm:$0xf]
    %v2649 = vld [vmem:[%s2640 + $0x20] sm:$0xf]
    %v2650 = vld [vmem:[%s2640 + $0x24] sm:$0xf]
    %v2651 = vld [vmem:[%s2640 + $0x28] sm:$0xf]
    %v2652 = vld [vmem:[%s2640 + $0x2c] sm:$0xf]
    %v2653 = vld [vmem:[%s2640 + $0x30] sm:$0xf]
    %v2654 = vld [vmem:[%s2640 + $0x34] sm:$0xf]
    %v2655 = vld [vmem:[%s2640 + $0x38] sm:$0xf]
    %v2656 = vld [vmem:[%s2640 + $0x3c] sm:$0xf]
    %v2657 = vld [vmem:[%s2640 + $0x40] sm:$0xf]
    %v2658 = vld [vmem:[%s2640 + $0x44] sm:$0xf]
    %v2659 = vld [vmem:[%s2640 + $0x48] sm:$0xf]
    %v2660 = vld [vmem:[%s2640 + $0x4c] sm:$0xf]
    %v2661 = vld [vmem:[%s2640 + $0x50] sm:$0xf]
    %v2662 = vld [vmem:[%s2640 + $0x54] sm:$0xf]
    %v2663 = vld [vmem:[%s2640 + $0x58] sm:$0xf]
    %v2664 = vld [vmem:[%s2640 + $0x5c] sm:$0xf]
    %v2665 = vld [vmem:[%s2640 + $0x60] sm:$0xf]
    %v2666 = vld [vmem:[%s2640 + $0x64] sm:$0xf]
    %v2667 = vld [vmem:[%s2640 + $0x68] sm:$0xf]
    %v2668 = vld [vmem:[%s2640 + $0x6c] sm:$0xf]
    %v2669 = vld [vmem:[%s2640 + $0x70] sm:$0xf]
    %v2670 = vld [vmem:[%s2640 + $0x74] sm:$0xf]
    %v2671 = vld [vmem:[%s2640 + $0x78] sm:$0xf]
    %v2672 = vld [vmem:[%s2640 + $0x7c] sm:$0xf]
    %v2673 = vld [vmem:[%s2640 + $0x80] sm:$0xf]
    %v2674 = vld [vmem:[%s2640 + $0x84] sm:$0xf]
    %v2675 = vld [vmem:[%s2640 + $0x88] sm:$0xf]
    %v2676 = vld [vmem:[%s2640 + $0x8c] sm:$0xf]
    %v2677 = vld [vmem:[%s2640 + $0x90] sm:$0xf]
    %v2678 = vld [vmem:[%s2640 + $0x94] sm:$0xf]
    %v2679 = vld [vmem:[%s2640 + $0x98] sm:$0xf]
    %v2680 = vld [vmem:[%s2640 + $0x9c] sm:$0xf]
    %v2681 = vld [vmem:[%s2640 + $0xa0] sm:$0xf]
    %v2682 = vld [vmem:[%s2640 + $0xa4] sm:$0xf]
    %v2683 = vld [vmem:[%s2640 + $0xa8] sm:$0xf]
    %v2684 = vld [vmem:[%s2640 + $0xac] sm:$0xf]
    %v2685 = vld [vmem:[%s2640 + $0xb0] sm:$0xf]
    %v2686 = vld [vmem:[%s2640 + $0xb4] sm:$0xf]
    %v2687 = vld [vmem:[%s2640 + $0xb8] sm:$0xf]
    %v2688 = vld [vmem:[%s2640 + $0xbc] sm:$0xf]
    %v2737 = vunpack.c.l.b16 %v2641
    %v2738 = vunpack.c.l.b16 %v2642
    %v2739 = vunpack.c.l.b16 %v2643
    %v2740 = vunpack.c.l.b16 %v2644
    %v2741 = vunpack.c.l.b16 %v2645
    %v2742 = vunpack.c.l.b16 %v2646
    %v2743 = vunpack.c.l.b16 %v2647
    %v2744 = vunpack.c.l.b16 %v2648
    %v2745 = vunpack.c.l.b16 %v2649
    %v2746 = vunpack.c.l.b16 %v2650
    %v2747 = vunpack.c.l.b16 %v2651
    %v2748 = vunpack.c.l.b16 %v2652
    %v2749 = vunpack.c.l.b16 %v2653
    %v2750 = vunpack.c.l.b16 %v2654
    %v2751 = vunpack.c.l.b16 %v2655
    %v2752 = vunpack.c.l.b16 %v2656
    %v2753 = vunpack.c.l.b16 %v2657
    %v2754 = vunpack.c.l.b16 %v2658
    %v2755 = vunpack.c.l.b16 %v2659
    %v2756 = vunpack.c.l.b16 %v2660
    %v2757 = vunpack.c.l.b16 %v2661
    %v2758 = vunpack.c.l.b16 %v2662
    %v2759 = vunpack.c.l.b16 %v2663
    %v2760 = vunpack.c.l.b16 %v2664
    %v2761 = vunpack.c.l.b16 %v2665
    %v2762 = vunpack.c.l.b16 %v2666
    %v2763 = vunpack.c.l.b16 %v2667
    %v2764 = vunpack.c.l.b16 %v2668
    %v2765 = vunpack.c.l.b16 %v2669
    %v2766 = vunpack.c.l.b16 %v2670
    %v2767 = vunpack.c.l.b16 %v2671
    %v2768 = vunpack.c.l.b16 %v2672
    %v2769 = vunpack.c.l.b16 %v2673
    %v2770 = vunpack.c.l.b16 %v2674
    %v2771 = vunpack.c.l.b16 %v2675
    %v2772 = vunpack.c.l.b16 %v2676
    %v2773 = vunpack.c.l.b16 %v2677
    %v2774 = vunpack.c.l.b16 %v2678
    %v2775 = vunpack.c.l.b16 %v2679
    %v2776 = vunpack.c.l.b16 %v2680
    %v2777 = vunpack.c.l.b16 %v2681
    %v2778 = vunpack.c.l.b16 %v2682
    %v2779 = vunpack.c.l.b16 %v2683
    %v2780 = vunpack.c.l.b16 %v2684
    %v2781 = vunpack.c.l.b16 %v2685
    %v2782 = vunpack.c.l.b16 %v2686
    %v2783 = vunpack.c.l.b16 %v2687
    %v2784 = vunpack.c.l.b16 %v2688
    %v2785 = vpack.c.b16 %v2738, %v2737
    %v2786 = vpack.c.b16 %v2740, %v2739
    %v2787 = vpack.c.b16 %v2742, %v2741
    %v2788 = vpack.c.b16 %v2744, %v2743
    %v2789 = vpack.c.b16 %v2746, %v2745
    %v2790 = vpack.c.b16 %v2748, %v2747
    %v2791 = vpack.c.b16 %v2750, %v2749
    %v2792 = vpack.c.b16 %v2752, %v2751
    %v2793 = vpack.c.b16 %v2754, %v2753
    %v2794 = vpack.c.b16 %v2756, %v2755
    %v2795 = vpack.c.b16 %v2758, %v2757
    %v2796 = vpack.c.b16 %v2760, %v2759
    %v2797 = vpack.c.b16 %v2762, %v2761
    %v2798 = vpack.c.b16 %v2764, %v2763
    %v2799 = vpack.c.b16 %v2766, %v2765
    %v2800 = vpack.c.b16 %v2768, %v2767
    %v2801 = vpack.c.b16 %v2770, %v2769
    %v2802 = vpack.c.b16 %v2772, %v2771
    %v2803 = vpack.c.b16 %v2774, %v2773
    %v2804 = vpack.c.b16 %v2776, %v2775
    %v2805 = vpack.c.b16 %v2778, %v2777
    %v2806 = vpack.c.b16 %v2780, %v2779
    %v2807 = vpack.c.b16 %v2782, %v2781
    %v2808 = vpack.c.b16 %v2784, %v2783
    %2833 = vmatprep.subr.bf16.mxu0 0
    %2834 = vmatpush1.bf16.msra.mxu0 %v2785
    %2835 = vmatprep.subr.bf16.mxu0 0
    %2836 = vmatpush1.bf16.msra.mxu0 %v2786
    %2837 = vmatprep.subr.bf16.mxu0 0
    %2838 = vmatpush1.bf16.msra.mxu0 %v2787
    %2839 = vmatprep.subr.bf16.mxu0 0
    %2840 = vmatpush1.bf16.msra.mxu0 %v2788
    %2841 = vmatprep.subr.bf16.mxu0 0
    %2842 = vmatpush1.bf16.msra.mxu0 %v2789
    %2843 = vmatprep.subr.bf16.mxu0 0
    %2844 = vmatpush1.bf16.msra.mxu0 %v2790
    %2845 = vmatprep.subr.bf16.mxu0 0
    %2846 = vmatpush1.bf16.msra.mxu0 %v2791
    %2847 = vmatprep.subr.bf16.mxu0 0
    %2848 = vmatpush1.bf16.msra.mxu0 %v2792
    %2849 = vmatprep.subr.bf16.mxu0 0
    %2850 = vmatpush1.bf16.msra.mxu0 %v2793
    %2851 = vmatprep.subr.bf16.mxu0 0
    %2852 = vmatpush1.bf16.msra.mxu0 %v2794
    %2853 = vmatprep.subr.bf16.mxu0 0
    %2854 = vmatpush1.bf16.msra.mxu0 %v2795
    %2855 = vmatprep.subr.bf16.mxu0 0
    %2856 = vmatpush1.bf16.msra.mxu0 %v2796
    %2857 = vmatprep.subr.bf16.mxu0 0
    %2858 = vmatpush1.bf16.msra.mxu0 %v2797
    %2859 = vmatprep.subr.bf16.mxu0 0
    %2860 = vmatpush1.bf16.msra.mxu0 %v2798
    %2861 = vmatprep.subr.bf16.mxu0 0
    %2862 = vmatpush1.bf16.msra.mxu0 %v2799
    %2863 = vmatprep.subr.bf16.mxu0 0
    %2864 = vmatpush1.bf16.msra.mxu0 %v2800
    %2865 = vmatprep.mubr.bf16.mxu0 %v2617
    %2866 = vmatmul.mubr.bf16.gmra.mrb[0].mxu0 %v2616
    %v2867 = vpop.f32.mrb[0].mxu0
    %v2868 = vadd.f32 0.0, %v2867
    %v2869 = vpop.f32.mrb[0].mxu0
    %v2870 = vpop.f32.mrb[0].mxu0
    %v2871 = vadd.f32 0.0, %v2870
    %v2872 = vpop.f32.mrb[0].mxu0
    %2873 = vmatprep.mubr.bf16.mxu0 %v2620
    %2874 = vmatmul.mubr.bf16.gmra.mrb[0].mxu0 %v2619
    %v2875 = vpop.f32.mrb[0].mxu0
    %v2876 = vadd.f32 0.0, %v2875
    %v2877 = vpop.f32.mrb[0].mxu0
    %v2878 = vpop.f32.mrb[0].mxu0
    %v2879 = vadd.f32 0.0, %v2878
    %v2880 = vpop.f32.mrb[0].mxu0
    %2881 = vmatprep.mubr.bf16.mxu0 %v2623
    %2882 = vmatmul.mubr.bf16.gmra.mrb[0].mxu0 %v2622
    %v2883 = vpop.f32.mrb[0].mxu0
    %v2884 = vadd.f32 0.0, %v2883
    %v2885 = vpop.f32.mrb[0].mxu0
    %v2886 = vpop.f32.mrb[0].mxu0
    %v2887 = vadd.f32 0.0, %v2886
    %v2888 = vpop.f32.mrb[0].mxu0
    %2889 = vmatprep.mubr.bf16.mxu0 %v2626
    %2890 = vmatmul.mubr.bf16.gmra.mrb[0].mxu0 %v2625
    %v2891 = vpop.f32.mrb[0].mxu0
    %v2892 = vadd.f32 0.0, %v2891
    %v2893 = vpop.f32.mrb[0].mxu0
    %v2894 = vpop.f32.mrb[0].mxu0
    %v2895 = vadd.f32 0.0, %v2894
    %v2896 = vpop.f32.mrb[0].mxu0
    %2897 = vmatprep.mubr.bf16.mxu0 %v2629
    %2898 = vmatmul.mubr.bf16.gmra.mrb[0].mxu0 %v2628
    %v2899 = vpop.f32.mrb[0].mxu0
    %v2900 = vadd.f32 0.0, %v2899
    %v2901 = vpop.f32.mrb[0].mxu0
    %v2902 = vpop.f32.mrb[0].mxu0
    %v2903 = vadd.f32 0.0, %v2902
    %v2904 = vpop.f32.mrb[0].mxu0
    %2905 = vmatprep.mubr.bf16.mxu0 %v2632
    %2906 = vmatmul.mubr.bf16.gmra.mrb[0].mxu0 %v2631
    %v2907 = vpop.f32.mrb[0].mxu0
    %v2908 = vadd.f32 0.0, %v2907
    %v2909 = vpop.f32.mrb[0].mxu0
    %v2910 = vpop.f32.mrb[0].mxu0
    %v2911 = vadd.f32 0.0, %v2910
    %v2912 = vpop.f32.mrb[0].mxu0
    %2913 = vmatprep.mubr.bf16.mxu0 %v2635
    %2914 = vmatmul.mubr.bf16.gmra.mrb[0].mxu0 %v2634
    %v2915 = vpop.f32.mrb[0].mxu0
    %v2916 = vadd.f32 0.0, %v2915
    %v2917 = vpop.f32.mrb[0].mxu0
    %v2918 = vpop.f32.mrb[0].mxu0
    %v2919 = vadd.f32 0.0, %v2918
    %v2920 = vpop.f32.mrb[0].mxu0
    %2921 = vmatprep.mubr.bf16.mxu0 %v2638
    %2922 = vmatmul.mubr.bf16.gmra.mrb[0].mxu0 %v2637
    %v2923 = vpop.f32.mrb[0].mxu0
    %v2924 = vadd.f32 0.0, %v2923
    %v2925 = vpop.f32.mrb[0].mxu0
    %v2926 = vpop.f32.mrb[0].mxu0
    %v2927 = vadd.f32 0.0, %v2926
    %v2928 = vpop.f32.mrb[0].mxu0
    %2929 = vdwg.mxu0
    %2930 = vmatprep.subr.bf16.mxu0 0
    %2931 = vmatpush1.bf16.msra.mxu0 %v2801
    %2932 = vmatprep.subr.bf16.mxu0 0
    %2933 = vmatpush1.bf16.msra.mxu0 %v2802
    %2934 = vmatprep.subr.bf16.mxu0 0
    %2935 = vmatpush1.bf16.msra.mxu0 %v2803
    %2936 = vmatprep.subr.bf16.mxu0 0
    %2937 = vmatpush1.bf16.msra.mxu0 %v2804
    %2938 = vmatprep.subr.bf16.mxu0 0
    %2939 = vmatpush1.bf16.msra.mxu0 %v2805
    %2940 = vmatprep.subr.bf16.mxu0 0
    %2941 = vmatpush1.bf16.msra.mxu0 %v2806
    %2942 = vmatprep.subr.bf16.mxu0 0
    %2943 = vmatpush1.bf16.msra.mxu0 %v2807
    %2944 = vmatprep.subr.bf16.mxu0 0
    %2945 = vmatpush1.bf16.msra.mxu0 %v2808
    %2946 = vmatprep.subr.bf16.mxu0 0
    %2947 = vmatpush1.bf16.msra.mxu0 0
    %2948 = vmatprep.subr.bf16.mxu0 0
    %2949 = vmatpush1.bf16.msra.mxu0 0
    %2950 = vmatprep.subr.bf16.mxu0 0
    %2951 = vmatpush1.bf16.msra.mxu0 0
    %2952 = vmatprep.subr.bf16.mxu0 0
    %2953 = vmatpush1.bf16.msra.mxu0 0
    %2954 = vmatprep.subr.bf16.mxu0 0
    %2955 = vmatpush1.bf16.msra.mxu0 0
    %2956 = vmatprep.subr.bf16.mxu0 0
    %2957 = vmatpush1.bf16.msra.mxu0 0
    %2958 = vmatprep.subr.bf16.mxu0 0
    %2959 = vmatpush1.bf16.msra.mxu0 0
    %2960 = vmatprep.subr.bf16.mxu0 0
    %2961 = vmatpush1.bf16.msra.mxu0 0
    %2962 = vmatprep.mubr.bf16.mxu0 0
    %2963 = vmatmul.mubr.bf16.gmra.mrb[0].mxu0 %v2618
    %v2964 = vpop.f32.mrb[0].mxu0
    %v2965 = vadd.f32 %v2868, %v2964
    %v2966 = vpop.f32.mrb[0].mxu0
    %v2967 = vpop.f32.mrb[0].mxu0
    %v2968 = vadd.f32 %v2871, %v2967
    %v2969 = vpop.f32.mrb[0].mxu0
    %2970 = vmatprep.mubr.bf16.mxu0 0
    %2971 = vmatmul.mubr.bf16.gmra.mrb[0].mxu0 %v2621
    %v2972 = vpop.f32.mrb[0].mxu0
    %v2973 = vadd.f32 %v2876, %v2972
    %v2974 = vpop.f32.mrb[0].mxu0
    %v2975 = vpop.f32.mrb[0].mxu0
    %v2976 = vadd.f32 %v2879, %v2975
    %v2977 = vpop.f32.mrb[0].mxu0
    %2978 = vmatprep.mubr.bf16.mxu0 0
    %2979 = vmatmul.mubr.bf16.gmra.mrb[0].mxu0 %v2624
    %v2980 = vpop.f32.mrb[0].mxu0
    %v2981 = vadd.f32 %v2884, %v2980
    %v2982 = vpop.f32.mrb[0].mxu0
    %v2983 = vpop.f32.mrb[0].mxu0
    %v2984 = vadd.f32 %v2887, %v2983
    %v2985 = vpop.f32.mrb[0].mxu0
    %2986 = vmatprep.mubr.bf16.mxu0 0
    %2987 = vmatmul.mubr.bf16.gmra.mrb[0].mxu0 %v2627
    %v2988 = vpop.f32.mrb[0].mxu0
    %v2989 = vadd.f32 %v2892, %v2988
    %v2990 = vpop.f32.mrb[0].mxu0
    %v2991 = vpop.f32.mrb[0].mxu0
    %v2992 = vadd.f32 %v2895, %v2991
    %v2993 = vpop.f32.mrb[0].mxu0
    %2994 = vmatprep.mubr.bf16.mxu0 0
    %2995 = vmatmul.mubr.bf16.gmra.mrb[0].mxu0 %v2630
    %v2996 = vpop.f32.mrb[0].mxu0
    %v2997 = vadd.f32 %v2900, %v2996
    %v2998 = vpop.f32.mrb[0].mxu0
    %v2999 = vpop.f32.mrb[0].mxu0
    %v3000 = vadd.f32 %v2903, %v2999
    %v3001 = vpop.f32.mrb[0].mxu0
    %3002 = vmatprep.mubr.bf16.mxu0 0
    %3003 = vmatmul.mubr.bf16.gmra.mrb[0].mxu0 %v2633
    %v3004 = vpop.f32.mrb[0].mxu0
    %v3005 = vadd.f32 %v2908, %v3004
    %v3006 = vpop.f32.mrb[0].mxu0
    %v3007 = vpop.f32.mrb[0].mxu0
    %v3008 = vadd.f32 %v2911, %v3007
    %v3009 = vpop.f32.mrb[0].mxu0
    %3010 = vmatprep.mubr.bf16.mxu0 0
    %3011 = vmatmul.mubr.bf16.gmra.mrb[0].mxu0 %v2636
    %v3012 = vpop.f32.mrb[0].mxu0
    %v3013 = vadd.f32 %v2916, %v3012
    %v3014 = vpop.f32.mrb[0].mxu0
    %v3015 = vpop.f32.mrb[0].mxu0
    %v3016 = vadd.f32 %v2919, %v3015
    %v3017 = vpop.f32.mrb[0].mxu0
    %3018 = vmatprep.mubr.bf16.mxu0 0
    %3019 = vmatmul.mubr.bf16.gmra.mrb[0].mxu0 %v2639
    %v3020 = vpop.f32.mrb[0].mxu0
    %v3021 = vadd.f32 %v2924, %v3020
    %v3022 = vpop.f32.mrb[0].mxu0
    %v3023 = vpop.f32.mrb[0].mxu0
    %v3024 = vadd.f32 %v2927, %v3023
    %v3025 = vpop.f32.mrb[0].mxu0
    %3026 = vdwg.mxu0
    %v3027 = vmul.f32 %v2965, 2.0
    %v3028 = vmul.f32 %v2968, 2.0
    %v3029 = vmul.f32 %v2973, 2.0
    %v3030 = vmul.f32 %v2976, 2.0
    %v3031 = vmul.f32 %v2981, 2.0
    %v3032 = vmul.f32 %v2984, 2.0
    %v3033 = vmul.f32 %v2989, 2.0
    %v3034 = vmul.f32 %v2992, 2.0
    %v3035 = vmul.f32 %v2997, 2.0
    %v3036 = vmul.f32 %v3000, 2.0
    %v3037 = vmul.f32 %v3005, 2.0
    %v3038 = vmul.f32 %v3008, 2.0
    %v3039 = vmul.f32 %v3013, 2.0
    %v3040 = vmul.f32 %v3016, 2.0
    %v3041 = vmul.f32 %v3021, 2.0
    %v3042 = vmul.f32 %v3024, 2.0
    %v3044 = vlaneseq
    %v3045 = vshrl.u32 %v3044, 7
    %v3046 = vsub.s32 0, %v3045
    %v3047 = vrot.slane %v2615, %v3046
    %v3049 = vsub.f32 %v3047, %v3027
    %v3050 = vsub.f32 %v3047, %v3028
    %v3051 = vsub.f32 %v3047, %v3029
    %v3052 = vsub.f32 %v3047, %v3030
    %v3053 = vsub.f32 %v3047, %v3031
    %v3054 = vsub.f32 %v3047, %v3032
    %v3055 = vsub.f32 %v3047, %v3033
    %v3056 = vsub.f32 %v3047, %v3034
    %v3057 = vsub.f32 %v3047, %v3035
    %v3058 = vsub.f32 %v3047, %v3036
    %v3059 = vsub.f32 %v3047, %v3037
    %v3060 = vsub.f32 %v3047, %v3038
    %v3061 = vsub.f32 %v3047, %v3039
    %v3062 = vsub.f32 %v3047, %v3040
    %v3063 = vsub.f32 %v3047, %v3041
    %v3064 = vsub.f32 %v3047, %v3042
    %3065 = vmin.index.xlane.f32.xlu0 %v3049
    %v3066 = vpop.xlane.xlu0 %3065
    %3067 = vmin.index.xlane.f32.xlu0 %v3050
    %v3068 = vpop.xlane.xlu0 %3067
    %3069 = vmin.index.xlane.f32.xlu0 %v3051
    %v3070 = vpop.xlane.xlu0 %3069
    %3071 = vmin.index.xlane.f32.xlu0 %v3052
    %v3072 = vpop.xlane.xlu0 %3071
    %3073 = vmin.index.xlane.f32.xlu0 %v3053
    %v3074 = vpop.xlane.xlu0 %3073
    %3075 = vmin.index.xlane.f32.xlu0 %v3054
    %v3076 = vpop.xlane.xlu0 %3075
    %3077 = vmin.index.xlane.f32.xlu0 %v3055
    %v3078 = vpop.xlane.xlu0 %3077
    %3079 = vmin.index.xlane.f32.xlu0 %v3056
    %v3080 = vpop.xlane.xlu0 %3079
    %3081 = vmin.index.xlane.f32.xlu0 %v3057
    %v3082 = vpop.xlane.xlu0 %3081
    %3083 = vmin.index.xlane.f32.xlu0 %v3058
    %v3084 = vpop.xlane.xlu0 %3083
    %3085 = vmin.index.xlane.f32.xlu0 %v3059
    %v3086 = vpop.xlane.xlu0 %3085
    %3087 = vmin.index.xlane.f32.xlu0 %v3060
    %v3088 = vpop.xlane.xlu0 %3087
    %3089 = vmin.index.xlane.f32.xlu0 %v3061
    %v3090 = vpop.xlane.xlu0 %3089
    %3091 = vmin.index.xlane.f32.xlu0 %v3062
    %v3092 = vpop.xlane.xlu0 %3091
    %3093 = vmin.index.xlane.f32.xlu0 %v3063
    %v3094 = vpop.xlane.xlu0 %3093
    %3095 = vmin.index.xlane.f32.xlu0 %v3064
    %v3096 = vpop.xlane.xlu0 %3095
    %vm3097 = vcmp.eq.s32.totalorder %v1914, %v3066
    %vm3098 = vcmp.eq.s32.totalorder %v1914, %v3068
    %vm3099 = vcmp.eq.s32.totalorder %v1914, %v3070
    %vm3100 = vcmp.eq.s32.totalorder %v1914, %v3072
    %vm3101 = vcmp.eq.s32.totalorder %v1914, %v3074
    %vm3102 = vcmp.eq.s32.totalorder %v1914, %v3076
    %vm3103 = vcmp.eq.s32.totalorder %v1914, %v3078
    %vm3104 = vcmp.eq.s32.totalorder %v1914, %v3080
    %vm3105 = vcmp.eq.s32.totalorder %v1914, %v3082
    %vm3106 = vcmp.eq.s32.totalorder %v1914, %v3084
    %vm3107 = vcmp.eq.s32.totalorder %v1914, %v3086
    %vm3108 = vcmp.eq.s32.totalorder %v1914, %v3088
    %vm3109 = vcmp.eq.s32.totalorder %v1914, %v3090
    %vm3110 = vcmp.eq.s32.totalorder %v1914, %v3092
    %vm3111 = vcmp.eq.s32.totalorder %v1914, %v3094
    %vm3112 = vcmp.eq.s32.totalorder %v1914, %v3096
    %v3113 = vsel %vm3097, 1, 0
    %v3114 = vsel %vm3098, 1, 0
    %v3115 = vsel %vm3099, 1, 0
    %v3116 = vsel %vm3100, 1, 0
    %v3117 = vsel %vm3101, 1, 0
    %v3118 = vsel %vm3102, 1, 0
    %v3119 = vsel %vm3103, 1, 0
    %v3120 = vsel %vm3104, 1, 0
    %v3121 = vsel %vm3105, 1, 0
    %v3122 = vsel %vm3106, 1, 0
    %v3123 = vsel %vm3107, 1, 0
    %v3124 = vsel %vm3108, 1, 0
    %v3125 = vsel %vm3109, 1, 0
    %v3126 = vsel %vm3110, 1, 0
    %v3127 = vsel %vm3111, 1, 0
    %v3128 = vsel %vm3112, 1, 0
    %v3129 = vcvt.s32.f32 %v3113
    %v3130 = vcvt.s32.f32 %v3114
    %v3131 = vcvt.s32.f32 %v3115
    %v3132 = vcvt.s32.f32 %v3116
    %v3133 = vcvt.s32.f32 %v3117
    %v3134 = vcvt.s32.f32 %v3118
    %v3135 = vcvt.s32.f32 %v3119
    %v3136 = vcvt.s32.f32 %v3120
    %v3137 = vcvt.s32.f32 %v3121
    %v3138 = vcvt.s32.f32 %v3122
    %v3139 = vcvt.s32.f32 %v3123
    %v3140 = vcvt.s32.f32 %v3124
    %v3141 = vcvt.s32.f32 %v3125
    %v3142 = vcvt.s32.f32 %v3126
    %v3143 = vcvt.s32.f32 %v3127
    %v3144 = vcvt.s32.f32 %v3128
    %s3145 = scalar_lea.vmem [#allocation12], 384
    %v3146 = vld [vmem:[%s3145] sm:$0xff]
    %v3147 = vld [vmem:[%s3145 + $0x8] sm:$0xff]
    %v3148 = vld [vmem:[%s3145 + $0x10] sm:$0xff]
    %v3149 = vld [vmem:[%s3145 + $0x18] sm:$0xff]
    %v3150 = vld [vmem:[%s3145 + $0x20] sm:$0xff]
    %v3151 = vld [vmem:[%s3145 + $0x28] sm:$0xff]
    %v3152 = vld [vmem:[%s3145 + $0x30] sm:$0xff]
    %v3153 = vld [vmem:[%s3145 + $0x38] sm:$0xff]
    %v3154 = vld [vmem:[%s3145 + $0x40] sm:$0xff]
    %v3155 = vld [vmem:[%s3145 + $0x48] sm:$0xff]
    %v3156 = vld [vmem:[%s3145 + $0x50] sm:$0xff]
    %v3157 = vld [vmem:[%s3145 + $0x58] sm:$0xff]
    %v3158 = vld [vmem:[%s3145 + $0x60] sm:$0xff]
    %v3159 = vld [vmem:[%s3145 + $0x68] sm:$0xff]
    %v3160 = vld [vmem:[%s3145 + $0x70] sm:$0xff]
    %v3161 = vld [vmem:[%s3145 + $0x78] sm:$0xff]
    %v3162 = vld [vmem:[%s3145 + $0x80] sm:$0xff]
    %v3163 = vld [vmem:[%s3145 + $0x88] sm:$0xff]
    %v3164 = vld [vmem:[%s3145 + $0x90] sm:$0xff]
    %v3165 = vld [vmem:[%s3145 + $0x98] sm:$0xff]
    %v3166 = vld [vmem:[%s3145 + $0xa0] sm:$0xff]
    %v3167 = vld [vmem:[%s3145 + $0xa8] sm:$0xff]
    %v3168 = vld [vmem:[%s3145 + $0xb0] sm:$0xff]
    %v3169 = vld [vmem:[%s3145 + $0xb8] sm:$0xff]
    %v3170 = vld [vmem:[%s3145 + $0xc0] sm:$0xff]
    %v3171 = vld [vmem:[%s3145 + $0xc8] sm:$0xff]
    %v3172 = vld [vmem:[%s3145 + $0xd0] sm:$0xff]
    %v3173 = vld [vmem:[%s3145 + $0xd8] sm:$0xff]
    %v3174 = vld [vmem:[%s3145 + $0xe0] sm:$0xff]
    %v3175 = vld [vmem:[%s3145 + $0xe8] sm:$0xff]
    %v3176 = vld [vmem:[%s3145 + $0xf0] sm:$0xff]
    %v3177 = vld [vmem:[%s3145 + $0xf8] sm:$0xff]
    %v3178 = vld [vmem:[%s3145 + $0x100] sm:$0xff]
    %v3179 = vld [vmem:[%s3145 + $0x108] sm:$0xff]
    %v3180 = vld [vmem:[%s3145 + $0x110] sm:$0xff]
    %v3181 = vld [vmem:[%s3145 + $0x118] sm:$0xff]
    %v3182 = vld [vmem:[%s3145 + $0x120] sm:$0xff]
    %v3183 = vld [vmem:[%s3145 + $0x128] sm:$0xff]
    %v3184 = vld [vmem:[%s3145 + $0x130] sm:$0xff]
    %v3185 = vld [vmem:[%s3145 + $0x138] sm:$0xff]
    %v3186 = vld [vmem:[%s3145 + $0x140] sm:$0xff]
    %v3187 = vld [vmem:[%s3145 + $0x148] sm:$0xff]
    %v3188 = vld [vmem:[%s3145 + $0x150] sm:$0xff]
    %v3189 = vld [vmem:[%s3145 + $0x158] sm:$0xff]
    %v3190 = vld [vmem:[%s3145 + $0x160] sm:$0xff]
    %v3191 = vld [vmem:[%s3145 + $0x168] sm:$0xff]
    %v3192 = vld [vmem:[%s3145 + $0x170] sm:$0xff]
    %v3193 = vld [vmem:[%s3145 + $0x178] sm:$0xff]
    %3194 = vmatprep.subr.mxu0 %v3147
    %3195 = vmatpush1.msra.mxu0 %v3146
    %3196 = vmatprep.subr.mxu0 %v3150
    %3197 = vmatpush1.msra.mxu0 %v3149
    %3198 = vmatprep.subr.mxu0 %v3153
    %3199 = vmatpush1.msra.mxu0 %v3152
    %3200 = vmatprep.subr.mxu0 %v3156
    %3201 = vmatpush1.msra.mxu0 %v3155
    %3202 = vmatprep.subr.mxu0 %v3159
    %3203 = vmatpush1.msra.mxu0 %v3158
    %3204 = vmatprep.subr.mxu0 %v3162
    %3205 = vmatpush1.msra.mxu0 %v3161
    %3206 = vmatprep.subr.mxu0 %v3165
    %3207 = vmatpush1.msra.mxu0 %v3164
    %3208 = vmatprep.subr.mxu0 %v3168
    %3209 = vmatpush1.msra.mxu0 %v3167
    %3210 = vmatprep.subr.mxu0 %v3171
    %3211 = vmatpush1.msra.mxu0 %v3170
    %3212 = vmatprep.subr.mxu0 %v3174
    %3213 = vmatpush1.msra.mxu0 %v3173
    %3214 = vmatprep.subr.mxu0 %v3177
    %3215 = vmatpush1.msra.mxu0 %v3176
    %3216 = vmatprep.subr.mxu0 %v3180
    %3217 = vmatpush1.msra.mxu0 %v3179
    %3218 = vmatprep.subr.mxu0 %v3183
    %3219 = vmatpush1.msra.mxu0 %v3182
    %3220 = vmatprep.subr.mxu0 %v3186
    %3221 = vmatpush1.msra.mxu0 %v3185
    %3222 = vmatprep.subr.mxu0 %v3189
    %3223 = vmatpush1.msra.mxu0 %v3188
    %3224 = vmatprep.subr.mxu0 %v3192
    %3225 = vmatpush1.msra.mxu0 %v3191
    %3226 = vmatprep.subr.mxu0 0.0
    %3227 = vmatpush1.msra.mxu0 0.0
    %3228 = vmatprep.subr.mxu0 0.0
    %3229 = vmatpush1.msra.mxu0 0.0
    %3230 = vmatprep.subr.mxu0 0.0
    %3231 = vmatpush1.msra.mxu0 0.0
    %3232 = vmatprep.subr.mxu0 0.0
    %3233 = vmatpush1.msra.mxu0 0.0
    %3234 = vmatprep.subr.mxu0 0.0
    %3235 = vmatpush1.msra.mxu0 0.0
    %3236 = vmatprep.subr.mxu0 0.0
    %3237 = vmatpush1.msra.mxu0 0.0
    %3238 = vmatprep.subr.mxu0 0.0
    %3239 = vmatpush1.msra.mxu0 0.0
    %3240 = vmatprep.subr.mxu0 0.0
    %3241 = vmatpush1.msra.mxu0 0.0
    %3242 = vmatprep.subr.mxu0 0.0
    %3243 = vmatpush1.msra.mxu0 0.0
    %3244 = vmatprep.subr.mxu0 0.0
    %3245 = vmatpush1.msra.mxu0 0.0
    %3246 = vmatprep.subr.mxu0 0.0
    %3247 = vmatpush1.msra.mxu0 0.0
    %3248 = vmatprep.subr.mxu0 0.0
    %3249 = vmatpush1.msra.mxu0 0.0
    %3250 = vmatprep.subr.mxu0 0.0
    %3251 = vmatpush1.msra.mxu0 0.0
    %3252 = vmatprep.subr.mxu0 0.0
    %3253 = vmatpush1.msra.mxu0 0.0
    %3254 = vmatprep.subr.mxu0 0.0
    %3255 = vmatpush1.msra.mxu0 0.0
    %3256 = vmatprep.subr.mxu0 0.0
    %3257 = vmatpush1.msra.mxu0 0.0
    %3258 = vmatprep.mubr.f32.mxu0 0.0
    %3259 = vmatmul.mubr.f32.gmra.mrb[0].mxu0 %v3129
    %v3260 = vpop.f32.mrb[0].mxu0
    %v3261 = vadd.f32 0.0, %v3260
    %v3262 = vpop.f32.mrb[0].mxu0
    %v3263 = vadd.f32 0.0, %v3262
    %3264 = vmatprep.mubr.f32.mxu0 0.0
    %3265 = vmatmul.mubr.f32.gmra.mrb[0].mxu0 %v3130
    %v3266 = vpop.f32.mrb[0].mxu0
    %v3267 = vadd.f32 0.0, %v3266
    %v3268 = vpop.f32.mrb[0].mxu0
    %v3269 = vadd.f32 0.0, %v3268
    %3270 = vmatprep.mubr.f32.mxu0 0.0
    %3271 = vmatmul.mubr.f32.gmra.mrb[0].mxu0 %v3131
    %v3272 = vpop.f32.mrb[0].mxu0
    %v3273 = vadd.f32 0.0, %v3272
    %v3274 = vpop.f32.mrb[0].mxu0
    %v3275 = vadd.f32 0.0, %v3274
    %3276 = vmatprep.mubr.f32.mxu0 0.0
    %3277 = vmatmul.mubr.f32.gmra.mrb[0].mxu0 %v3132
    %v3278 = vpop.f32.mrb[0].mxu0
    %v3279 = vadd.f32 0.0, %v3278
    %v3280 = vpop.f32.mrb[0].mxu0
    %v3281 = vadd.f32 0.0, %v3280
    %3282 = vmatprep.mubr.f32.mxu0 0.0
    %3283 = vmatmul.mubr.f32.gmra.mrb[0].mxu0 %v3133
    %v3284 = vpop.f32.mrb[0].mxu0
    %v3285 = vadd.f32 0.0, %v3284
    %v3286 = vpop.f32.mrb[0].mxu0
    %v3287 = vadd.f32 0.0, %v3286
    %3288 = vmatprep.mubr.f32.mxu0 0.0
    %3289 = vmatmul.mubr.f32.gmra.mrb[0].mxu0 %v3134
    %v3290 = vpop.f32.mrb[0].mxu0
    %v3291 = vadd.f32 0.0, %v3290
    %v3292 = vpop.f32.mrb[0].mxu0
    %v3293 = vadd.f32 0.0, %v3292
    %3294 = vmatprep.mubr.f32.mxu0 0.0
    %3295 = vmatmul.mubr.f32.gmra.mrb[0].mxu0 %v3135
    %v3296 = vpop.f32.mrb[0].mxu0
    %v3297 = vadd.f32 0.0, %v3296
    %v3298 = vpop.f32.mrb[0].mxu0
    %v3299 = vadd.f32 0.0, %v3298
    %3300 = vmatprep.mubr.f32.mxu0 0.0
    %3301 = vmatmul.mubr.f32.gmra.mrb[0].mxu0 %v3136
    %v3302 = vpop.f32.mrb[0].mxu0
    %v3303 = vadd.f32 0.0, %v3302
    %v3304 = vpop.f32.mrb[0].mxu0
    %v3305 = vadd.f32 0.0, %v3304
    %3306 = vmatprep.mubr.f32.mxu0 0.0
    %3307 = vmatmul.mubr.f32.gmra.mrb[0].mxu0 %v3137
    %v3308 = vpop.f32.mrb[0].mxu0
    %v3309 = vadd.f32 0.0, %v3308
    %v3310 = vpop.f32.mrb[0].mxu0
    %v3311 = vadd.f32 0.0, %v3310
    %3312 = vmatprep.mubr.f32.mxu0 0.0
    %3313 = vmatmul.mubr.f32.gmra.mrb[0].mxu0 %v3138
    %v3314 = vpop.f32.mrb[0].mxu0
    %v3315 = vadd.f32 0.0, %v3314
    %v3316 = vpop.f32.mrb[0].mxu0
    %v3317 = vadd.f32 0.0, %v3316
    %3318 = vmatprep.mubr.f32.mxu0 0.0
    %3319 = vmatmul.mubr.f32.gmra.mrb[0].mxu0 %v3139
    %v3320 = vpop.f32.mrb[0].mxu0
    %v3321 = vadd.f32 0.0, %v3320
    %v3322 = vpop.f32.mrb[0].mxu0
    %v3323 = vadd.f32 0.0, %v3322
    %3324 = vmatprep.mubr.f32.mxu0 0.0
    %3325 = vmatmul.mubr.f32.gmra.mrb[0].mxu0 %v3140
    %v3326 = vpop.f32.mrb[0].mxu0
    %v3327 = vadd.f32 0.0, %v3326
    %v3328 = vpop.f32.mrb[0].mxu0
    %v3329 = vadd.f32 0.0, %v3328
    %3330 = vmatprep.mubr.f32.mxu0 0.0
    %3331 = vmatmul.mubr.f32.gmra.mrb[0].mxu0 %v3141
    %v3332 = vpop.f32.mrb[0].mxu0
    %v3333 = vadd.f32 0.0, %v3332
    %v3334 = vpop.f32.mrb[0].mxu0
    %v3335 = vadd.f32 0.0, %v3334
    %3336 = vmatprep.mubr.f32.mxu0 0.0
    %3337 = vmatmul.mubr.f32.gmra.mrb[0].mxu0 %v3142
    %v3338 = vpop.f32.mrb[0].mxu0
    %v3339 = vadd.f32 0.0, %v3338
    %v3340 = vpop.f32.mrb[0].mxu0
    %v3341 = vadd.f32 0.0, %v3340
    %3342 = vmatprep.mubr.f32.mxu0 0.0
    %3343 = vmatmul.mubr.f32.gmra.mrb[0].mxu0 %v3143
    %v3344 = vpop.f32.mrb[0].mxu0
    %v3345 = vadd.f32 0.0, %v3344
    %v3346 = vpop.f32.mrb[0].mxu0
    %v3347 = vadd.f32 0.0, %v3346
    %3348 = vmatprep.mubr.f32.mxu0 0.0
    %3349 = vmatmul.mubr.f32.gmra.mrb[0].mxu0 %v3144
    %v3350 = vpop.f32.mrb[0].mxu0
    %v3351 = vadd.f32 0.0, %v3350
    %v3352 = vpop.f32.mrb[0].mxu0
    %v3353 = vadd.f32 0.0, %v3352
    %3354 = vdwg.mxu0
    %3355 = vmatprep.subr.mxu0 0.0
    %3356 = vmatpush1.msra.mxu0 %v3148
    %3357 = vmatprep.subr.mxu0 0.0
    %3358 = vmatpush1.msra.mxu0 %v3151
    %3359 = vmatprep.subr.mxu0 0.0
    %3360 = vmatpush1.msra.mxu0 %v3154
    %3361 = vmatprep.subr.mxu0 0.0
    %3362 = vmatpush1.msra.mxu0 %v3157
    %3363 = vmatprep.subr.mxu0 0.0
    %3364 = vmatpush1.msra.mxu0 %v3160
    %3365 = vmatprep.subr.mxu0 0.0
    %3366 = vmatpush1.msra.mxu0 %v3163
    %3367 = vmatprep.subr.mxu0 0.0
    %3368 = vmatpush1.msra.mxu0 %v3166
    %3369 = vmatprep.subr.mxu0 0.0
    %3370 = vmatpush1.msra.mxu0 %v3169
    %3371 = vmatprep.subr.mxu0 0.0
    %3372 = vmatpush1.msra.mxu0 %v3172
    %3373 = vmatprep.subr.mxu0 0.0
    %3374 = vmatpush1.msra.mxu0 %v3175
    %3375 = vmatprep.subr.mxu0 0.0
    %3376 = vmatpush1.msra.mxu0 %v3178
    %3377 = vmatprep.subr.mxu0 0.0
    %3378 = vmatpush1.msra.mxu0 %v3181
    %3379 = vmatprep.subr.mxu0 0.0
    %3380 = vmatpush1.msra.mxu0 %v3184
    %3381 = vmatprep.subr.mxu0 0.0
    %3382 = vmatpush1.msra.mxu0 %v3187
    %3383 = vmatprep.subr.mxu0 0.0
    %3384 = vmatpush1.msra.mxu0 %v3190
    %3385 = vmatprep.subr.mxu0 0.0
    %3386 = vmatpush1.msra.mxu0 %v3193
    %3387 = vmatprep.subr.mxu0 0.0
    %3388 = vmatpush1.msra.mxu0 0.0
    %3389 = vmatprep.subr.mxu0 0.0
    %3390 = vmatpush1.msra.mxu0 0.0
    %3391 = vmatprep.subr.mxu0 0.0
    %3392 = vmatpush1.msra.mxu0 0.0
    %3393 = vmatprep.subr.mxu0 0.0
    %3394 = vmatpush1.msra.mxu0 0.0
    %3395 = vmatprep.subr.mxu0 0.0
    %3396 = vmatpush1.msra.mxu0 0.0
    %3397 = vmatprep.subr.mxu0 0.0
    %3398 = vmatpush1.msra.mxu0 0.0
    %3399 = vmatprep.subr.mxu0 0.0
    %3400 = vmatpush1.msra.mxu0 0.0
    %3401 = vmatprep.subr.mxu0 0.0
    %3402 = vmatpush1.msra.mxu0 0.0
    %3403 = vmatprep.subr.mxu0 0.0
    %3404 = vmatpush1.msra.mxu0 0.0
    %3405 = vmatprep.subr.mxu0 0.0
    %3406 = vmatpush1.msra.mxu0 0.0
    %3407 = vmatprep.subr.mxu0 0.0
    %3408 = vmatpush1.msra.mxu0 0.0
    %3409 = vmatprep.subr.mxu0 0.0
    %3410 = vmatpush1.msra.mxu0 0.0
    %3411 = vmatprep.subr.mxu0 0.0
    %3412 = vmatpush1.msra.mxu0 0.0
    %3413 = vmatprep.subr.mxu0 0.0
    %3414 = vmatpush1.msra.mxu0 0.0
    %3415 = vmatprep.subr.mxu0 0.0
    %3416 = vmatpush1.msra.mxu0 0.0
    %3417 = vmatprep.subr.mxu0 0.0
    %3418 = vmatpush1.msra.mxu0 0.0
    %3419 = vmatprep.mubr.f32.mxu0 0.0
    %3420 = vmatmul.mubr.f32.gmra.mrb[0].mxu0 %v3129
    %v3421 = vpop.f32.mrb[0].mxu0
    %v3422 = vadd.f32 0.0, %v3421
    %v3423 = vpop.f32.mrb[0].mxu0
    %3424 = vmatprep.mubr.f32.mxu0 0.0
    %3425 = vmatmul.mubr.f32.gmra.mrb[0].mxu0 %v3130
    %v3426 = vpop.f32.mrb[0].mxu0
    %v3427 = vadd.f32 0.0, %v3426
    %v3428 = vpop.f32.mrb[0].mxu0
    %3429 = vmatprep.mubr.f32.mxu0 0.0
    %3430 = vmatmul.mubr.f32.gmra.mrb[0].mxu0 %v3131
    %v3431 = vpop.f32.mrb[0].mxu0
    %v3432 = vadd.f32 0.0, %v3431
    %v3433 = vpop.f32.mrb[0].mxu0
    %3434 = vmatprep.mubr.f32.mxu0 0.0
    %3435 = vmatmul.mubr.f32.gmra.mrb[0].mxu0 %v3132
    %v3436 = vpop.f32.mrb[0].mxu0
    %v3437 = vadd.f32 0.0, %v3436
    %v3438 = vpop.f32.mrb[0].mxu0
    %3439 = vmatprep.mubr.f32.mxu0 0.0
    %3440 = vmatmul.mubr.f32.gmra.mrb[0].mxu0 %v3133
    %v3441 = vpop.f32.mrb[0].mxu0
    %v3442 = vadd.f32 0.0, %v3441
    %v3443 = vpop.f32.mrb[0].mxu0
    %3444 = vmatprep.mubr.f32.mxu0 0.0
    %3445 = vmatmul.mubr.f32.gmra.mrb[0].mxu0 %v3134
    %v3446 = vpop.f32.mrb[0].mxu0
    %v3447 = vadd.f32 0.0, %v3446
    %v3448 = vpop.f32.mrb[0].mxu0
    %3449 = vmatprep.mubr.f32.mxu0 0.0
    %3450 = vmatmul.mubr.f32.gmra.mrb[0].mxu0 %v3135
    %v3451 = vpop.f32.mrb[0].mxu0
    %v3452 = vadd.f32 0.0, %v3451
    %v3453 = vpop.f32.mrb[0].mxu0
    %3454 = vmatprep.mubr.f32.mxu0 0.0
    %3455 = vmatmul.mubr.f32.gmra.mrb[0].mxu0 %v3136
    %v3456 = vpop.f32.mrb[0].mxu0
    %v3457 = vadd.f32 0.0, %v3456
    %v3458 = vpop.f32.mrb[0].mxu0
    %3459 = vmatprep.mubr.f32.mxu0 0.0
    %3460 = vmatmul.mubr.f32.gmra.mrb[0].mxu0 %v3137
    %v3461 = vpop.f32.mrb[0].mxu0
    %v3462 = vadd.f32 0.0, %v3461
    %v3463 = vpop.f32.mrb[0].mxu0
    %3464 = vmatprep.mubr.f32.mxu0 0.0
    %3465 = vmatmul.mubr.f32.gmra.mrb[0].mxu0 %v3138
    %v3466 = vpop.f32.mrb[0].mxu0
    %v3467 = vadd.f32 0.0, %v3466
    %v3468 = vpop.f32.mrb[0].mxu0
    %3469 = vmatprep.mubr.f32.mxu0 0.0
    %3470 = vmatmul.mubr.f32.gmra.mrb[0].mxu0 %v3139
    %v3471 = vpop.f32.mrb[0].mxu0
    %v3472 = vadd.f32 0.0, %v3471
    %v3473 = vpop.f32.mrb[0].mxu0
    %3474 = vmatprep.mubr.f32.mxu0 0.0
    %3475 = vmatmul.mubr.f32.gmra.mrb[0].mxu0 %v3140
    %v3476 = vpop.f32.mrb[0].mxu0
    %v3477 = vadd.f32 0.0, %v3476
    %v3478 = vpop.f32.mrb[0].mxu0
    %3479 = vmatprep.mubr.f32.mxu0 0.0
    %3480 = vmatmul.mubr.f32.gmra.mrb[0].mxu0 %v3141
    %v3481 = vpop.f32.mrb[0].mxu0
    %v3482 = vadd.f32 0.0, %v3481
    %v3483 = vpop.f32.mrb[0].mxu0
    %3484 = vmatprep.mubr.f32.mxu0 0.0
    %3485 = vmatmul.mubr.f32.gmra.mrb[0].mxu0 %v3142
    %v3486 = vpop.f32.mrb[0].mxu0
    %v3487 = vadd.f32 0.0, %v3486
    %v3488 = vpop.f32.mrb[0].mxu0
    %3489 = vmatprep.mubr.f32.mxu0 0.0
    %3490 = vmatmul.mubr.f32.gmra.mrb[0].mxu0 %v3143
    %v3491 = vpop.f32.mrb[0].mxu0
    %v3492 = vadd.f32 0.0, %v3491
    %v3493 = vpop.f32.mrb[0].mxu0
    %3494 = vmatprep.mubr.f32.mxu0 0.0
    %3495 = vmatmul.mubr.f32.gmra.mrb[0].mxu0 %v3144
    %v3496 = vpop.f32.mrb[0].mxu0
    %v3497 = vadd.f32 0.0, %v3496
    %v3498 = vpop.f32.mrb[0].mxu0
    %3499 = vdwg.mxu0
    %v3500 = vsub.f32 %v3261, %v2566
    %v3501 = vsub.f32 %v3263, %v2567
    %v3502 = vsub.f32 %v3422, %v2568
    %v3503 = vsub.f32 %v3267, %v2569
    %v3504 = vsub.f32 %v3269, %v2570
    %v3505 = vsub.f32 %v3427, %v2571
    %v3506 = vsub.f32 %v3273, %v2572
    %v3507 = vsub.f32 %v3275, %v2573
    %v3508 = vsub.f32 %v3432, %v2574
    %v3509 = vsub.f32 %v3279, %v2575
    %v3510 = vsub.f32 %v3281, %v2576
    %v3511 = vsub.f32 %v3437, %v2577
    %v3512 = vsub.f32 %v3285, %v2578
    %v3513 = vsub.f32 %v3287, %v2579
    %v3514 = vsub.f32 %v3442, %v2580
    %v3515 = vsub.f32 %v3291, %v2581
    %v3516 = vsub.f32 %v3293, %v2582
    %v3517 = vsub.f32 %v3447, %v2583
    %v3518 = vsub.f32 %v3297, %v2584
    %v3519 = vsub.f32 %v3299, %v2585
    %v3520 = vsub.f32 %v3452, %v2586
    %v3521 = vsub.f32 %v3303, %v2587
    %v3522 = vsub.f32 %v3305, %v2588
    %v3523 = vsub.f32 %v3457, %v2589
    %v3524 = vsub.f32 %v3309, %v2590
    %v3525 = vsub.f32 %v3311, %v2591
    %v3526 = vsub.f32 %v3462, %v2592
    %v3527 = vsub.f32 %v3315, %v2593
    %v3528 = vsub.f32 %v3317, %v2594
    %v3529 = vsub.f32 %v3467, %v2595
    %v3530 = vsub.f32 %v3321, %v2596
    %v3531 = vsub.f32 %v3323, %v2597
    %v3532 = vsub.f32 %v3472, %v2598
    %v3533 = vsub.f32 %v3327, %v2599
    %v3534 = vsub.f32 %v3329, %v2600
    %v3535 = vsub.f32 %v3477, %v2601
    %v3536 = vsub.f32 %v3333, %v2602
    %v3537 = vsub.f32 %v3335, %v2603
    %v3538 = vsub.f32 %v3482, %v2604
    %v3539 = vsub.f32 %v3339, %v2605
    %v3540 = vsub.f32 %v3341, %v2606
    %v3541 = vsub.f32 %v3487, %v2607
    %v3542 = vsub.f32 %v3345, %v2608
    %v3543 = vsub.f32 %v3347, %v2609
    %v3544 = vsub.f32 %v3492, %v2610
    %v3545 = vsub.f32 %v3351, %v2611
    %v3546 = vsub.f32 %v3353, %v2612
    %v3547 = vsub.f32 %v3497, %v2613
    %v3548 = vmul.f32 %v3500, %v1416
    %v3549 = vmul.f32 %v3501, %v1416
    %v3550 = vmul.f32 %v3502, %v1416
    %v3551 = vmul.f32 %v3503, %v1417
    %v3552 = vmul.f32 %v3504, %v1417
    %v3553 = vmul.f32 %v3505, %v1417
    %v3554 = vmul.f32 %v3506, %v1418
    %v3555 = vmul.f32 %v3507, %v1418
    %v3556 = vmul.f32 %v3508, %v1418
    %v3557 = vmul.f32 %v3509, %v1419
    %v3558 = vmul.f32 %v3510, %v1419
    %v3559 = vmul.f32 %v3511, %v1419
    %v3560 = vmul.f32 %v3512, %v1420
    %v3561 = vmul.f32 %v3513, %v1420
    %v3562 = vmul.f32 %v3514, %v1420
    %v3563 = vmul.f32 %v3515, %v1421
    %v3564 = vmul.f32 %v3516, %v1421
    %v3565 = vmul.f32 %v3517, %v1421
    %v3566 = vmul.f32 %v3518, %v1422
    %v3567 = vmul.f32 %v3519, %v1422
    %v3568 = vmul.f32 %v3520, %v1422
    %v3569 = vmul.f32 %v3521, %v1423
    %v3570 = vmul.f32 %v3522, %v1423
    %v3571 = vmul.f32 %v3523, %v1423
    %v3572 = vmul.f32 %v3524, %v1424
    %v3573 = vmul.f32 %v3525, %v1424
    %v3574 = vmul.f32 %v3526, %v1424
    %v3575 = vmul.f32 %v3527, %v1425
    %v3576 = vmul.f32 %v3528, %v1425
    %v3577 = vmul.f32 %v3529, %v1425
    %v3578 = vmul.f32 %v3530, %v1426
    %v3579 = vmul.f32 %v3531, %v1426
    %v3580 = vmul.f32 %v3532, %v1426
    %v3581 = vmul.f32 %v3533, %v1427
    %v3582 = vmul.f32 %v3534, %v1427
    %v3583 = vmul.f32 %v3535, %v1427
    %v3584 = vmul.f32 %v3536, %v1428
    %v3585 = vmul.f32 %v3537, %v1428
    %v3586 = vmul.f32 %v3538, %v1428
    %v3587 = vmul.f32 %v3539, %v1429
    %v3588 = vmul.f32 %v3540, %v1429
    %v3589 = vmul.f32 %v3541, %v1429
    %v3590 = vmul.f32 %v3542, %v1430
    %v3591 = vmul.f32 %v3543, %v1430
    %v3592 = vmul.f32 %v3544, %v1430
    %v3593 = vmul.f32 %v3545, %v1431
    %v3594 = vmul.f32 %v3546, %v1431
    %v3595 = vmul.f32 %v3547, %v1431
    %v3596 = vmul.f32 %v3548, %v3548
    %v3597 = vmul.f32 %v3549, %v3549
    %v3598 = vmul.f32 %v3550, %v3550
    %v3599 = vmul.f32 %v3551, %v3551
    %v3600 = vmul.f32 %v3552, %v3552
    %v3601 = vmul.f32 %v3553, %v3553
    %v3602 = vmul.f32 %v3554, %v3554
    %v3603 = vmul.f32 %v3555, %v3555
    %v3604 = vmul.f32 %v3556, %v3556
    %v3605 = vmul.f32 %v3557, %v3557
    %v3606 = vmul.f32 %v3558, %v3558
    %v3607 = vmul.f32 %v3559, %v3559
    %v3608 = vmul.f32 %v3560, %v3560
    %v3609 = vmul.f32 %v3561, %v3561
    %v3610 = vmul.f32 %v3562, %v3562
    %v3611 = vmul.f32 %v3563, %v3563
    %v3612 = vmul.f32 %v3564, %v3564
    %v3613 = vmul.f32 %v3565, %v3565
    %v3614 = vmul.f32 %v3566, %v3566
    %v3615 = vmul.f32 %v3567, %v3567
    %v3616 = vmul.f32 %v3568, %v3568
    %v3617 = vmul.f32 %v3569, %v3569
    %v3618 = vmul.f32 %v3570, %v3570
    %v3619 = vmul.f32 %v3571, %v3571
    %v3620 = vmul.f32 %v3572, %v3572
    %v3621 = vmul.f32 %v3573, %v3573
    %v3622 = vmul.f32 %v3574, %v3574
    %v3623 = vmul.f32 %v3575, %v3575
    %v3624 = vmul.f32 %v3576, %v3576
    %v3625 = vmul.f32 %v3577, %v3577
    %v3626 = vmul.f32 %v3578, %v3578
    %v3627 = vmul.f32 %v3579, %v3579
    %v3628 = vmul.f32 %v3580, %v3580
    %v3629 = vmul.f32 %v3581, %v3581
    %v3630 = vmul.f32 %v3582, %v3582
    %v3631 = vmul.f32 %v3583, %v3583
    %v3632 = vmul.f32 %v3584, %v3584
    %v3633 = vmul.f32 %v3585, %v3585
    %v3634 = vmul.f32 %v3586, %v3586
    %v3635 = vmul.f32 %v3587, %v3587
    %v3636 = vmul.f32 %v3588, %v3588
    %v3637 = vmul.f32 %v3589, %v3589
    %v3638 = vmul.f32 %v3590, %v3590
    %v3639 = vmul.f32 %v3591, %v3591
    %v3640 = vmul.f32 %v3592, %v3592
    %v3641 = vmul.f32 %v3593, %v3593
    %v3642 = vmul.f32 %v3594, %v3594
    %v3643 = vmul.f32 %v3595, %v3595
    %v3644 = vadd.f32 %v3596, %v3597
    %v3645 = vadd.f32 %v3644, %v3598
    %v3646 = vadd.f32 %v3645, %v3599
    %v3647 = vadd.f32 %v3646, %v3600
    %v3648 = vadd.f32 %v3647, %v3601
    %v3649 = vadd.f32 %v3648, %v3602
    %v3650 = vadd.f32 %v3649, %v3603
    %v3651 = vadd.f32 %v3650, %v3604
    %v3652 = vadd.f32 %v3651, %v3605
    %v3653 = vadd.f32 %v3652, %v3606
    %v3654 = vadd.f32 %v3653, %v3607
    %v3655 = vadd.f32 %v3654, %v3608
    %v3656 = vadd.f32 %v3655, %v3609
    %v3657 = vadd.f32 %v3656, %v3610
    %v3658 = vadd.f32 %v3657, %v3611
    %v3659 = vadd.f32 %v3658, %v3612
    %v3660 = vadd.f32 %v3659, %v3613
    %v3661 = vadd.f32 %v3660, %v3614
    %v3662 = vadd.f32 %v3661, %v3615
    %v3663 = vadd.f32 %v3662, %v3616
    %v3664 = vadd.f32 %v3663, %v3617
    %v3665 = vadd.f32 %v3664, %v3618
    %v3666 = vadd.f32 %v3665, %v3619
    %v3667 = vadd.f32 %v3666, %v3620
    %v3668 = vadd.f32 %v3667, %v3621
    %v3669 = vadd.f32 %v3668, %v3622
    %v3670 = vadd.f32 %v3669, %v3623
    %v3671 = vadd.f32 %v3670, %v3624
    %v3672 = vadd.f32 %v3671, %v3625
    %v3673 = vadd.f32 %v3672, %v3626
    %v3674 = vadd.f32 %v3673, %v3627
    %v3675 = vadd.f32 %v3674, %v3628
    %v3676 = vadd.f32 %v3675, %v3629
    %v3677 = vadd.f32 %v3676, %v3630
    %v3678 = vadd.f32 %v3677, %v3631
    %v3679 = vadd.f32 %v3678, %v3632
    %v3680 = vadd.f32 %v3679, %v3633
    %v3681 = vadd.f32 %v3680, %v3634
    %v3682 = vadd.f32 %v3681, %v3635
    %v3683 = vadd.f32 %v3682, %v3636
    %v3684 = vadd.f32 %v3683, %v3637
    %v3685 = vadd.f32 %v3684, %v3638
    %v3686 = vadd.f32 %v3685, %v3639
    %v3687 = vadd.f32 %v3686, %v3640
    %v3688 = vadd.f32 %v3687, %v3641
    %v3689 = vadd.f32 %v3688, %v3642
    %v3690 = vadd.f32 %v3689, %v3643
    %3691 = vadd.xlane.f32.xlu0 %v3690
    %v3692 = vpop.xlane.xlu0 %3691
    %v3693 = vrot.slane %v3692, 4
    %v3694 = vadd.f32 %v3692, %v3693
    %v3695 = vrot.slane %v3694, 2
    %v3696 = vadd.f32 %v3694, %v3695
    %v3697 = vrot.slane %v3696, 1
    %v3698 = vadd.f32 %v3696, %v3697
    %s3699 = vtos %v3698
    %s3700 = sadd.f32 %s2517, %s3699
    %v3701 = vadd.f32 %v2518, %v3261
    %v3702 = vadd.f32 %v2519, %v3263
    %v3703 = vadd.f32 %v2520, %v3422
    %v3704 = vadd.f32 %v2521, %v3267
    %v3705 = vadd.f32 %v2522, %v3269
    %v3706 = vadd.f32 %v2523, %v3427
    %v3707 = vadd.f32 %v2524, %v3273
    %v3708 = vadd.f32 %v2525, %v3275
    %v3709 = vadd.f32 %v2526, %v3432
    %v3710 = vadd.f32 %v2527, %v3279
    %v3711 = vadd.f32 %v2528, %v3281
    %v3712 = vadd.f32 %v2529, %v3437
    %v3713 = vadd.f32 %v2530, %v3285
    %v3714 = vadd.f32 %v2531, %v3287
    %v3715 = vadd.f32 %v2532, %v3442
    %v3716 = vadd.f32 %v2533, %v3291
    %v3717 = vadd.f32 %v2534, %v3293
    %v3718 = vadd.f32 %v2535, %v3447
    %v3719 = vadd.f32 %v2536, %v3297
    %v3720 = vadd.f32 %v2537, %v3299
    %v3721 = vadd.f32 %v2538, %v3452
    %v3722 = vadd.f32 %v2539, %v3303
    %v3723 = vadd.f32 %v2540, %v3305
    %v3724 = vadd.f32 %v2541, %v3457
    %v3725 = vadd.f32 %v2542, %v3309
    %v3726 = vadd.f32 %v2543, %v3311
    %v3727 = vadd.f32 %v2544, %v3462
    %v3728 = vadd.f32 %v2545, %v3315
    %v3729 = vadd.f32 %v2546, %v3317
    %v3730 = vadd.f32 %v2547, %v3467
    %v3731 = vadd.f32 %v2548, %v3321
    %v3732 = vadd.f32 %v2549, %v3323
    %v3733 = vadd.f32 %v2550, %v3472
    %v3734 = vadd.f32 %v2551, %v3327
    %v3735 = vadd.f32 %v2552, %v3329
    %v3736 = vadd.f32 %v2553, %v3477
    %v3737 = vadd.f32 %v2554, %v3333
    %v3738 = vadd.f32 %v2555, %v3335
    %v3739 = vadd.f32 %v2556, %v3482
    %v3740 = vadd.f32 %v2557, %v3339
    %v3741 = vadd.f32 %v2558, %v3341
    %v3742 = vadd.f32 %v2559, %v3487
    %v3743 = vadd.f32 %v2560, %v3345
    %v3744 = vadd.f32 %v2561, %v3347
    %v3745 = vadd.f32 %v2562, %v3492
    %v3746 = vadd.f32 %v2563, %v3351
    %v3747 = vadd.f32 %v2564, %v3353
    %v3748 = vadd.f32 %v2565, %v3497
    %3749 = vst [vmem:[#allocation18] sm:$0xff] %v3701
    %3750 = vst [vmem:[#allocation18 + $0x8] sm:$0xff] %v3702
    %3751 = vst [vmem:[#allocation18 + $0x10] sm:$0xff] %v3703
    %3752 = vst [vmem:[#allocation18 + $0x18] sm:$0xff] %v3704
    %3753 = vst [vmem:[#allocation18 + $0x20] sm:$0xff] %v3705
    %3754 = vst [vmem:[#allocation18 + $0x28] sm:$0xff] %v3706
    %3755 = vst [vmem:[#allocation18 + $0x30] sm:$0xff] %v3707
    %3756 = vst [vmem:[#allocation18 + $0x38] sm:$0xff] %v3708
    %3757 = vst [vmem:[#allocation18 + $0x40] sm:$0xff] %v3709
    %3758 = vst [vmem:[#allocation18 + $0x48] sm:$0xff] %v3710
    %3759 = vst [vmem:[#allocation18 + $0x50] sm:$0xff] %v3711
    %3760 = vst [vmem:[#allocation18 + $0x58] sm:$0xff] %v3712
    %3761 = vst [vmem:[#allocation18 + $0x60] sm:$0xff] %v3713
    %3762 = vst [vmem:[#allocation18 + $0x68] sm:$0xff] %v3714
    %3763 = vst [vmem:[#allocation18 + $0x70] sm:$0xff] %v3715
    %3764 = vst [vmem:[#allocation18 + $0x78] sm:$0xff] %v3716
    %3765 = vst [vmem:[#allocation18 + $0x80] sm:$0xff] %v3717
    %3766 = vst [vmem:[#allocation18 + $0x88] sm:$0xff] %v3718
    %3767 = vst [vmem:[#allocation18 + $0x90] sm:$0xff] %v3719
    %3768 = vst [vmem:[#allocation18 + $0x98] sm:$0xff] %v3720
    %3769 = vst [vmem:[#allocation18 + $0xa0] sm:$0xff] %v3721
    %3770 = vst [vmem:[#allocation18 + $0xa8] sm:$0xff] %v3722
    %3771 = vst [vmem:[#allocation18 + $0xb0] sm:$0xff] %v3723
    %3772 = vst [vmem:[#allocation18 + $0xb8] sm:$0xff] %v3724
    %3773 = vst [vmem:[#allocation18 + $0xc0] sm:$0xff] %v3725
    %3774 = vst [vmem:[#allocation18 + $0xc8] sm:$0xff] %v3726
    %3775 = vst [vmem:[#allocation18 + $0xd0] sm:$0xff] %v3727
    %3776 = vst [vmem:[#allocation18 + $0xd8] sm:$0xff] %v3728
    %3777 = vst [vmem:[#allocation18 + $0xe0] sm:$0xff] %v3729
    %3778 = vst [vmem:[#allocation18 + $0xe8] sm:$0xff] %v3730
    %3779 = vst [vmem:[#allocation18 + $0xf0] sm:$0xff] %v3731
    %3780 = vst [vmem:[#allocation18 + $0xf8] sm:$0xff] %v3732
    %3781 = vst [vmem:[#allocation18 + $0x100] sm:$0xff] %v3733
    %3782 = vst [vmem:[#allocation18 + $0x108] sm:$0xff] %v3734
    %3783 = vst [vmem:[#allocation18 + $0x110] sm:$0xff] %v3735
    %3784 = vst [vmem:[#allocation18 + $0x118] sm:$0xff] %v3736
    %3785 = vst [vmem:[#allocation18 + $0x120] sm:$0xff] %v3737
    %3786 = vst [vmem:[#allocation18 + $0x128] sm:$0xff] %v3738
    %3787 = vst [vmem:[#allocation18 + $0x130] sm:$0xff] %v3739
    %3788 = vst [vmem:[#allocation18 + $0x138] sm:$0xff] %v3740
    %3789 = vst [vmem:[#allocation18 + $0x140] sm:$0xff] %v3741
    %3790 = vst [vmem:[#allocation18 + $0x148] sm:$0xff] %v3742
    %3791 = vst [vmem:[#allocation18 + $0x150] sm:$0xff] %v3743
    %3792 = vst [vmem:[#allocation18 + $0x158] sm:$0xff] %v3744
    %3793 = vst [vmem:[#allocation18 + $0x160] sm:$0xff] %v3745
    %3794 = vst [vmem:[#allocation18 + $0x168] sm:$0xff] %v3746
    %3795 = vst [vmem:[#allocation18 + $0x170] sm:$0xff] %v3747
    %3796 = vst [vmem:[#allocation18 + $0x178] sm:$0xff] %v3748
    %v3797 = vlaneseq
    %v3798 = vshrl.u32 %v3797, 7
    %v3799 = vsub.s32 %v1914, %v3798
    %v3800 = vrot.slane %v1882, %v3799
    %v3801 = vadd.s32 %v1914, 4294967288
    %v3802 = vlaneseq
    %v3803 = vshrl.u32 %v3802, 7
    %v3804 = vsub.s32 %v3801, %v3803
    %v3805 = vrot.slane %v1884, %v3804
    %vm3806 = vcmask 130112
    %v3807 = vsel %vm3806, %v3805, %v3800
    %v3808 = vadd.s32 %v1914, 4294967280
    %v3809 = vlaneseq
    %v3810 = vshrl.u32 %v3809, 7
    %v3811 = vsub.s32 %v3808, %v3810
    %v3812 = vrot.slane %v1886, %v3811
    %vm3813 = vcmask 195712
    %v3814 = vsel %vm3813, %v3812, %v3807
    %v3815 = vadd.s32 %v1914, 4294967272
    %v3816 = vlaneseq
    %v3817 = vshrl.u32 %v3816, 7
    %v3818 = vsub.s32 %v3815, %v3817
    %v3819 = vrot.slane %v1888, %v3818
    %vm3820 = vcmask 261312
    %v3821 = vsel %vm3820, %v3819, %v3814
    %v3822 = vadd.s32 %v1914, 4294967264
    %v3823 = vlaneseq
    %v3824 = vshrl.u32 %v3823, 7
    %v3825 = vsub.s32 %v3822, %v3824
    %v3826 = vrot.slane %v1890, %v3825
    %vm3827 = vcmask 326912
    %v3828 = vsel %vm3827, %v3826, %v3821
    %v3829 = vadd.s32 %v1914, 4294967256
    %v3830 = vlaneseq
    %v3831 = vshrl.u32 %v3830, 7
    %v3832 = vsub.s32 %v3829, %v3831
    %v3833 = vrot.slane %v1892, %v3832
    %vm3834 = vcmask 392512
    %v3835 = vsel %vm3834, %v3833, %v3828
    %v3836 = vadd.s32 %v1914, 4294967248
    %v3837 = vlaneseq
    %v3838 = vshrl.u32 %v3837, 7
    %v3839 = vsub.s32 %v3836, %v3838
    %v3840 = vrot.slane %v1894, %v3839
    %vm3841 = vcmask 458112
    %v3842 = vsel %vm3841, %v3840, %v3835
    %v3843 = vadd.s32 %v1914, 4294967240
    %v3844 = vlaneseq
    %v3845 = vshrl.u32 %v3844, 7
    %v3846 = vsub.s32 %v3843, %v3845
    %v3847 = vrot.slane %v1896, %v3846
    %vm3848 = vcmask 523712
    %v3849 = vsel %vm3848, %v3847, %v3842
    %v3850 = vadd.s32 %v1914, 4294967232
    %v3851 = vlaneseq
    %v3852 = vshrl.u32 %v3851, 7
    %v3853 = vsub.s32 %v3850, %v3852
    %v3854 = vrot.slane %v1898, %v3853
    %vm3855 = vcmask 589312
    %v3856 = vsel %vm3855, %v3854, %v3849
    %v3857 = vadd.s32 %v1914, 4294967224
    %v3858 = vlaneseq
    %v3859 = vshrl.u32 %v3858, 7
    %v3860 = vsub.s32 %v3857, %v3859
    %v3861 = vrot.slane %v1900, %v3860
    %vm3862 = vcmask 654912
    %v3863 = vsel %vm3862, %v3861, %v3856
    %v3864 = vadd.s32 %v1914, 4294967216
    %v3865 = vlaneseq
    %v3866 = vshrl.u32 %v3865, 7
    %v3867 = vsub.s32 %v3864, %v3866
    %v3868 = vrot.slane %v1902, %v3867
    %vm3869 = vcmask 720512
    %v3870 = vsel %vm3869, %v3868, %v3863
    %v3871 = vadd.s32 %v1914, 4294967208
    %v3872 = vlaneseq
    %v3873 = vshrl.u32 %v3872, 7
    %v3874 = vsub.s32 %v3871, %v3873
    %v3875 = vrot.slane %v1904, %v3874
    %vm3876 = vcmask 786112
    %v3877 = vsel %vm3876, %v3875, %v3870
    %v3878 = vadd.s32 %v1914, 4294967200
    %v3879 = vlaneseq
    %v3880 = vshrl.u32 %v3879, 7
    %v3881 = vsub.s32 %v3878, %v3880
    %v3882 = vrot.slane %v1906, %v3881
    %vm3883 = vcmask 851712
    %v3884 = vsel %vm3883, %v3882, %v3877
    %v3885 = vadd.s32 %v1914, 4294967192
    %v3886 = vlaneseq
    %v3887 = vshrl.u32 %v3886, 7
    %v3888 = vsub.s32 %v3885, %v3887
    %v3889 = vrot.slane %v1908, %v3888
    %vm3890 = vcmask 917312
    %v3891 = vsel %vm3890, %v3889, %v3884
    %v3892 = vadd.s32 %v1914, 4294967184
    %v3893 = vlaneseq
    %v3894 = vshrl.u32 %v3893, 7
    %v3895 = vsub.s32 %v3892, %v3894
    %v3896 = vrot.slane %v1910, %v3895
    %vm3897 = vcmask 982912
    %v3898 = vsel %vm3897, %v3896, %v3891
    %v3899 = vadd.s32 %v1914, 4294967176
    %v3900 = vlaneseq
    %v3901 = vshrl.u32 %v3900, 7
    %v3902 = vsub.s32 %v3899, %v3901
    %v3903 = vrot.slane %v1912, %v3902
    %vm3904 = vcmask 1048512
    %v3905 = vsel %vm3904, %v3903, %v3898
    %v3906 = vlaneseq
    %v3907 = vshrl.u32 %v3906, 7
    %v3908 = vsub.s32 %v1914, %v3907
    %v3909 = vrot.slane %v3066, %v3908
    %v3910 = vlaneseq
    %v3911 = vshrl.u32 %v3910, 7
    %v3912 = vsub.s32 %v3801, %v3911
    %v3913 = vrot.slane %v3068, %v3912
    %v3914 = vsel %vm3806, %v3913, %v3909
    %v3915 = vlaneseq
    %v3916 = vshrl.u32 %v3915, 7
    %v3917 = vsub.s32 %v3808, %v3916
    %v3918 = vrot.slane %v3070, %v3917
    %v3919 = vsel %vm3813, %v3918, %v3914
    %v3920 = vlaneseq
    %v3921 = vshrl.u32 %v3920, 7
    %v3922 = vsub.s32 %v3815, %v3921
    %v3923 = vrot.slane %v3072, %v3922
    %v3924 = vsel %vm3820, %v3923, %v3919
    %v3925 = vlaneseq
    %v3926 = vshrl.u32 %v3925, 7
    %v3927 = vsub.s32 %v3822, %v3926
    %v3928 = vrot.slane %v3074, %v3927
    %v3929 = vsel %vm3827, %v3928, %v3924
    %v3930 = vlaneseq
    %v3931 = vshrl.u32 %v3930, 7
    %v3932 = vsub.s32 %v3829, %v3931
    %v3933 = vrot.slane %v3076, %v3932
    %v3934 = vsel %vm3834, %v3933, %v3929
    %v3935 = vlaneseq
    %v3936 = vshrl.u32 %v3935, 7
    %v3937 = vsub.s32 %v3836, %v3936
    %v3938 = vrot.slane %v3078, %v3937
    %v3939 = vsel %vm3841, %v3938, %v3934
    %v3940 = vlaneseq
    %v3941 = vshrl.u32 %v3940, 7
    %v3942 = vsub.s32 %v3843, %v3941
    %v3943 = vrot.slane %v3080, %v3942
    %v3944 = vsel %vm3848, %v3943, %v3939
    %v3945 = vlaneseq
    %v3946 = vshrl.u32 %v3945, 7
    %v3947 = vsub.s32 %v3850, %v3946
    %v3948 = vrot.slane %v3082, %v3947
    %v3949 = vsel %vm3855, %v3948, %v3944
    %v3950 = vlaneseq
    %v3951 = vshrl.u32 %v3950, 7
    %v3952 = vsub.s32 %v3857, %v3951
    %v3953 = vrot.slane %v3084, %v3952
    %v3954 = vsel %vm3862, %v3953, %v3949
    %v3955 = vlaneseq
    %v3956 = vshrl.u32 %v3955, 7
    %v3957 = vsub.s32 %v3864, %v3956
    %v3958 = vrot.slane %v3086, %v3957
    %v3959 = vsel %vm3869, %v3958, %v3954
    %v3960 = vlaneseq
    %v3961 = vshrl.u32 %v3960, 7
    %v3962 = vsub.s32 %v3871, %v3961
    %v3963 = vrot.slane %v3088, %v3962
    %v3964 = vsel %vm3876, %v3963, %v3959
    %v3965 = vlaneseq
    %v3966 = vshrl.u32 %v3965, 7
    %v3967 = vsub.s32 %v3878, %v3966
    %v3968 = vrot.slane %v3090, %v3967
    %v3969 = vsel %vm3883, %v3968, %v3964
    %v3970 = vlaneseq
    %v3971 = vshrl.u32 %v3970, 7
    %v3972 = vsub.s32 %v3885, %v3971
    %v3973 = vrot.slane %v3092, %v3972
    %v3974 = vsel %vm3890, %v3973, %v3969
    %v3975 = vlaneseq
    %v3976 = vshrl.u32 %v3975, 7
    %v3977 = vsub.s32 %v3892, %v3976
    %v3978 = vrot.slane %v3094, %v3977
    %v3979 = vsel %vm3897, %v3978, %v3974
    %v3980 = vlaneseq
    %v3981 = vshrl.u32 %v3980, 7
    %v3982 = vsub.s32 %v3899, %v3981
    %v3983 = vrot.slane %v3096, %v3982
    %v3984 = vsel %vm3904, %v3983, %v3979
    %vm3985 = vcmask 1040384
    %v3986 = vsel %vm3985, %v3905, %v3984
    %3987 = vst [vmem:[#allocation20] sm:$0x3] %v3986
    %s3988 = scalar_lea.smem [#allocation21], 0
    %3989 = sst [smem:[%s3988]] %s3700
    %v3990 = vpack.c.bf16 %v3704, %v3701
    %v3991 = vpack.c.bf16 %v3705, %v3702
    %v3992 = vpack.c.bf16 %v3706, %v3703
    %v3993 = vpack.c.bf16 %v3710, %v3707
    %v3994 = vpack.c.bf16 %v3711, %v3708
    %v3995 = vpack.c.bf16 %v3712, %v3709
    %v3996 = vpack.c.bf16 %v3716, %v3713
    %v3997 = vpack.c.bf16 %v3717, %v3714
    %v3998 = vpack.c.bf16 %v3718, %v3715
    %v3999 = vpack.c.bf16 %v3722, %v3719
    %v4000 = vpack.c.bf16 %v3723, %v3720
    %v4001 = vpack.c.bf16 %v3724, %v3721
    %v4002 = vpack.c.bf16 %v3728, %v3725
    %v4003 = vpack.c.bf16 %v3729, %v3726
    %v4004 = vpack.c.bf16 %v3730, %v3727
    %v4005 = vpack.c.bf16 %v3734, %v3731
    %v4006 = vpack.c.bf16 %v3735, %v3732
    %v4007 = vpack.c.bf16 %v3736, %v3733
    %v4008 = vpack.c.bf16 %v3740, %v3737
    %v4009 = vpack.c.bf16 %v3741, %v3738
    %v4010 = vpack.c.bf16 %v3742, %v3739
    %v4011 = vpack.c.bf16 %v3746, %v3743
    %v4012 = vpack.c.bf16 %v3747, %v3744
    %v4013 = vpack.c.bf16 %v3748, %v3745
    %v4014 = vld [vmem:[#allocation14] sm:$0xff]
    %v4015 = vld [vmem:[#allocation14 + $0x8] sm:$0xff]
    %v4016 = vld [vmem:[#allocation14 + $0x10] sm:$0xff]
    %v4017 = vld [vmem:[#allocation14 + $0x18] sm:$0xff]
    %v4018 = vld [vmem:[#allocation14 + $0x20] sm:$0xff]
    %v4019 = vld [vmem:[#allocation14 + $0x28] sm:$0xff]
    %v4020 = vld [vmem:[#allocation14 + $0x30] sm:$0xff]
    %v4021 = vld [vmem:[#allocation14 + $0x38] sm:$0xff]
    %v4022 = vld [vmem:[#allocation14 + $0x40] sm:$0xff]
    %v4023 = vld [vmem:[#allocation14 + $0x48] sm:$0xff]
    %v4024 = vld [vmem:[#allocation14 + $0x50] sm:$0xff]
    %v4025 = vld [vmem:[#allocation14 + $0x58] sm:$0xff]
    %v4026 = vld [vmem:[#allocation14 + $0x60] sm:$0xff]
    %v4027 = vld [vmem:[#allocation14 + $0x68] sm:$0xff]
    %v4028 = vld [vmem:[#allocation14 + $0x70] sm:$0xff]
    %v4029 = vld [vmem:[#allocation14 + $0x78] sm:$0xff]
    %v4030 = vld [vmem:[#allocation14 + $0x80] sm:$0xff]
    %v4031 = vld [vmem:[#allocation14 + $0x88] sm:$0xff]
    %v4032 = vld [vmem:[#allocation14 + $0x90] sm:$0xff]
    %v4033 = vld [vmem:[#allocation14 + $0x98] sm:$0xff]
    %v4034 = vld [vmem:[#allocation14 + $0xa0] sm:$0xff]
    %v4035 = vld [vmem:[#allocation14 + $0xa8] sm:$0xff]
    %v4036 = vld [vmem:[#allocation14 + $0xb0] sm:$0xff]
    %v4037 = vld [vmem:[#allocation14 + $0xb8] sm:$0xff]
    %v4038 = vld [vmem:[#allocation14 + $0xc0] sm:$0xff]
    %v4039 = vld [vmem:[#allocation14 + $0xc8] sm:$0xff]
    %v4040 = vld [vmem:[#allocation14 + $0xd0] sm:$0xff]
    %v4041 = vld [vmem:[#allocation14 + $0xd8] sm:$0xff]
    %v4042 = vld [vmem:[#allocation14 + $0xe0] sm:$0xff]
    %v4043 = vld [vmem:[#allocation14 + $0xe8] sm:$0xff]
    %v4044 = vld [vmem:[#allocation14 + $0xf0] sm:$0xff]
    %v4045 = vld [vmem:[#allocation14 + $0xf8] sm:$0xff]
    %v4046 = vld [vmem:[#allocation14 + $0x100] sm:$0xff]
    %v4047 = vld [vmem:[#allocation14 + $0x108] sm:$0xff]
    %v4048 = vld [vmem:[#allocation14 + $0x110] sm:$0xff]
    %v4049 = vld [vmem:[#allocation14 + $0x118] sm:$0xff]
    %v4050 = vld [vmem:[#allocation14 + $0x120] sm:$0xff]
    %v4051 = vld [vmem:[#allocation14 + $0x128] sm:$0xff]
    %v4052 = vld [vmem:[#allocation14 + $0x130] sm:$0xff]
    %v4053 = vld [vmem:[#allocation14 + $0x138] sm:$0xff]
    %v4054 = vld [vmem:[#allocation14 + $0x140] sm:$0xff]
    %v4055 = vld [vmem:[#allocation14 + $0x148] sm:$0xff]
    %v4056 = vld [vmem:[#allocation14 + $0x150] sm:$0xff]
    %v4057 = vld [vmem:[#allocation14 + $0x158] sm:$0xff]
    %v4058 = vld [vmem:[#allocation14 + $0x160] sm:$0xff]
    %v4059 = vld [vmem:[#allocation14 + $0x168] sm:$0xff]
    %v4060 = vld [vmem:[#allocation14 + $0x170] sm:$0xff]
    %v4061 = vld [vmem:[#allocation14 + $0x178] sm:$0xff]
    %v4062 = vld [vmem:[%s9] sm:$0x3]
    %v4064 = vlaneseq
    %v4065 = vshrl.u32 %v4064, 7
    %v4066 = vsub.s32 0, %v4065
    %v4067 = vrot.slane %v4062, %v4066
    %v4068 = vlaneseq
    %v4069 = vshrl.u32 %v4068, 7
    %v4070 = vsub.s32 1, %v4069
    %v4071 = vrot.slane %v4062, %v4070
    %v4122 = vunpack.c.l.b16 %v4014
    %v4123 = vunpack.c.h.b16 %v4014
    %v4124 = vunpack.c.l.b16 %v4015
    %v4125 = vunpack.c.h.b16 %v4015
    %v4126 = vunpack.c.l.b16 %v4016
    %v4127 = vunpack.c.h.b16 %v4016
    %v4128 = vunpack.c.l.b16 %v4017
    %v4129 = vunpack.c.h.b16 %v4017
    %v4130 = vunpack.c.l.b16 %v4018
    %v4131 = vunpack.c.h.b16 %v4018
    %v4132 = vunpack.c.l.b16 %v4019
    %v4133 = vunpack.c.h.b16 %v4019
    %v4134 = vunpack.c.l.b16 %v4020
    %v4135 = vunpack.c.h.b16 %v4020
    %v4136 = vunpack.c.l.b16 %v4021
    %v4137 = vunpack.c.h.b16 %v4021
    %v4138 = vunpack.c.l.b16 %v4022
    %v4139 = vunpack.c.h.b16 %v4022
    %v4140 = vunpack.c.l.b16 %v4023
    %v4141 = vunpack.c.h.b16 %v4023
    %v4142 = vunpack.c.l.b16 %v4024
    %v4143 = vunpack.c.h.b16 %v4024
    %v4144 = vunpack.c.l.b16 %v4025
    %v4145 = vunpack.c.h.b16 %v4025
    %v4146 = vunpack.c.l.b16 %v4026
    %v4147 = vunpack.c.h.b16 %v4026
    %v4148 = vunpack.c.l.b16 %v4027
    %v4149 = vunpack.c.h.b16 %v4027
    %v4150 = vunpack.c.l.b16 %v4028
    %v4151 = vunpack.c.h.b16 %v4028
    %v4152 = vunpack.c.l.b16 %v4029
    %v4153 = vunpack.c.h.b16 %v4029
    %v4154 = vunpack.c.l.b16 %v4030
    %v4155 = vunpack.c.h.b16 %v4030
    %v4156 = vunpack.c.l.b16 %v4031
    %v4157 = vunpack.c.h.b16 %v4031
    %v4158 = vunpack.c.l.b16 %v4032
    %v4159 = vunpack.c.h.b16 %v4032
    %v4160 = vunpack.c.l.b16 %v4033
    %v4161 = vunpack.c.h.b16 %v4033
    %v4162 = vunpack.c.l.b16 %v4034
    %v4163 = vunpack.c.h.b16 %v4034
    %v4164 = vunpack.c.l.b16 %v4035
    %v4165 = vunpack.c.h.b16 %v4035
    %v4166 = vunpack.c.l.b16 %v4036
    %v4167 = vunpack.c.h.b16 %v4036
    %v4168 = vunpack.c.l.b16 %v4037
    %v4169 = vunpack.c.h.b16 %v4037
    %v4170 = vunpack.c.l.b16 %v4038
    %v4171 = vunpack.c.h.b16 %v4038
    %v4172 = vunpack.c.l.b16 %v4039
    %v4173 = vunpack.c.h.b16 %v4039
    %v4174 = vunpack.c.l.b16 %v4040
    %v4175 = vunpack.c.h.b16 %v4040
    %v4176 = vunpack.c.l.b16 %v4041
    %v4177 = vunpack.c.h.b16 %v4041
    %v4178 = vunpack.c.l.b16 %v4042
    %v4179 = vunpack.c.h.b16 %v4042
    %v4180 = vunpack.c.l.b16 %v4043
    %v4181 = vunpack.c.h.b16 %v4043
    %v4182 = vunpack.c.l.b16 %v4044
    %v4183 = vunpack.c.h.b16 %v4044
    %v4184 = vunpack.c.l.b16 %v4045
    %v4185 = vunpack.c.h.b16 %v4045
    %v4186 = vunpack.c.l.b16 %v4046
    %v4187 = vunpack.c.h.b16 %v4046
    %v4188 = vunpack.c.l.b16 %v4047
    %v4189 = vunpack.c.h.b16 %v4047
    %v4190 = vunpack.c.l.b16 %v4048
    %v4191 = vunpack.c.h.b16 %v4048
    %v4192 = vunpack.c.l.b16 %v4049
    %v4193 = vunpack.c.h.b16 %v4049
    %v4194 = vunpack.c.l.b16 %v4050
    %v4195 = vunpack.c.h.b16 %v4050
    %v4196 = vunpack.c.l.b16 %v4051
    %v4197 = vunpack.c.h.b16 %v4051
    %v4198 = vunpack.c.l.b16 %v4052
    %v4199 = vunpack.c.h.b16 %v4052
    %v4200 = vunpack.c.l.b16 %v4053
    %v4201 = vunpack.c.h.b16 %v4053
    %v4202 = vunpack.c.l.b16 %v4054
    %v4203 = vunpack.c.h.b16 %v4054
    %v4204 = vunpack.c.l.b16 %v4055
    %v4205 = vunpack.c.h.b16 %v4055
    %v4206 = vunpack.c.l.b16 %v4056
    %v4207 = vunpack.c.h.b16 %v4056
    %v4208 = vunpack.c.l.b16 %v4057
    %v4209 = vunpack.c.h.b16 %v4057
    %v4210 = vunpack.c.l.b16 %v4058
    %v4211 = vunpack.c.h.b16 %v4058
    %v4212 = vunpack.c.l.b16 %v4059
    %v4213 = vunpack.c.h.b16 %v4059
    %v4214 = vunpack.c.l.b16 %v4060
    %v4215 = vunpack.c.h.b16 %v4060
    %v4216 = vunpack.c.l.b16 %v4061
    %v4217 = vunpack.c.h.b16 %v4061
    %v4218 = vpack.c.b16 %v4124, %v4122
    %v4219 = vpack.c.b16 %v4125, %v4123
    %v4220 = vpack.c.b16 %v4128, %v4126
    %v4221 = vpack.c.b16 %v4129, %v4127
    %v4222 = vpack.c.b16 %v4132, %v4130
    %v4223 = vpack.c.b16 %v4133, %v4131
    %v4224 = vpack.c.b16 %v4136, %v4134
    %v4225 = vpack.c.b16 %v4137, %v4135
    %v4226 = vpack.c.b16 %v4140, %v4138
    %v4227 = vpack.c.b16 %v4141, %v4139
    %v4228 = vpack.c.b16 %v4144, %v4142
    %v4229 = vpack.c.b16 %v4145, %v4143
    %v4230 = vpack.c.b16 %v4148, %v4146
    %v4231 = vpack.c.b16 %v4149, %v4147
    %v4232 = vpack.c.b16 %v4152, %v4150
    %v4233 = vpack.c.b16 %v4153, %v4151
    %v4234 = vpack.c.b16 %v4156, %v4154
    %v4235 = vpack.c.b16 %v4157, %v4155
    %v4236 = vpack.c.b16 %v4160, %v4158
    %v4237 = vpack.c.b16 %v4161, %v4159
    %v4238 = vpack.c.b16 %v4164, %v4162
    %v4239 = vpack.c.b16 %v4165, %v4163
    %v4240 = vpack.c.b16 %v4168, %v4166
    %v4241 = vpack.c.b16 %v4169, %v4167
    %v4242 = vpack.c.b16 %v4172, %v4170
    %v4243 = vpack.c.b16 %v4173, %v4171
    %v4244 = vpack.c.b16 %v4176, %v4174
    %v4245 = vpack.c.b16 %v4177, %v4175
    %v4246 = vpack.c.b16 %v4180, %v4178
    %v4247 = vpack.c.b16 %v4181, %v4179
    %v4248 = vpack.c.b16 %v4184, %v4182
    %v4249 = vpack.c.b16 %v4185, %v4183
    %v4250 = vpack.c.b16 %v4188, %v4186
    %v4251 = vpack.c.b16 %v4189, %v4187
    %v4252 = vpack.c.b16 %v4192, %v4190
    %v4253 = vpack.c.b16 %v4193, %v4191
    %v4254 = vpack.c.b16 %v4196, %v4194
    %v4255 = vpack.c.b16 %v4197, %v4195
    %v4256 = vpack.c.b16 %v4200, %v4198
    %v4257 = vpack.c.b16 %v4201, %v4199
    %v4258 = vpack.c.b16 %v4204, %v4202
    %v4259 = vpack.c.b16 %v4205, %v4203
    %v4260 = vpack.c.b16 %v4208, %v4206
    %v4261 = vpack.c.b16 %v4209, %v4207
    %v4262 = vpack.c.b16 %v4212, %v4210
    %v4263 = vpack.c.b16 %v4213, %v4211
    %v4264 = vpack.c.b16 %v4216, %v4214
    %v4265 = vpack.c.b16 %v4217, %v4215
    %4314 = vmatprep.subr.bf16.mxu0 %v4219
    %4315 = vmatpush1.bf16.msra.mxu0 %v4218
    %4316 = vmatprep.subr.bf16.mxu0 %v4221
    %4317 = vmatpush1.bf16.msra.mxu0 %v4220
    %4318 = vmatprep.subr.bf16.mxu0 %v4223
    %4319 = vmatpush1.bf16.msra.mxu0 %v4222
    %4320 = vmatprep.subr.bf16.mxu0 %v4225
    %4321 = vmatpush1.bf16.msra.mxu0 %v4224
    %4322 = vmatprep.subr.bf16.mxu0 %v4227
    %4323 = vmatpush1.bf16.msra.mxu0 %v4226
    %4324 = vmatprep.subr.bf16.mxu0 %v4229
    %4325 = vmatpush1.bf16.msra.mxu0 %v4228
    %4326 = vmatprep.subr.bf16.mxu0 %v4231
    %4327 = vmatpush1.bf16.msra.mxu0 %v4230
    %4328 = vmatprep.subr.bf16.mxu0 %v4233
    %4329 = vmatpush1.bf16.msra.mxu0 %v4232
    %4330 = vmatprep.subr.bf16.mxu0 %v4235
    %4331 = vmatpush1.bf16.msra.mxu0 %v4234
    %4332 = vmatprep.subr.bf16.mxu0 %v4237
    %4333 = vmatpush1.bf16.msra.mxu0 %v4236
    %4334 = vmatprep.subr.bf16.mxu0 %v4239
    %4335 = vmatpush1.bf16.msra.mxu0 %v4238
    %4336 = vmatprep.subr.bf16.mxu0 %v4241
    %4337 = vmatpush1.bf16.msra.mxu0 %v4240
    %4338 = vmatprep.subr.bf16.mxu0 %v4243
    %4339 = vmatpush1.bf16.msra.mxu0 %v4242
    %4340 = vmatprep.subr.bf16.mxu0 %v4245
    %4341 = vmatpush1.bf16.msra.mxu0 %v4244
    %4342 = vmatprep.subr.bf16.mxu0 %v4247
    %4343 = vmatpush1.bf16.msra.mxu0 %v4246
    %4344 = vmatprep.subr.bf16.mxu0 %v4249
    %4345 = vmatpush1.bf16.msra.mxu0 %v4248
    %4346 = vmatprep.mubr.bf16.mxu0 %v3991
    %4347 = vmatmul.mubr.bf16.gmra.mrb[0].mxu0 %v3990
    %v4348 = vpop.f32.mrb[0].mxu0
    %v4349 = vadd.f32 %v4067, %v4348
    %v4350 = vpop.f32.mrb[0].mxu0
    %v4351 = vadd.f32 %v4071, %v4350
    %v4352 = vpop.f32.mrb[0].mxu0
    %v4353 = vadd.f32 %v4067, %v4352
    %v4354 = vpop.f32.mrb[0].mxu0
    %v4355 = vadd.f32 %v4071, %v4354
    %4356 = vmatprep.mubr.bf16.mxu0 %v3994
    %4357 = vmatmul.mubr.bf16.gmra.mrb[0].mxu0 %v3993
    %v4358 = vpop.f32.mrb[0].mxu0
    %v4359 = vadd.f32 %v4067, %v4358
    %v4360 = vpop.f32.mrb[0].mxu0
    %v4361 = vadd.f32 %v4071, %v4360
    %v4362 = vpop.f32.mrb[0].mxu0
    %v4363 = vadd.f32 %v4067, %v4362
    %v4364 = vpop.f32.mrb[0].mxu0
    %v4365 = vadd.f32 %v4071, %v4364
    %4366 = vmatprep.mubr.bf16.mxu0 %v3997
    %4367 = vmatmul.mubr.bf16.gmra.mrb[0].mxu0 %v3996
    %v4368 = vpop.f32.mrb[0].mxu0
    %v4369 = vadd.f32 %v4067, %v4368
    %v4370 = vpop.f32.mrb[0].mxu0
    %v4371 = vadd.f32 %v4071, %v4370
    %v4372 = vpop.f32.mrb[0].mxu0
    %v4373 = vadd.f32 %v4067, %v4372
    %v4374 = vpop.f32.mrb[0].mxu0
    %v4375 = vadd.f32 %v4071, %v4374
    %4376 = vmatprep.mubr.bf16.mxu0 %v4000
    %4377 = vmatmul.mubr.bf16.gmra.mrb[0].mxu0 %v3999
    %v4378 = vpop.f32.mrb[0].mxu0
    %v4379 = vadd.f32 %v4067, %v4378
    %v4380 = vpop.f32.mrb[0].mxu0
    %v4381 = vadd.f32 %v4071, %v4380
    %v4382 = vpop.f32.mrb[0].mxu0
    %v4383 = vadd.f32 %v4067, %v4382
    %v4384 = vpop.f32.mrb[0].mxu0
    %v4385 = vadd.f32 %v4071, %v4384
    %4386 = vmatprep.mubr.bf16.mxu0 %v4003
    %4387 = vmatmul.mubr.bf16.gmra.mrb[0].mxu0 %v4002
    %v4388 = vpop.f32.mrb[0].mxu0
    %v4389 = vadd.f32 %v4067, %v4388
    %v4390 = vpop.f32.mrb[0].mxu0
    %v4391 = vadd.f32 %v4071, %v4390
    %v4392 = vpop.f32.mrb[0].mxu0
    %v4393 = vadd.f32 %v4067, %v4392
    %v4394 = vpop.f32.mrb[0].mxu0
    %v4395 = vadd.f32 %v4071, %v4394
    %4396 = vmatprep.mubr.bf16.mxu0 %v4006
    %4397 = vmatmul.mubr.bf16.gmra.mrb[0].mxu0 %v4005
    %v4398 = vpop.f32.mrb[0].mxu0
    %v4399 = vadd.f32 %v4067, %v4398
    %v4400 = vpop.f32.mrb[0].mxu0
    %v4401 = vadd.f32 %v4071, %v4400
    %v4402 = vpop.f32.mrb[0].mxu0
    %v4403 = vadd.f32 %v4067, %v4402
    %v4404 = vpop.f32.mrb[0].mxu0
    %v4405 = vadd.f32 %v4071, %v4404
    %4406 = vmatprep.mubr.bf16.mxu0 %v4009
    %4407 = vmatmul.mubr.bf16.gmra.mrb[0].mxu0 %v4008
    %v4408 = vpop.f32.mrb[0].mxu0
    %v4409 = vadd.f32 %v4067, %v4408
    %v4410 = vpop.f32.mrb[0].mxu0
    %v4411 = vadd.f32 %v4071, %v4410
    %v4412 = vpop.f32.mrb[0].mxu0
    %v4413 = vadd.f32 %v4067, %v4412
    %v4414 = vpop.f32.mrb[0].mxu0
    %v4415 = vadd.f32 %v4071, %v4414
    %4416 = vmatprep.mubr.bf16.mxu0 %v4012
    %4417 = vmatmul.mubr.bf16.gmra.mrb[0].mxu0 %v4011
    %v4418 = vpop.f32.mrb[0].mxu0
    %v4419 = vadd.f32 %v4067, %v4418
    %v4420 = vpop.f32.mrb[0].mxu0
    %v4421 = vadd.f32 %v4071, %v4420
    %v4422 = vpop.f32.mrb[0].mxu0
    %v4423 = vadd.f32 %v4067, %v4422
    %v4424 = vpop.f32.mrb[0].mxu0
    %v4425 = vadd.f32 %v4071, %v4424
    %4426 = vdwg.mxu0
    %4427 = vmatprep.subr.bf16.mxu0 %v4251
    %4428 = vmatpush1.bf16.msra.mxu0 %v4250
    %4429 = vmatprep.subr.bf16.mxu0 %v4253
    %4430 = vmatpush1.bf16.msra.mxu0 %v4252
    %4431 = vmatprep.subr.bf16.mxu0 %v4255
    %4432 = vmatpush1.bf16.msra.mxu0 %v4254
    %4433 = vmatprep.subr.bf16.mxu0 %v4257
    %4434 = vmatpush1.bf16.msra.mxu0 %v4256
    %4435 = vmatprep.subr.bf16.mxu0 %v4259
    %4436 = vmatpush1.bf16.msra.mxu0 %v4258
    %4437 = vmatprep.subr.bf16.mxu0 %v4261
    %4438 = vmatpush1.bf16.msra.mxu0 %v4260
    %4439 = vmatprep.subr.bf16.mxu0 %v4263
    %4440 = vmatpush1.bf16.msra.mxu0 %v4262
    %4441 = vmatprep.subr.bf16.mxu0 %v4265
    %4442 = vmatpush1.bf16.msra.mxu0 %v4264
    %4443 = vmatprep.subr.bf16.mxu0 0
    %4444 = vmatpush1.bf16.msra.mxu0 0
    %4445 = vmatprep.subr.bf16.mxu0 0
    %4446 = vmatpush1.bf16.msra.mxu0 0
    %4447 = vmatprep.subr.bf16.mxu0 0
    %4448 = vmatpush1.bf16.msra.mxu0 0
    %4449 = vmatprep.subr.bf16.mxu0 0
    %4450 = vmatpush1.bf16.msra.mxu0 0
    %4451 = vmatprep.subr.bf16.mxu0 0
    %4452 = vmatpush1.bf16.msra.mxu0 0
    %4453 = vmatprep.subr.bf16.mxu0 0
    %4454 = vmatpush1.bf16.msra.mxu0 0
    %4455 = vmatprep.subr.bf16.mxu0 0
    %4456 = vmatpush1.bf16.msra.mxu0 0
    %4457 = vmatprep.subr.bf16.mxu0 0
    %4458 = vmatpush1.bf16.msra.mxu0 0
    %4459 = vmatprep.mubr.bf16.mxu0 0
    %4460 = vmatmul.mubr.bf16.gmra.mrb[0].mxu0 %v3992
    %v4461 = vpop.f32.mrb[0].mxu0
    %v4462 = vadd.f32 %v4349, %v4461
    %v4463 = vpop.f32.mrb[0].mxu0
    %v4464 = vadd.f32 %v4351, %v4463
    %v4465 = vpop.f32.mrb[0].mxu0
    %v4466 = vadd.f32 %v4353, %v4465
    %v4467 = vpop.f32.mrb[0].mxu0
    %v4468 = vadd.f32 %v4355, %v4467
    %4469 = vmatprep.mubr.bf16.mxu0 0
    %4470 = vmatmul.mubr.bf16.gmra.mrb[0].mxu0 %v3995
    %v4471 = vpop.f32.mrb[0].mxu0
    %v4472 = vadd.f32 %v4359, %v4471
    %v4473 = vpop.f32.mrb[0].mxu0
    %v4474 = vadd.f32 %v4361, %v4473
    %v4475 = vpop.f32.mrb[0].mxu0
    %v4476 = vadd.f32 %v4363, %v4475
    %v4477 = vpop.f32.mrb[0].mxu0
    %v4478 = vadd.f32 %v4365, %v4477
    %4479 = vmatprep.mubr.bf16.mxu0 0
    %4480 = vmatmul.mubr.bf16.gmra.mrb[0].mxu0 %v3998
    %v4481 = vpop.f32.mrb[0].mxu0
    %v4482 = vadd.f32 %v4369, %v4481
    %v4483 = vpop.f32.mrb[0].mxu0
    %v4484 = vadd.f32 %v4371, %v4483
    %v4485 = vpop.f32.mrb[0].mxu0
    %v4486 = vadd.f32 %v4373, %v4485
    %v4487 = vpop.f32.mrb[0].mxu0
    %v4488 = vadd.f32 %v4375, %v4487
    %4489 = vmatprep.mubr.bf16.mxu0 0
    %4490 = vmatmul.mubr.bf16.gmra.mrb[0].mxu0 %v4001
    %v4491 = vpop.f32.mrb[0].mxu0
    %v4492 = vadd.f32 %v4379, %v4491
    %v4493 = vpop.f32.mrb[0].mxu0
    %v4494 = vadd.f32 %v4381, %v4493
    %v4495 = vpop.f32.mrb[0].mxu0
    %v4496 = vadd.f32 %v4383, %v4495
    %v4497 = vpop.f32.mrb[0].mxu0
    %v4498 = vadd.f32 %v4385, %v4497
    %4499 = vmatprep.mubr.bf16.mxu0 0
    %4500 = vmatmul.mubr.bf16.gmra.mrb[0].mxu0 %v4004
    %v4501 = vpop.f32.mrb[0].mxu0
    %v4502 = vadd.f32 %v4389, %v4501
    %v4503 = vpop.f32.mrb[0].mxu0
    %v4504 = vadd.f32 %v4391, %v4503
    %v4505 = vpop.f32.mrb[0].mxu0
    %v4506 = vadd.f32 %v4393, %v4505
    %v4507 = vpop.f32.mrb[0].mxu0
    %v4508 = vadd.f32 %v4395, %v4507
    %4509 = vmatprep.mubr.bf16.mxu0 0
    %4510 = vmatmul.mubr.bf16.gmra.mrb[0].mxu0 %v4007
    %v4511 = vpop.f32.mrb[0].mxu0
    %v4512 = vadd.f32 %v4399, %v4511
    %v4513 = vpop.f32.mrb[0].mxu0
    %v4514 = vadd.f32 %v4401, %v4513
    %v4515 = vpop.f32.mrb[0].mxu0
    %v4516 = vadd.f32 %v4403, %v4515
    %v4517 = vpop.f32.mrb[0].mxu0
    %v4518 = vadd.f32 %v4405, %v4517
    %4519 = vmatprep.mubr.bf16.mxu0 0
    %4520 = vmatmul.mubr.bf16.gmra.mrb[0].mxu0 %v4010
    %v4521 = vpop.f32.mrb[0].mxu0
    %v4522 = vadd.f32 %v4409, %v4521
    %v4523 = vpop.f32.mrb[0].mxu0
    %v4524 = vadd.f32 %v4411, %v4523
    %v4525 = vpop.f32.mrb[0].mxu0
    %v4526 = vadd.f32 %v4413, %v4525
    %v4527 = vpop.f32.mrb[0].mxu0
    %v4528 = vadd.f32 %v4415, %v4527
    %4529 = vmatprep.mubr.bf16.mxu0 0
    %4530 = vmatmul.mubr.bf16.gmra.mrb[0].mxu0 %v4013
    %v4531 = vpop.f32.mrb[0].mxu0
    %v4532 = vadd.f32 %v4419, %v4531
    %v4533 = vpop.f32.mrb[0].mxu0
    %v4534 = vadd.f32 %v4421, %v4533
    %v4535 = vpop.f32.mrb[0].mxu0
    %v4536 = vadd.f32 %v4423, %v4535
    %v4537 = vpop.f32.mrb[0].mxu0
    %v4538 = vadd.f32 %v4425, %v4537
    %4539 = vdwg.mxu0
    %v4540 = vmax.f32 %v4462, 0.0
    %v4541 = vmax.f32 %v4464, 0.0
    %v4542 = vmax.f32 %v4466, 0.0
    %v4543 = vmax.f32 %v4468, 0.0
    %v4544 = vmax.f32 %v4472, 0.0
    %v4545 = vmax.f32 %v4474, 0.0
    %v4546 = vmax.f32 %v4476, 0.0
    %v4547 = vmax.f32 %v4478, 0.0
    %v4548 = vmax.f32 %v4482, 0.0
    %v4549 = vmax.f32 %v4484, 0.0
    %v4550 = vmax.f32 %v4486, 0.0
    %v4551 = vmax.f32 %v4488, 0.0
    %v4552 = vmax.f32 %v4492, 0.0
    %v4553 = vmax.f32 %v4494, 0.0
    %v4554 = vmax.f32 %v4496, 0.0
    %v4555 = vmax.f32 %v4498, 0.0
    %v4556 = vmax.f32 %v4502, 0.0
    %v4557 = vmax.f32 %v4504, 0.0
    %v4558 = vmax.f32 %v4506, 0.0
    %v4559 = vmax.f32 %v4508, 0.0
    %v4560 = vmax.f32 %v4512, 0.0
    %v4561 = vmax.f32 %v4514, 0.0
    %v4562 = vmax.f32 %v4516, 0.0
    %v4563 = vmax.f32 %v4518, 0.0
    %v4564 = vmax.f32 %v4522, 0.0
    %v4565 = vmax.f32 %v4524, 0.0
    %v4566 = vmax.f32 %v4526, 0.0
    %v4567 = vmax.f32 %v4528, 0.0
    %v4568 = vmax.f32 %v4532, 0.0
    %v4569 = vmax.f32 %v4534, 0.0
    %v4570 = vmax.f32 %v4536, 0.0
    %v4571 = vmax.f32 %v4538, 0.0
    %v4572 = vpack.c.bf16 %v4542, %v4540
    %v4573 = vpack.c.bf16 %v4543, %v4541
    %v4574 = vpack.c.bf16 %v4546, %v4544
    %v4575 = vpack.c.bf16 %v4547, %v4545
    %v4576 = vpack.c.bf16 %v4550, %v4548
    %v4577 = vpack.c.bf16 %v4551, %v4549
    %v4578 = vpack.c.bf16 %v4554, %v4552
    %v4579 = vpack.c.bf16 %v4555, %v4553
    %v4580 = vpack.c.bf16 %v4558, %v4556
    %v4581 = vpack.c.bf16 %v4559, %v4557
    %v4582 = vpack.c.bf16 %v4562, %v4560
    %v4583 = vpack.c.bf16 %v4563, %v4561
    %v4584 = vpack.c.bf16 %v4566, %v4564
    %v4585 = vpack.c.bf16 %v4567, %v4565
    %v4586 = vpack.c.bf16 %v4570, %v4568
    %v4587 = vpack.c.bf16 %v4571, %v4569
    %v4588 = vld [vmem:[#allocation15] sm:$0xff]
    %v4589 = vld [vmem:[#allocation15 + $0x8] sm:$0xf]
    %v4590 = vld [vmem:[#allocation15 + $0xc] sm:$0xff]
    %v4591 = vld [vmem:[#allocation15 + $0x14] sm:$0xf]
    %v4592 = vld [vmem:[#allocation15 + $0x18] sm:$0xff]
    %v4593 = vld [vmem:[#allocation15 + $0x20] sm:$0xf]
    %v4594 = vld [vmem:[#allocation15 + $0x24] sm:$0xff]
    %v4595 = vld [vmem:[#allocation15 + $0x2c] sm:$0xf]
    %v4596 = vld [vmem:[#allocation15 + $0x30] sm:$0xff]
    %v4597 = vld [vmem:[#allocation15 + $0x38] sm:$0xf]
    %v4598 = vld [vmem:[#allocation15 + $0x3c] sm:$0xff]
    %v4599 = vld [vmem:[#allocation15 + $0x44] sm:$0xf]
    %v4600 = vld [vmem:[#allocation15 + $0x48] sm:$0xff]
    %v4601 = vld [vmem:[#allocation15 + $0x50] sm:$0xf]
    %v4602 = vld [vmem:[#allocation15 + $0x54] sm:$0xff]
    %v4603 = vld [vmem:[#allocation15 + $0x5c] sm:$0xf]
    %v4604 = vld [vmem:[#allocation15 + $0x60] sm:$0xff]
    %v4605 = vld [vmem:[#allocation15 + $0x68] sm:$0xf]
    %v4606 = vld [vmem:[#allocation15 + $0x6c] sm:$0xff]
    %v4607 = vld [vmem:[#allocation15 + $0x74] sm:$0xf]
    %v4608 = vld [vmem:[#allocation15 + $0x78] sm:$0xff]
    %v4609 = vld [vmem:[#allocation15 + $0x80] sm:$0xf]
    %v4610 = vld [vmem:[#allocation15 + $0x84] sm:$0xff]
    %v4611 = vld [vmem:[#allocation15 + $0x8c] sm:$0xf]
    %v4612 = vld [vmem:[#allocation15 + $0x90] sm:$0xff]
    %v4613 = vld [vmem:[#allocation15 + $0x98] sm:$0xf]
    %v4614 = vld [vmem:[#allocation15 + $0x9c] sm:$0xff]
    %v4615 = vld [vmem:[#allocation15 + $0xa4] sm:$0xf]
    %v4616 = vld [vmem:[#allocation15 + $0xa8] sm:$0xff]
    %v4617 = vld [vmem:[#allocation15 + $0xb0] sm:$0xf]
    %v4618 = vld [vmem:[#allocation15 + $0xb4] sm:$0xff]
    %v4619 = vld [vmem:[#allocation15 + $0xbc] sm:$0xf]
    %v4620 = vld [vmem:[#allocation15 + $0xc0] sm:$0xff]
    %v4621 = vld [vmem:[#allocation15 + $0xc8] sm:$0xf]
    %v4622 = vld [vmem:[#allocation15 + $0xcc] sm:$0xff]
    %v4623 = vld [vmem:[#allocation15 + $0xd4] sm:$0xf]
    %v4624 = vld [vmem:[#allocation15 + $0xd8] sm:$0xff]
    %v4625 = vld [vmem:[#allocation15 + $0xe0] sm:$0xf]
    %v4626 = vld [vmem:[#allocation15 + $0xe4] sm:$0xff]
    %v4627 = vld [vmem:[#allocation15 + $0xec] sm:$0xf]
    %v4628 = vld [vmem:[#allocation15 + $0xf0] sm:$0xff]
    %v4629 = vld [vmem:[#allocation15 + $0xf8] sm:$0xf]
    %v4630 = vld [vmem:[#allocation15 + $0xfc] sm:$0xff]
    %v4631 = vld [vmem:[#allocation15 + $0x104] sm:$0xf]
    %v4632 = vld [vmem:[#allocation15 + $0x108] sm:$0xff]
    %v4633 = vld [vmem:[#allocation15 + $0x110] sm:$0xf]
    %v4634 = vld [vmem:[#allocation15 + $0x114] sm:$0xff]
    %v4635 = vld [vmem:[#allocation15 + $0x11c] sm:$0xf]
    %v4636 = vld [vmem:[#allocation15 + $0x120] sm:$0xff]
    %v4637 = vld [vmem:[#allocation15 + $0x128] sm:$0xf]
    %v4638 = vld [vmem:[#allocation15 + $0x12c] sm:$0xff]
    %v4639 = vld [vmem:[#allocation15 + $0x134] sm:$0xf]
    %v4640 = vld [vmem:[#allocation15 + $0x138] sm:$0xff]
    %v4641 = vld [vmem:[#allocation15 + $0x140] sm:$0xf]
    %v4642 = vld [vmem:[#allocation15 + $0x144] sm:$0xff]
    %v4643 = vld [vmem:[#allocation15 + $0x14c] sm:$0xf]
    %v4644 = vld [vmem:[#allocation15 + $0x150] sm:$0xff]
    %v4645 = vld [vmem:[#allocation15 + $0x158] sm:$0xf]
    %v4646 = vld [vmem:[#allocation15 + $0x15c] sm:$0xff]
    %v4647 = vld [vmem:[#allocation15 + $0x164] sm:$0xf]
    %v4648 = vld [vmem:[#allocation15 + $0x168] sm:$0xff]
    %v4649 = vld [vmem:[#allocation15 + $0x170] sm:$0xf]
    %v4650 = vld [vmem:[#allocation15 + $0x174] sm:$0xff]
    %v4651 = vld [vmem:[#allocation15 + $0x17c] sm:$0xf]
    %v4652 = vld [vmem:[%s11] sm:$0x7]
    %v4654 = vlaneseq
    %v4655 = vshrl.u32 %v4654, 7
    %v4656 = vsub.s32 0, %v4655
    %v4657 = vrot.slane %v4652, %v4656
    %v4658 = vlaneseq
    %v4659 = vshrl.u32 %v4658, 7
    %v4660 = vsub.s32 1, %v4659
    %v4661 = vrot.slane %v4652, %v4660
    %v4662 = vlaneseq
    %v4663 = vshrl.u32 %v4662, 7
    %v4664 = vsub.s32 2, %v4663
    %v4665 = vrot.slane %v4652, %v4664
    %v4733 = vunpack.c.l.b16 %v4588
    %v4734 = vunpack.c.h.b16 %v4588
    %v4735 = vunpack.c.l.b16 %v4589
    %v4736 = vunpack.c.l.b16 %v4590
    %v4737 = vunpack.c.h.b16 %v4590
    %v4738 = vunpack.c.l.b16 %v4591
    %v4739 = vunpack.c.l.b16 %v4592
    %v4740 = vunpack.c.h.b16 %v4592
    %v4741 = vunpack.c.l.b16 %v4593
    %v4742 = vunpack.c.l.b16 %v4594
    %v4743 = vunpack.c.h.b16 %v4594
    %v4744 = vunpack.c.l.b16 %v4595
    %v4745 = vunpack.c.l.b16 %v4596
    %v4746 = vunpack.c.h.b16 %v4596
    %v4747 = vunpack.c.l.b16 %v4597
    %v4748 = vunpack.c.l.b16 %v4598
    %v4749 = vunpack.c.h.b16 %v4598
    %v4750 = vunpack.c.l.b16 %v4599
    %v4751 = vunpack.c.l.b16 %v4600
    %v4752 = vunpack.c.h.b16 %v4600
    %v4753 = vunpack.c.l.b16 %v4601
    %v4754 = vunpack.c.l.b16 %v4602
    %v4755 = vunpack.c.h.b16 %v4602
    %v4756 = vunpack.c.l.b16 %v4603
    %v4757 = vunpack.c.l.b16 %v4604
    %v4758 = vunpack.c.h.b16 %v4604
    %v4759 = vunpack.c.l.b16 %v4605
    %v4760 = vunpack.c.l.b16 %v4606
    %v4761 = vunpack.c.h.b16 %v4606
    %v4762 = vunpack.c.l.b16 %v4607
    %v4763 = vunpack.c.l.b16 %v4608
    %v4764 = vunpack.c.h.b16 %v4608
    %v4765 = vunpack.c.l.b16 %v4609
    %v4766 = vunpack.c.l.b16 %v4610
    %v4767 = vunpack.c.h.b16 %v4610
    %v4768 = vunpack.c.l.b16 %v4611
    %v4769 = vunpack.c.l.b16 %v4612
    %v4770 = vunpack.c.h.b16 %v4612
    %v4771 = vunpack.c.l.b16 %v4613
    %v4772 = vunpack.c.l.b16 %v4614
    %v4773 = vunpack.c.h.b16 %v4614
    %v4774 = vunpack.c.l.b16 %v4615
    %v4775 = vunpack.c.l.b16 %v4616
    %v4776 = vunpack.c.h.b16 %v4616
    %v4777 = vunpack.c.l.b16 %v4617
    %v4778 = vunpack.c.l.b16 %v4618
    %v4779 = vunpack.c.h.b16 %v4618
    %v4780 = vunpack.c.l.b16 %v4619
    %v4781 = vunpack.c.l.b16 %v4620
    %v4782 = vunpack.c.h.b16 %v4620
    %v4783 = vunpack.c.l.b16 %v4621
    %v4784 = vunpack.c.l.b16 %v4622
    %v4785 = vunpack.c.h.b16 %v4622
    %v4786 = vunpack.c.l.b16 %v4623
    %v4787 = vunpack.c.l.b16 %v4624
    %v4788 = vunpack.c.h.b16 %v4624
    %v4789 = vunpack.c.l.b16 %v4625
    %v4790 = vunpack.c.l.b16 %v4626
    %v4791 = vunpack.c.h.b16 %v4626
    %v4792 = vunpack.c.l.b16 %v4627
    %v4793 = vunpack.c.l.b16 %v4628
    %v4794 = vunpack.c.h.b16 %v4628
    %v4795 = vunpack.c.l.b16 %v4629
    %v4796 = vunpack.c.l.b16 %v4630
    %v4797 = vunpack.c.h.b16 %v4630
    %v4798 = vunpack.c.l.b16 %v4631
    %v4799 = vunpack.c.l.b16 %v4632
    %v4800 = vunpack.c.h.b16 %v4632
    %v4801 = vunpack.c.l.b16 %v4633
    %v4802 = vunpack.c.l.b16 %v4634
    %v4803 = vunpack.c.h.b16 %v4634
    %v4804 = vunpack.c.l.b16 %v4635
    %v4805 = vunpack.c.l.b16 %v4636
    %v4806 = vunpack.c.h.b16 %v4636
    %v4807 = vunpack.c.l.b16 %v4637
    %v4808 = vunpack.c.l.b16 %v4638
    %v4809 = vunpack.c.h.b16 %v4638
    %v4810 = vunpack.c.l.b16 %v4639
    %v4811 = vunpack.c.l.b16 %v4640
    %v4812 = vunpack.c.h.b16 %v4640
    %v4813 = vunpack.c.l.b16 %v4641
    %v4814 = vunpack.c.l.b16 %v4642
    %v4815 = vunpack.c.h.b16 %v4642
    %v4816 = vunpack.c.l.b16 %v4643
    %v4817 = vunpack.c.l.b16 %v4644
    %v4818 = vunpack.c.h.b16 %v4644
    %v4819 = vunpack.c.l.b16 %v4645
    %v4820 = vunpack.c.l.b16 %v4646
    %v4821 = vunpack.c.h.b16 %v4646
    %v4822 = vunpack.c.l.b16 %v4647
    %v4823 = vunpack.c.l.b16 %v4648
    %v4824 = vunpack.c.h.b16 %v4648
    %v4825 = vunpack.c.l.b16 %v4649
    %v4826 = vunpack.c.l.b16 %v4650
    %v4827 = vunpack.c.h.b16 %v4650
    %v4828 = vunpack.c.l.b16 %v4651
    %v4829 = vpack.c.b16 %v4736, %v4733
    %v4830 = vpack.c.b16 %v4737, %v4734
    %v4831 = vpack.c.b16 %v4738, %v4735
    %v4832 = vpack.c.b16 %v4742, %v4739
    %v4833 = vpack.c.b16 %v4743, %v4740
    %v4834 = vpack.c.b16 %v4744, %v4741
    %v4835 = vpack.c.b16 %v4748, %v4745
    %v4836 = vpack.c.b16 %v4749, %v4746
    %v4837 = vpack.c.b16 %v4750, %v4747
    %v4838 = vpack.c.b16 %v4754, %v4751
    %v4839 = vpack.c.b16 %v4755, %v4752
    %v4840 = vpack.c.b16 %v4756, %v4753
    %v4841 = vpack.c.b16 %v4760, %v4757
    %v4842 = vpack.c.b16 %v4761, %v4758
    %v4843 = vpack.c.b16 %v4762, %v4759
    %v4844 = vpack.c.b16 %v4766, %v4763
    %v4845 = vpack.c.b16 %v4767, %v4764
    %v4846 = vpack.c.b16 %v4768, %v4765
    %v4847 = vpack.c.b16 %v4772, %v4769
    %v4848 = vpack.c.b16 %v4773, %v4770
    %v4849 = vpack.c.b16 %v4774, %v4771
    %v4850 = vpack.c.b16 %v4778, %v4775
    %v4851 = vpack.c.b16 %v4779, %v4776
    %v4852 = vpack.c.b16 %v4780, %v4777
    %v4853 = vpack.c.b16 %v4784, %v4781
    %v4854 = vpack.c.b16 %v4785, %v4782
    %v4855 = vpack.c.b16 %v4786, %v4783
    %v4856 = vpack.c.b16 %v4790, %v4787
    %v4857 = vpack.c.b16 %v4791, %v4788
    %v4858 = vpack.c.b16 %v4792, %v4789
    %v4859 = vpack.c.b16 %v4796, %v4793
    %v4860 = vpack.c.b16 %v4797, %v4794
    %v4861 = vpack.c.b16 %v4798, %v4795
    %v4862 = vpack.c.b16 %v4802, %v4799
    %v4863 = vpack.c.b16 %v4803, %v4800
    %v4864 = vpack.c.b16 %v4804, %v4801
    %v4865 = vpack.c.b16 %v4808, %v4805
    %v4866 = vpack.c.b16 %v4809, %v4806
    %v4867 = vpack.c.b16 %v4810, %v4807
    %v4868 = vpack.c.b16 %v4814, %v4811
    %v4869 = vpack.c.b16 %v4815, %v4812
    %v4870 = vpack.c.b16 %v4816, %v4813
    %v4871 = vpack.c.b16 %v4820, %v4817
    %v4872 = vpack.c.b16 %v4821, %v4818
    %v4873 = vpack.c.b16 %v4822, %v4819
    %v4874 = vpack.c.b16 %v4826, %v4823
    %v4875 = vpack.c.b16 %v4827, %v4824
    %v4876 = vpack.c.b16 %v4828, %v4825
    %4925 = vmatprep.subr.bf16.mxu0 %v4830
    %4926 = vmatpush1.bf16.msra.mxu0 %v4829
    %4927 = vmatprep.subr.bf16.mxu0 %v4833
    %4928 = vmatpush1.bf16.msra.mxu0 %v4832
    %4929 = vmatprep.subr.bf16.mxu0 %v4836
    %4930 = vmatpush1.bf16.msra.mxu0 %v4835
    %4931 = vmatprep.subr.bf16.mxu0 %v4839
    %4932 = vmatpush1.bf16.msra.mxu0 %v4838
    %4933 = vmatprep.subr.bf16.mxu0 %v4842
    %4934 = vmatpush1.bf16.msra.mxu0 %v4841
    %4935 = vmatprep.subr.bf16.mxu0 %v4845
    %4936 = vmatpush1.bf16.msra.mxu0 %v4844
    %4937 = vmatprep.subr.bf16.mxu0 %v4848
    %4938 = vmatpush1.bf16.msra.mxu0 %v4847
    %4939 = vmatprep.subr.bf16.mxu0 %v4851
    %4940 = vmatpush1.bf16.msra.mxu0 %v4850
    %4941 = vmatprep.subr.bf16.mxu0 %v4854
    %4942 = vmatpush1.bf16.msra.mxu0 %v4853
    %4943 = vmatprep.subr.bf16.mxu0 %v4857
    %4944 = vmatpush1.bf16.msra.mxu0 %v4856
    %4945 = vmatprep.subr.bf16.mxu0 %v4860
    %4946 = vmatpush1.bf16.msra.mxu0 %v4859
    %4947 = vmatprep.subr.bf16.mxu0 %v4863
    %4948 = vmatpush1.bf16.msra.mxu0 %v4862
    %4949 = vmatprep.subr.bf16.mxu0 %v4866
    %4950 = vmatpush1.bf16.msra.mxu0 %v4865
    %4951 = vmatprep.subr.bf16.mxu0 %v4869
    %4952 = vmatpush1.bf16.msra.mxu0 %v4868
    %4953 = vmatprep.subr.bf16.mxu0 %v4872
    %4954 = vmatpush1.bf16.msra.mxu0 %v4871
    %4955 = vmatprep.subr.bf16.mxu0 %v4875
    %4956 = vmatpush1.bf16.msra.mxu0 %v4874
    %4957 = vmatprep.mubr.bf16.mxu0 %v4573
    %4958 = vmatmul.mubr.bf16.gmra.mrb[0].mxu0 %v4572
    %v4959 = vpop.f32.mrb[0].mxu0
    %v4960 = vadd.f32 %v4657, %v4959
    %v4961 = vpop.f32.mrb[0].mxu0
    %v4962 = vadd.f32 %v4661, %v4961
    %v4963 = vpop.f32.mrb[0].mxu0
    %v4964 = vadd.f32 %v4657, %v4963
    %v4965 = vpop.f32.mrb[0].mxu0
    %v4966 = vadd.f32 %v4661, %v4965
    %4967 = vmatprep.mubr.bf16.mxu0 %v4575
    %4968 = vmatmul.mubr.bf16.gmra.mrb[0].mxu0 %v4574
    %v4969 = vpop.f32.mrb[0].mxu0
    %v4970 = vadd.f32 %v4657, %v4969
    %v4971 = vpop.f32.mrb[0].mxu0
    %v4972 = vadd.f32 %v4661, %v4971
    %v4973 = vpop.f32.mrb[0].mxu0
    %v4974 = vadd.f32 %v4657, %v4973
    %v4975 = vpop.f32.mrb[0].mxu0
    %v4976 = vadd.f32 %v4661, %v4975
    %4977 = vmatprep.mubr.bf16.mxu0 %v4577
    %4978 = vmatmul.mubr.bf16.gmra.mrb[0].mxu0 %v4576
    %v4979 = vpop.f32.mrb[0].mxu0
    %v4980 = vadd.f32 %v4657, %v4979
    %v4981 = vpop.f32.mrb[0].mxu0
    %v4982 = vadd.f32 %v4661, %v4981
    %v4983 = vpop.f32.mrb[0].mxu0
    %v4984 = vadd.f32 %v4657, %v4983
    %v4985 = vpop.f32.mrb[0].mxu0
    %v4986 = vadd.f32 %v4661, %v4985
    %4987 = vmatprep.mubr.bf16.mxu0 %v4579
    %4988 = vmatmul.mubr.bf16.gmra.mrb[0].mxu0 %v4578
    %v4989 = vpop.f32.mrb[0].mxu0
    %v4990 = vadd.f32 %v4657, %v4989
    %v4991 = vpop.f32.mrb[0].mxu0
    %v4992 = vadd.f32 %v4661, %v4991
    %v4993 = vpop.f32.mrb[0].mxu0
    %v4994 = vadd.f32 %v4657, %v4993
    %v4995 = vpop.f32.mrb[0].mxu0
    %v4996 = vadd.f32 %v4661, %v4995
    %4997 = vmatprep.mubr.bf16.mxu0 %v4581
    %4998 = vmatmul.mubr.bf16.gmra.mrb[0].mxu0 %v4580
    %v4999 = vpop.f32.mrb[0].mxu0
    %v5000 = vadd.f32 %v4657, %v4999
    %v5001 = vpop.f32.mrb[0].mxu0
    %v5002 = vadd.f32 %v4661, %v5001
    %v5003 = vpop.f32.mrb[0].mxu0
    %v5004 = vadd.f32 %v4657, %v5003
    %v5005 = vpop.f32.mrb[0].mxu0
    %v5006 = vadd.f32 %v4661, %v5005
    %5007 = vmatprep.mubr.bf16.mxu0 %v4583
    %5008 = vmatmul.mubr.bf16.gmra.mrb[0].mxu0 %v4582
    %v5009 = vpop.f32.mrb[0].mxu0
    %v5010 = vadd.f32 %v4657, %v5009
    %v5011 = vpop.f32.mrb[0].mxu0
    %v5012 = vadd.f32 %v4661, %v5011
    %v5013 = vpop.f32.mrb[0].mxu0
    %v5014 = vadd.f32 %v4657, %v5013
    %v5015 = vpop.f32.mrb[0].mxu0
    %v5016 = vadd.f32 %v4661, %v5015
    %5017 = vmatprep.mubr.bf16.mxu0 %v4585
    %5018 = vmatmul.mubr.bf16.gmra.mrb[0].mxu0 %v4584
    %v5019 = vpop.f32.mrb[0].mxu0
    %v5020 = vadd.f32 %v4657, %v5019
    %v5021 = vpop.f32.mrb[0].mxu0
    %v5022 = vadd.f32 %v4661, %v5021
    %v5023 = vpop.f32.mrb[0].mxu0
    %v5024 = vadd.f32 %v4657, %v5023
    %v5025 = vpop.f32.mrb[0].mxu0
    %v5026 = vadd.f32 %v4661, %v5025
    %5027 = vmatprep.mubr.bf16.mxu0 %v4587
    %5028 = vmatmul.mubr.bf16.gmra.mrb[0].mxu0 %v4586
    %v5029 = vpop.f32.mrb[0].mxu0
    %v5030 = vadd.f32 %v4657, %v5029
    %v5031 = vpop.f32.mrb[0].mxu0
    %v5032 = vadd.f32 %v4661, %v5031
    %v5033 = vpop.f32.mrb[0].mxu0
    %v5034 = vadd.f32 %v4657, %v5033
    %v5035 = vpop.f32.mrb[0].mxu0
    %v5036 = vadd.f32 %v4661, %v5035
    %5037 = vdwg.mxu0
    %5038 = vmatprep.subr.bf16.mxu0 0
    %5039 = vmatpush1.bf16.msra.mxu0 %v4831
    %5040 = vmatprep.subr.bf16.mxu0 0
    %5041 = vmatpush1.bf16.msra.mxu0 %v4834
    %5042 = vmatprep.subr.bf16.mxu0 0
    %5043 = vmatpush1.bf16.msra.mxu0 %v4837
    %5044 = vmatprep.subr.bf16.mxu0 0
    %5045 = vmatpush1.bf16.msra.mxu0 %v4840
    %5046 = vmatprep.subr.bf16.mxu0 0
    %5047 = vmatpush1.bf16.msra.mxu0 %v4843
    %5048 = vmatprep.subr.bf16.mxu0 0
    %5049 = vmatpush1.bf16.msra.mxu0 %v4846
    %5050 = vmatprep.subr.bf16.mxu0 0
    %5051 = vmatpush1.bf16.msra.mxu0 %v4849
    %5052 = vmatprep.subr.bf16.mxu0 0
    %5053 = vmatpush1.bf16.msra.mxu0 %v4852
    %5054 = vmatprep.subr.bf16.mxu0 0
    %5055 = vmatpush1.bf16.msra.mxu0 %v4855
    %5056 = vmatprep.subr.bf16.mxu0 0
    %5057 = vmatpush1.bf16.msra.mxu0 %v4858
    %5058 = vmatprep.subr.bf16.mxu0 0
    %5059 = vmatpush1.bf16.msra.mxu0 %v4861
    %5060 = vmatprep.subr.bf16.mxu0 0
    %5061 = vmatpush1.bf16.msra.mxu0 %v4864
    %5062 = vmatprep.subr.bf16.mxu0 0
    %5063 = vmatpush1.bf16.msra.mxu0 %v4867
    %5064 = vmatprep.subr.bf16.mxu0 0
    %5065 = vmatpush1.bf16.msra.mxu0 %v4870
    %5066 = vmatprep.subr.bf16.mxu0 0
    %5067 = vmatpush1.bf16.msra.mxu0 %v4873
    %5068 = vmatprep.subr.bf16.mxu0 0
    %5069 = vmatpush1.bf16.msra.mxu0 %v4876
    %5070 = vmatprep.mubr.bf16.mxu0 %v4573
    %5071 = vmatmul.mubr.bf16.gmra.mrb[0].mxu0 %v4572
    %v5072 = vpop.f32.mrb[0].mxu0
    %v5073 = vadd.f32 %v4665, %v5072
    %v5074 = vpop.f32.mrb[0].mxu0
    %v5075 = vpop.f32.mrb[0].mxu0
    %v5076 = vadd.f32 %v4665, %v5075
    %v5077 = vpop.f32.mrb[0].mxu0
    %5078 = vmatprep.mubr.bf16.mxu0 %v4575
    %5079 = vmatmul.mubr.bf16.gmra.mrb[0].mxu0 %v4574
    %v5080 = vpop.f32.mrb[0].mxu0
    %v5081 = vadd.f32 %v4665, %v5080
    %v5082 = vpop.f32.mrb[0].mxu0
    %v5083 = vpop.f32.mrb[0].mxu0
    %v5084 = vadd.f32 %v4665, %v5083
    %v5085 = vpop.f32.mrb[0].mxu0
    %5086 = vmatprep.mubr.bf16.mxu0 %v4577
    %5087 = vmatmul.mubr.bf16.gmra.mrb[0].mxu0 %v4576
    %v5088 = vpop.f32.mrb[0].mxu0
    %v5089 = vadd.f32 %v4665, %v5088
    %v5090 = vpop.f32.mrb[0].mxu0
    %v5091 = vpop.f32.mrb[0].mxu0
    %v5092 = vadd.f32 %v4665, %v5091
    %v5093 = vpop.f32.mrb[0].mxu0
    %5094 = vmatprep.mubr.bf16.mxu0 %v4579
    %5095 = vmatmul.mubr.bf16.gmra.mrb[0].mxu0 %v4578
    %v5096 = vpop.f32.mrb[0].mxu0
    %v5097 = vadd.f32 %v4665, %v5096
    %v5098 = vpop.f32.mrb[0].mxu0
    %v5099 = vpop.f32.mrb[0].mxu0
    %v5100 = vadd.f32 %v4665, %v5099
    %v5101 = vpop.f32.mrb[0].mxu0
    %5102 = vmatprep.mubr.bf16.mxu0 %v4581
    %5103 = vmatmul.mubr.bf16.gmra.mrb[0].mxu0 %v4580
    %v5104 = vpop.f32.mrb[0].mxu0
    %v5105 = vadd.f32 %v4665, %v5104
    %v5106 = vpop.f32.mrb[0].mxu0
    %v5107 = vpop.f32.mrb[0].mxu0
    %v5108 = vadd.f32 %v4665, %v5107
    %v5109 = vpop.f32.mrb[0].mxu0
    %5110 = vmatprep.mubr.bf16.mxu0 %v4583
    %5111 = vmatmul.mubr.bf16.gmra.mrb[0].mxu0 %v4582
    %v5112 = vpop.f32.mrb[0].mxu0
    %v5113 = vadd.f32 %v4665, %v5112
    %v5114 = vpop.f32.mrb[0].mxu0
    %v5115 = vpop.f32.mrb[0].mxu0
    %v5116 = vadd.f32 %v4665, %v5115
    %v5117 = vpop.f32.mrb[0].mxu0
    %5118 = vmatprep.mubr.bf16.mxu0 %v4585
    %5119 = vmatmul.mubr.bf16.gmra.mrb[0].mxu0 %v4584
    %v5120 = vpop.f32.mrb[0].mxu0
    %v5121 = vadd.f32 %v4665, %v5120
    %v5122 = vpop.f32.mrb[0].mxu0
    %v5123 = vpop.f32.mrb[0].mxu0
    %v5124 = vadd.f32 %v4665, %v5123
    %v5125 = vpop.f32.mrb[0].mxu0
    %5126 = vmatprep.mubr.bf16.mxu0 %v4587
    %5127 = vmatmul.mubr.bf16.gmra.mrb[0].mxu0 %v4586
    %v5128 = vpop.f32.mrb[0].mxu0
    %v5129 = vadd.f32 %v4665, %v5128
    %v5130 = vpop.f32.mrb[0].mxu0
    %v5131 = vpop.f32.mrb[0].mxu0
    %v5132 = vadd.f32 %v4665, %v5131
    %v5133 = vpop.f32.mrb[0].mxu0
    %5134 = vdwg.mxu0
    %5135 = vst [vmem:[#allocation17] sm:$0xff] %v4960
    %5136 = vst [vmem:[#allocation17 + $0x8] sm:$0xff] %v4962
    %5137 = vst [vmem:[#allocation17 + $0x10] sm:$0xff] %v5073
    %5138 = vst [vmem:[#allocation17 + $0x18] sm:$0xff] %v4964
    %5139 = vst [vmem:[#allocation17 + $0x20] sm:$0xff] %v4966
    %5140 = vst [vmem:[#allocation17 + $0x28] sm:$0xff] %v5076
    %5141 = vst [vmem:[#allocation17 + $0x30] sm:$0xff] %v4970
    %5142 = vst [vmem:[#allocation17 + $0x38] sm:$0xff] %v4972
    %5143 = vst [vmem:[#allocation17 + $0x40] sm:$0xff] %v5081
    %5144 = vst [vmem:[#allocation17 + $0x48] sm:$0xff] %v4974
    %5145 = vst [vmem:[#allocation17 + $0x50] sm:$0xff] %v4976
    %5146 = vst [vmem:[#allocation17 + $0x58] sm:$0xff] %v5084
    %5147 = vst [vmem:[#allocation17 + $0x60] sm:$0xff] %v4980
    %5148 = vst [vmem:[#allocation17 + $0x68] sm:$0xff] %v4982
    %5149 = vst [vmem:[#allocation17 + $0x70] sm:$0xff] %v5089
    %5150 = vst [vmem:[#allocation17 + $0x78] sm:$0xff] %v4984
    %5151 = vst [vmem:[#allocation17 + $0x80] sm:$0xff] %v4986
    %5152 = vst [vmem:[#allocation17 + $0x88] sm:$0xff] %v5092
    %5153 = vst [vmem:[#allocation17 + $0x90] sm:$0xff] %v4990
    %5154 = vst [vmem:[#allocation17 + $0x98] sm:$0xff] %v4992
    %5155 = vst [vmem:[#allocation17 + $0xa0] sm:$0xff] %v5097
    %5156 = vst [vmem:[#allocation17 + $0xa8] sm:$0xff] %v4994
    %5157 = vst [vmem:[#allocation17 + $0xb0] sm:$0xff] %v4996
    %5158 = vst [vmem:[#allocation17 + $0xb8] sm:$0xff] %v5100
    %5159 = vst [vmem:[#allocation17 + $0xc0] sm:$0xff] %v5000
    %5160 = vst [vmem:[#allocation17 + $0xc8] sm:$0xff] %v5002
    %5161 = vst [vmem:[#allocation17 + $0xd0] sm:$0xff] %v5105
    %5162 = vst [vmem:[#allocation17 + $0xd8] sm:$0xff] %v5004
    %5163 = vst [vmem:[#allocation17 + $0xe0] sm:$0xff] %v5006
    %5164 = vst [vmem:[#allocation17 + $0xe8] sm:$0xff] %v5108
    %5165 = vst [vmem:[#allocation17 + $0xf0] sm:$0xff] %v5010
    %5166 = vst [vmem:[#allocation17 + $0xf8] sm:$0xff] %v5012
    %5167 = vst [vmem:[#allocation17 + $0x100] sm:$0xff] %v5113
    %5168 = vst [vmem:[#allocation17 + $0x108] sm:$0xff] %v5014
    %5169 = vst [vmem:[#allocation17 + $0x110] sm:$0xff] %v5016
    %5170 = vst [vmem:[#allocation17 + $0x118] sm:$0xff] %v5116
    %5171 = vst [vmem:[#allocation17 + $0x120] sm:$0xff] %v5020
    %5172 = vst [vmem:[#allocation17 + $0x128] sm:$0xff] %v5022
    %5173 = vst [vmem:[#allocation17 + $0x130] sm:$0xff] %v5121
    %5174 = vst [vmem:[#allocation17 + $0x138] sm:$0xff] %v5024
    %5175 = vst [vmem:[#allocation17 + $0x140] sm:$0xff] %v5026
    %5176 = vst [vmem:[#allocation17 + $0x148] sm:$0xff] %v5124
    %5177 = vst [vmem:[#allocation17 + $0x150] sm:$0xff] %v5030
    %5178 = vst [vmem:[#allocation17 + $0x158] sm:$0xff] %v5032
    %5179 = vst [vmem:[#allocation17 + $0x160] sm:$0xff] %v5129
    %5180 = vst [vmem:[#allocation17 + $0x168] sm:$0xff] %v5034
    %5181 = vst [vmem:[#allocation17 + $0x170] sm:$0xff] %v5036
    %5182 = vst [vmem:[#allocation17 + $0x178] sm:$0xff] %v5132
    // Predicated region
    $region82: #{tpu_custom_call.1} parent=1 // pred_check
      _
    $region83: #{tpu_custom_call.1} parent=1 // pred_check_branch
      %5184 = sbr.rel (0) target = $region85
    $region84: #{tpu_custom_call.1} parent=1 // pred_region
      %s5186 = ssub.s32 6144, 6144
      %5187 = vsyncadd [#allocation4], %s5186
      %s5188 = sshll.u32 [#allocation17], 4
      %s5189 = int_to_ptr.vmem [resolvable:$true] %s5188
      %5194 = dma.vmem_to_hbm [thread:$0]  %s5189, 6144, %s12, [#allocation4], 384, 384, 24
    $region85: #{tpu_custom_call.1} parent=1 // pred_fallthru
      _
    // Predicated region
    $region86: #{tpu_custom_call.1} parent=1 // pred_check
      _
    $region87: #{tpu_custom_call.1} parent=1 // pred_check_branch
      %5196 = sbr.rel (0) target = $region89
    $region88: #{tpu_custom_call.1} parent=1 // pred_region
      %s5198 = ssub.s32 6144, 6144
      %5199 = vsyncadd [#allocation19], %s5198
      %s5200 = sshll.u32 [#allocation18], 4
      %s5201 = int_to_ptr.vmem [resolvable:$true] %s5200
      %5206 = dma.vmem_to_hbm [thread:$0]  %s5201, 6144, %s13, [#allocation19], 384, 384, 24
    $region89: #{tpu_custom_call.1} parent=1 // pred_fallthru
      _
    // Predicated region
    $region90: #{tpu_custom_call.1} parent=1 // pred_check
      _
    $region91: #{tpu_custom_call.1} parent=1 // pred_check_branch
      %5208 = sbr.rel (0) target = $region93
    $region92: #{tpu_custom_call.1} parent=1 // pred_region
      %s5210 = ssub.s32 32, 32
      %5211 = vsyncadd [#allocation19], %s5210
      %s5213 = sshll.u32 [#allocation20], 4
      %s5214 = int_to_ptr.vmem [resolvable:$true] %s5213
      %5216 = dma.vmem_to_hbm [thread:$0]  %s5214, 32, %s14, [#allocation19]
    $region93: #{tpu_custom_call.1} parent=1 // pred_fallthru
      _
    // Predicated region
    $region94: #{tpu_custom_call.1} parent=1 // pred_check
      _
    $region95: #{tpu_custom_call.1} parent=1 // pred_check_branch
      %5218 = sbr.rel (0) target = $region97
    $region96: #{tpu_custom_call.1} parent=1 // pred_region
      %s5220 = ssub.s32 16, 16
      %5221 = vsyncadd [#allocation5], %s5220
      %5224 = dma.smem_to_hbm [#allocation21], 16, %s15, [#allocation5]
    $region97: #{tpu_custom_call.1} parent=1 // pred_fallthru
      _
    // Predicated region
    $region98: #{tpu_custom_call.1} parent=1 // pred_check
      _
    $region99: #{tpu_custom_call.1} parent=1 // pred_check_branch
      %5226 = sbr.rel (0) target = $region101
    $region100: #{tpu_custom_call.1} parent=1 // pred_region
      %5227 = dma.done [#allocation4], 6144
    $region101: #{tpu_custom_call.1} parent=1 // pred_fallthru
      _
    // Predicated region
    $region102: #{tpu_custom_call.1} parent=1 // pred_check
      _
    $region103: #{tpu_custom_call.1} parent=1 // pred_check_branch
      %5229 = sbr.rel (0) target = $region105
    $region104: #{tpu_custom_call.1} parent=1 // pred_region
      %5230 = dma.done [#allocation19], 6144
    $region105: #{tpu_custom_call.1} parent=1 // pred_fallthru
      _
    // Predicated region
    $region106: #{tpu_custom_call.1} parent=1 // pred_check
      _
    $region107: #{tpu_custom_call.1} parent=1 // pred_check_branch
      %5232 = sbr.rel (0) target = $region109
    $region108: #{tpu_custom_call.1} parent=1 // pred_region
      %5233 = dma.done [#allocation19], 32
    $region109: #{tpu_custom_call.1} parent=1 // pred_fallthru
      _
    // Predicated region
    $region110: #{tpu_custom_call.1} parent=1 // pred_check
      _
    $region111: #{tpu_custom_call.1} parent=1 // pred_check_branch
      %5235 = sbr.rel (0) target = $region113
    $region112: #{tpu_custom_call.1} parent=1 // pred_region
      %5236 = dma.done [#allocation5], 16
    $region113: #{tpu_custom_call.1} parent=1 // pred_fallthru
      _
    %5237 = sfence
    %5238 = vsyncpa [#allocation3], 1
    %5239 = vsyncpa [#allocation7], 1
    %5240 = vsyncpa [#allocation10], 1
    %5241 = vsyncpa [#allocation13], 1
    %5242 = vsyncpa [#allocation16], 1
    %5243 = vsyncpa [#allocation4], 1
    %5244 = vsyncpa [#allocation19], 1
    %5245 = vsyncpa [#allocation5], 1

</llo_original>
